<compile_context>
chip_gen: v7x
topology: tpu7x:2x2x1
jax: 0.10.0
libtpu: 0.0.40
codegen_flags: <defaults>
</compile_context>

<pallas_src>
import functools

import jax
import jax.numpy as jnp
from jax import lax
from jax.experimental import pallas as pl
from jax.experimental.pallas import tpu as pltpu

EPS = 1e-5
LANE = 128   # channel dims padded to a multiple of this (lane width)
LEAD = 8     # leading zero rows: conv2 left pad + aligned residual reads
HALO = 16    # extra rows per tile: +-1-row conv2 halo, rounded to 16


def _round_up(x, m):
    return (x + m - 1) // m * m


def _pad2d(a, rows, cols):
    r, c = a.shape
    return jnp.pad(a, ((0, rows - r), (0, cols - c)))


# ---------------------------------------------------------------------------
# Pallas kernel: one (batch element, L-tile) per grid step.
# ---------------------------------------------------------------------------
def bottleneck_kernel(x_ref, w1_ref, w2_ref, w3_ref, b1_ref, b2_ref, b3_ref,
                      o_ref, *, tl, seq_len, use_roll):
    i = pl.program_id(1)
    row0 = pl.multiple_of(i * tl, 16)
    sz = tl + HALO

    # Tile rows plus an 8-row halo on each side.  x_ref holds the whole
    # zero-padded sequence of this batch element (rows [LEAD, LEAD+seq_len)
    # are data, everything else is zeros) so this read is always in bounds.
    x_ext = x_ref[pl.ds(row0, sz), :]                          # (tl+16, Cin_p)

    # conv1 (1x1): BN scale folded into w1; bias + ReLU in f32.
    h1 = jnp.dot(x_ext, w1_ref[...], preferred_element_type=jnp.float32)
    h1 = jnp.maximum(h1 + b1_ref[...], 0.0)                    # (tl+16, P_p)

    # Rows outside the real sequence act as conv2's zero padding (otherwise
    # relu(b1) would leak into the boundary taps / alignment tail).
    g = row0 + lax.broadcasted_iota(jnp.int32, (sz, 1), 0)
    valid = jnp.logical_and(g >= LEAD, g < seq_len + LEAD)
    h1 = jnp.where(valid, h1, 0.0)

    # conv2 (k=3, s=1, pad=1) as ONE fused MXU matmul (tl, 3*P_p) x (3*P_p, P_p).
    # The +-1-row shifted taps are built with pltpu.roll (XLU, co-issues with
    # the MXU) + 8-aligned static slices; the roll wrap-around rows land
    # outside the [LEAD, LEAD+tl) window so they never reach the matmul.
    if use_roll:
        left = pltpu.roll(h1, 1, 0)            # left[r]  = h1[r-1]
        right = pltpu.roll(h1, sz - 1, 0)      # right[r] = h1[r+1]
        taps = (left[LEAD:LEAD + tl],
                h1[LEAD:LEAD + tl],
                right[LEAD:LEAD + tl])
    else:                                      # fallback: odd-offset slices
        taps = (h1[LEAD - 1:LEAD - 1 + tl],
                h1[LEAD:LEAD + tl],
                h1[LEAD + 1:LEAD + 1 + tl])
    h1_cat = jnp.concatenate(taps, axis=-1).astype(x_ext.dtype)  # (tl, 3*P_p)
    h2 = jnp.dot(h1_cat, w2_ref[...], preferred_element_type=jnp.float32)
    h2 = jnp.maximum(h2 + b2_ref[...], 0.0).astype(x_ext.dtype)

    # conv3 (1x1) + folded BN bias, identity residual, final ReLU.
    # TODO(synk): the residual is read from the compute-dtype (bf16) copy of x;
    # pass compute_dtype=float32 if exact f32 skip-connection parity is needed.
    h3 = jnp.dot(h2, w3_ref[...], preferred_element_type=jnp.float32)
    h3 = h3 + b3_ref[...]
    res_start = pl.multiple_of(row0 + LEAD, 8)
    identity = x_ref[pl.ds(res_start, tl), :].astype(jnp.float32)
    o_ref[...] = jnp.maximum(h3 + identity, 0.0).astype(o_ref.dtype)


# ---------------------------------------------------------------------------
# Wrapper: folds BN, pads channels/rows, builds specs, calls pallas_call.
# ---------------------------------------------------------------------------
def fold_bn(bn):
    gamma, beta, rmean, rvar = bn
    scale = gamma / jnp.sqrt(rvar + EPS)
    bias = beta - rmean * scale
    return scale, bias


def _vmem_capacity_bytes():
    try:
        cap = getattr(pltpu.get_tpu_info(), "vmem_capacity_bytes", None)
        if cap:
            return int(cap)
    except Exception:
        pass
    return 64 * 1024 * 1024      # conservative (v7x-sized) fallback


@functools.partial(
    jax.jit,
    static_argnames=("compute_dtype", "l_tile", "single_buffer", "use_roll"))
def _bottleneck_impl(x_ncl, w1, w2, w3, bn1, bn2, bn3, *,
                     compute_dtype, l_tile, single_buffer, use_roll):
    N, Cin, L = x_ncl.shape
    P = w1.shape[0]
    Cout = w3.shape[0]
    assert Cin == Cout, "identity residual requires inplanes == planes*expansion"
    # TODO(synk): stride>1 / downsample path not implemented (module default is
    # stride=1, downsample=None -> identity residual used here).

    cin_p = _round_up(Cin, LANE)
    p_p = _round_up(P, LANE)
    cout_p = _round_up(Cout, LANE)

    cap = _vmem_capacity_bytes()
    if l_tile is None:                       # per-generation default tile
        l_tile = 512 if cap >= 96 * 1024 * 1024 else 256
    tl = min(l_tile, _round_up(L, 16))
    assert tl % 16 == 0
    l_t = _round_up(L, tl)
    num_lt = l_t // tl

    s1, b1 = fold_bn(bn1)
    s2, b2 = fold_bn(bn2)
    s3, b3 = fold_bn(bn3)

    # Fold BN scales into weight columns; pad channel dims to LANE multiples
    # so every matmul dim and every output store is lane-dense.
    w1p = _pad2d(w1[:, :, 0].T * s1[None, :], cin_p, p_p).astype(compute_dtype)
    w2p = jnp.concatenate(
        [_pad2d(w2[:, :, k].T * s2[None, :], p_p, p_p) for k in range(3)],
        axis=0).astype(compute_dtype)                           # (3*P_p, P_p)
    w3p = _pad2d(w3[:, :, 0].T * s3[None, :], p_p, cout_p).astype(compute_dtype)
    b1p = _pad2d(b1[None, :], 1, p_p)
    b2p = _pad2d(b2[None, :], 1, p_p)
    b3p = _pad2d(b3[None, :], 1, cout_p)

    # Channel-last, zero-padded copy of x: rows [LEAD, LEAD+L) hold the data,
    # first LEAD rows = conv2 left pad, tail = right pad + tile/halo alignment.
    # Built directly in the compute dtype (single fused pass under jit).
    x_nlc = jnp.transpose(x_ncl, (0, 2, 1)).astype(compute_dtype)
    x_pad = jnp.zeros((N, l_t + HALO, cin_p), compute_dtype)
    x_pad = x_pad.at[:, LEAD:LEAD + L, :Cin].set(x_nlc)

    # Per-generation VMEM budget: resident blocks + per-step working set,
    # capped near 3/4 of physical VMEM (~48 MiB v7x, ~96 MiB v5e/v6e).
    itemsize = jnp.dtype(compute_dtype).itemsize
    bufs = 1 if single_buffer else 2
    resident = ((l_t + HALO) * cin_p + cin_p * p_p + 3 * p_p * p_p
                + p_p * cout_p) * itemsize * bufs + (2 * p_p + cout_p) * 4 * bufs
    per_step = 2 * tl * cout_p * itemsize + 8 * (tl + HALO) * max(p_p, cout_p) * 4
    vmem_limit = max(cap * 3 // 4, resident + per_step + (8 << 20))
    vmem_limit = int(min(vmem_limit, cap - (4 << 20)))

    # Resident blocks: block index is constant across the inner L axis, so a
    # single buffer suffices (halves their VMEM cost); the one exposed DMA per
    # batch element amortizes over num_lt grid steps.
    res_kw = {"pipeline_mode": pl.Buffered(1)} if single_buffer else {}
    const = lambda shape: pl.BlockSpec(shape, lambda n, i: (0,) * len(shape),
                                       **res_kw)

    out = pl.pallas_call(
        functools.partial(bottleneck_kernel, tl=tl, seq_len=L, use_roll=use_roll),
        out_shape=jax.ShapeDtypeStruct((N, l_t, cout_p), compute_dtype),
        grid=(N, num_lt),
        in_specs=[
            # Whole padded sequence of the current batch element.
            pl.BlockSpec((None, l_t + HALO, cin_p), lambda n, i: (n, 0, 0),
                         **res_kw),
            const((cin_p, p_p)),            # w1 (BN scale folded)
            const((3 * p_p, p_p)),          # w2, 3 taps fused
            const((p_p, cout_p)),           # w3
            const((1, p_p)),                # b1
            const((1, p_p)),                # b2
            const((1, cout_p)),             # b3
        ],
        out_specs=pl.BlockSpec((None, tl, cout_p), lambda n, i: (n, i, 0)),
        compiler_params=pltpu.CompilerParams(
            # Shard megacore on the batch axis only: with the resident-x
            # scheme, splitting L would duplicate the whole-sequence block
            # (and its HBM reads) in both cores' VMEM.
            dimension_semantics=("parallel", "arbitrary"),
            vmem_limit_bytes=vmem_limit),
    )(x_pad, w1p, w2p, w3p, b1p, b2p, b3p)

    # Strip L / channel padding, back to PyTorch NCL layout.
    return jnp.transpose(out[:, :L, :Cout], (0, 2, 1)).astype(x_ncl.dtype)


# Preferred configurations, probed once:  (single_buffer_resident, use_roll).
_CONFIG = None
_CANDIDATES = ((True, True), (False, True), (True, False), (False, False))


def bottleneck_forward(x_ncl, w1, w2, w3, bn1, bn2, bn3, *,
                       compute_dtype=jnp.bfloat16, l_tile=None):
    """x_ncl: (N, C, L) as in PyTorch. Returns (N, C, L)."""
    global _CONFIG
    args = (x_ncl, w1, w2, w3, bn1, bn2, bn3)
    kw = dict(compute_dtype=compute_dtype, l_tile=l_tile)
    if _CONFIG is not None:
        return _bottleneck_impl(*args, single_buffer=_CONFIG[0],
                                use_roll=_CONFIG[1], **kw)
    last_err = None
    for sb, roll in _CANDIDATES:
        try:
            out = _bottleneck_impl(*args, single_buffer=sb, use_roll=roll, **kw)
            jax.block_until_ready(out)        # surface compile errors here
            _CONFIG = (sb, roll)
            return out
        except Exception as err:              # feature unsupported on this build
            last_err = err
    raise last_err


# ---------------------------------------------------------------------------
# Deterministic parameter construction (mirrors Bottleneck.__init__ shapes).
# ---------------------------------------------------------------------------
def make_params(key, inplanes, planes, expansion=4):
    ks = jax.random.split(key, 16)
    cout3 = planes * expansion

    def bn(kg, kb, km, kv, c):
        gamma = jax.random.normal(kg, (c,), jnp.float32) * 0.1 + 1.0
        beta = jax.random.normal(kb, (c,), jnp.float32) * 0.1
        rmean = jax.random.normal(km, (c,), jnp.float32) * 0.1
        rvar = jnp.abs(jax.random.normal(kv, (c,), jnp.float32)) * 0.1 + 0.9
        return gamma, beta, rmean, rvar

    w1 = jax.random.normal(ks[0], (planes, inplanes, 1), jnp.float32) * 0.1
    w2 = jax.random.normal(ks[1], (planes, planes, 3), jnp.float32) * 0.1
    w3 = jax.random.normal(ks[2], (cout3, planes, 1), jnp.float32) * 0.1
    bn1 = bn(ks[3], ks[4], ks[5], ks[6], planes)
    bn2 = bn(ks[7], ks[8], ks[9], ks[10], planes)
    bn3 = bn(ks[11], ks[12], ks[13], ks[14], cout3)
    return w1, w2, w3, bn1, bn2, bn3


# ---------------------------------------------------------------------------
# Pure-JAX reference (NCL layout, same math as the PyTorch module, f32).
# ---------------------------------------------------------------------------
def ref_forward(x_ncl, w1, w2, w3, bn1, bn2, bn3):
    def conv1d(x, w, pad):
        dn = lax.conv_dimension_numbers(x.shape, w.shape, ("NCH", "OIH", "NCH"))
        return lax.conv_general_dilated(x, w, window_strides=(1,),
                                        padding=[(pad, pad)],
                                        dimension_numbers=dn)

    def bn_apply(x, bn):
        gamma, beta, rmean, rvar = bn
        s = gamma / jnp.sqrt(rvar + EPS)
        b = beta - rmean * s
        return x * s[None, :, None] + b[None, :, None]

    out = jnp.maximum(bn_apply(conv1d(x_ncl, w1, 0), bn1), 0.0)
    out = jnp.maximum(bn_apply(conv1d(out, w2, 1), bn2), 0.0)
    out = bn_apply(conv1d(out, w3, 0), bn3)
    return jnp.maximum(out + x_ncl, 0.0)


if __name__ == "__main__":
    key = jax.random.PRNGKey(0)
    k_x1, k_x2, k_p = jax.random.split(key, 3)

    # downsample=None, stride=1 -> identity residual -> inplanes = planes*exp.
    N, planes, expansion = 2, 4, 4
    inplanes = planes * expansion        # 16
    w1, w2, w3, bn1, bn2, bn3 = make_params(k_p, inplanes, planes, expansion)

    # --- test 1: single L-tile, f32 compute (tight structural check) --------
    L1 = 16
    x1 = jax.random.normal(k_x1, (N, inplanes, L1), jnp.float32)
    out1 = jax.block_until_ready(
        bottleneck_forward(x1, w1, w2, w3, bn1, bn2, bn3,
                           compute_dtype=jnp.float32))
    ref1 = jax.block_until_ready(ref_forward(x1, w1, w2, w3, bn1, bn2, bn3))
    assert out1.shape == ref1.shape == (N, inplanes, L1)
    assert jnp.allclose(out1, ref1, atol=1e-4, rtol=1e-4), \
        float(jnp.max(jnp.abs(out1 - ref1)))

    # --- test 2: L > tile -> multi-tile with cross-tile halo + tail padding -
    L2 = 40
    x2 = jax.random.normal(k_x2, (N, inplanes, L2), jnp.float32)
    out2 = jax.block_until_ready(
        bottleneck_forward(x2, w1, w2, w3, bn1, bn2, bn3,
                           compute_dtype=jnp.float32, l_tile=16))
    ref2 = jax.block_until_ready(ref_forward(x2, w1, w2, w3, bn1, bn2, bn3))
    assert out2.shape == ref2.shape == (N, inplanes, L2)
    assert jnp.allclose(out2, ref2, atol=1e-4, rtol=1e-4), \
        float(jnp.max(jnp.abs(out2 - ref2)))

    # --- test 3: default bf16 matmul operands + bf16 output (loose check) ---
    out3 = jax.block_until_ready(
        bottleneck_forward(x2, w1, w2, w3, bn1, bn2, bn3, l_tile=16))
    assert out3.shape == ref2.shape
    assert jnp.allclose(out3, ref2, atol=1e-1, rtol=1e-1), \
        float(jnp.max(jnp.abs(out3 - ref2)))

    print("KERNEL_OK")
</pallas_src>

<mosaic_0001>
module attributes {stable_mosaic.version = 11 : i64} {
  func.func @bottleneck_kernel(%arg0: i32, %arg1: i32, %arg2: memref<1x32x128xf32, #tpu.memory_space<vmem>>, %arg3: memref<128x128xf32, #tpu.memory_space<vmem>>, %arg4: memref<384x128xf32, #tpu.memory_space<vmem>>, %arg5: memref<128x128xf32, #tpu.memory_space<vmem>>, %arg6: memref<1x128xf32, #tpu.memory_space<vmem>>, %arg7: memref<1x128xf32, #tpu.memory_space<vmem>>, %arg8: memref<1x128xf32, #tpu.memory_space<vmem>>, %arg9: memref<1x16x128xf32, #tpu.memory_space<vmem>>) attributes {dimension_semantics = [#tpu.dimension_semantics<parallel>, #tpu.dimension_semantics<arbitrary>], iteration_bounds = array<i64: 2, 1>, scalar_prefetch = 0 : i64, scratch_operands = 0 : i64, tpu.core_type = #tpu.core_type<tc>, window_params = [{pipeline_mode = #tpu.pipeline_mode<synchronous>, transform_indices = @transform_0, window_bounds = array<i64: 1, 32, 128>}, {pipeline_mode = #tpu.pipeline_mode<synchronous>, transform_indices = @transform_1, window_bounds = array<i64: 128, 128>}, {pipeline_mode = #tpu.pipeline_mode<synchronous>, transform_indices = @transform_2, window_bounds = array<i64: 384, 128>}, {pipeline_mode = #tpu.pipeline_mode<synchronous>, transform_indices = @transform_3, window_bounds = array<i64: 128, 128>}, {pipeline_mode = #tpu.pipeline_mode<synchronous>, transform_indices = @transform_4, window_bounds = array<i64: 1, 128>}, {pipeline_mode = #tpu.pipeline_mode<synchronous>, transform_indices = @transform_5, window_bounds = array<i64: 1, 128>}, {pipeline_mode = #tpu.pipeline_mode<synchronous>, transform_indices = @transform_6, window_bounds = array<i64: 1, 128>}, {transform_indices = @transform_7, window_bounds = array<i64: 1, 16, 128>}]} {
    %c16_i32 = arith.constant 16 : i32
    %0 = arith.muli %arg1, %c16_i32 : i32
    %1 = tpu.assume_multiple %0, 16 : i32
    %c0 = arith.constant 0 : index
    %2 = arith.index_cast %1 : i32 to index
    %c0_0 = arith.constant 0 : index
    %3 = vector.load %arg2[%c0, %2, %c0_0] : memref<1x32x128xf32, #tpu.memory_space<vmem>>, vector<1x32x128xf32>
    %4 = vector.shape_cast %3 : vector<1x32x128xf32> to vector<32x128xf32>
    %c0_1 = arith.constant 0 : index
    %c0_2 = arith.constant 0 : index
    %5 = vector.load %arg3[%c0_1, %c0_2] : memref<128x128xf32, #tpu.memory_space<vmem>>, vector<128x128xf32>
    %cst = arith.constant dense<0.000000e+00> : vector<32x128xf32>
    %6 = tpu.matmul %4, %5, %cst {dimension_numbers = #tpu.dot_dimension_numbers<[1], [0], [0], [1], [0, 0, 1, 1], [], []>} : vector<32x128xf32>, vector<128x128xf32>, vector<32x128xf32> -> vector<32x128xf32>
    %c0_3 = arith.constant 0 : index
    %c0_4 = arith.constant 0 : index
    %7 = vector.load %arg6[%c0_3, %c0_4] : memref<1x128xf32, #tpu.memory_space<vmem>>, vector<1x128xf32>
    %8 = vector.broadcast %7 : vector<1x128xf32> to vector<32x128xf32>
    %9 = arith.addf %6, %8 : vector<32x128xf32>
    %cst_5 = arith.constant 0.000000e+00 : f32
    %10 = vector.broadcast %cst_5 : f32 to vector<32x128xf32>
    %11 = arith.maximumf %9, %10 : vector<32x128xf32>
    %12 = tpu.iota {dimensions = array<i32: 0>} : vector<32x1xi32>
    %13 = vector.broadcast %1 : i32 to vector<32x1xi32>
    %14 = arith.addi %13, %12 : vector<32x1xi32>
    %c8_i32 = arith.constant 8 : i32
    %15 = vector.broadcast %c8_i32 : i32 to vector<32x1xi32>
    %16 = arith.cmpi sge, %14, %15 : vector<32x1xi32>
    %c24_i32 = arith.constant 24 : i32
    %17 = vector.broadcast %c24_i32 : i32 to vector<32x1xi32>
    %18 = arith.cmpi slt, %14, %17 : vector<32x1xi32>
    %19 = arith.andi %16, %18 : vector<32x1xi1>
    %cst_6 = arith.constant 0.000000e+00 : f32
    %20 = vector.shape_cast %19 : vector<32x1xi1> to vector<32x1xi1>
    %21 = vector.broadcast %20 : vector<32x1xi1> to vector<32x128xi1>
    %22 = vector.broadcast %cst_6 : f32 to vector<32x128xf32>
    %23 = arith.select %21, %11, %22 : vector<32x128xi1>, vector<32x128xf32>
    %c1_i32 = arith.constant 1 : i32
    %24 = tpu.dynamic_rotate %23 by %c1_i32 dim 0 : vector<32x128xf32>, i32 -> vector<32x128xf32>
    %c31_i32 = arith.constant 31 : i32
    %25 = tpu.dynamic_rotate %23 by %c31_i32 dim 0 : vector<32x128xf32>, i32 -> vector<32x128xf32>
    %26 = vector.extract_strided_slice %24 {offsets = [8, 0], sizes = [16, 128], strides = [1, 1]} : vector<32x128xf32> to vector<16x128xf32>
    %27 = vector.extract_strided_slice %23 {offsets = [8, 0], sizes = [16, 128], strides = [1, 1]} : vector<32x128xf32> to vector<16x128xf32>
    %28 = vector.extract_strided_slice %25 {offsets = [8, 0], sizes = [16, 128], strides = [1, 1]} : vector<32x128xf32> to vector<16x128xf32>
    %29 = tpu.concatenate %26, %27, %28 in 1 : vector<16x128xf32>, vector<16x128xf32>, vector<16x128xf32> -> vector<16x384xf32>
    %c0_7 = arith.constant 0 : index
    %c0_8 = arith.constant 0 : index
    %30 = vector.load %arg4[%c0_7, %c0_8] : memref<384x128xf32, #tpu.memory_space<vmem>>, vector<384x128xf32>
    %cst_9 = arith.constant dense<0.000000e+00> : vector<16x128xf32>
    %31 = tpu.matmul %29, %30, %cst_9 {dimension_numbers = #tpu.dot_dimension_numbers<[1], [0], [0], [1], [0, 0, 1, 1], [], []>} : vector<16x384xf32>, vector<384x128xf32>, vector<16x128xf32> -> vector<16x128xf32>
    %c0_10 = arith.constant 0 : index
    %c0_11 = arith.constant 0 : index
    %32 = vector.load %arg7[%c0_10, %c0_11] : memref<1x128xf32, #tpu.memory_space<vmem>>, vector<1x128xf32>
    %33 = vector.broadcast %32 : vector<1x128xf32> to vector<16x128xf32>
    %34 = arith.addf %31, %33 : vector<16x128xf32>
    %cst_12 = arith.constant 0.000000e+00 : f32
    %35 = vector.broadcast %cst_12 : f32 to vector<16x128xf32>
    %36 = arith.maximumf %34, %35 : vector<16x128xf32>
    %c0_13 = arith.constant 0 : index
    %c0_14 = arith.constant 0 : index
    %37 = vector.load %arg5[%c0_13, %c0_14] : memref<128x128xf32, #tpu.memory_space<vmem>>, vector<128x128xf32>
    %cst_15 = arith.constant dense<0.000000e+00> : vector<16x128xf32>
    %38 = tpu.matmul %36, %37, %cst_15 {dimension_numbers = #tpu.dot_dimension_numbers<[1], [0], [0], [1], [0, 0, 1, 1], [], []>} : vector<16x128xf32>, vector<128x128xf32>, vector<16x128xf32> -> vector<16x128xf32>
    %c0_16 = arith.constant 0 : index
    %c0_17 = arith.constant 0 : index
    %39 = vector.load %arg8[%c0_16, %c0_17] : memref<1x128xf32, #tpu.memory_space<vmem>>, vector<1x128xf32>
    %40 = vector.broadcast %39 : vector<1x128xf32> to vector<16x128xf32>
    %41 = arith.addf %38, %40 : vector<16x128xf32>
    %c8_i32_18 = arith.constant 8 : i32
    %42 = arith.addi %1, %c8_i32_18 : i32
    %43 = tpu.assume_multiple %42, 8 : i32
    %c0_19 = arith.constant 0 : index
    %44 = arith.index_cast %43 : i32 to index
    %c0_20 = arith.constant 0 : index
    %45 = vector.load %arg2[%c0_19, %44, %c0_20] : memref<1x32x128xf32, #tpu.memory_space<vmem>>, vector<1x16x128xf32>
    %46 = vector.shape_cast %45 : vector<1x16x128xf32> to vector<16x128xf32>
    %47 = arith.addf %41, %46 : vector<16x128xf32>
    %cst_21 = arith.constant 0.000000e+00 : f32
    %48 = vector.broadcast %cst_21 : f32 to vector<16x128xf32>
    %49 = arith.maximumf %47, %48 : vector<16x128xf32>
    %c0_22 = arith.constant 0 : index
    %c0_23 = arith.constant 0 : index
    %c0_24 = arith.constant 0 : index
    %50 = vector.load %arg9[%c0_22, %c0_23, %c0_24] : memref<1x16x128xf32, #tpu.memory_space<vmem>>, vector<1x16x128xf32>
    %51 = vector.shape_cast %50 : vector<1x16x128xf32> to vector<16x128xf32>
    %52 = vector.shape_cast %49 : vector<16x128xf32> to vector<1x16x128xf32>
    tpu.vector_store %arg9[%c0_22, %c0_23, %c0_24], %52 {strides = array<i32>} : memref<1x16x128xf32, #tpu.memory_space<vmem>>, vector<1x16x128xf32>,
    return
  }
  func.func @transform_0(%arg0: i32, %arg1: i32) -> (i32, i32, i32) {
    %c0_i32 = arith.constant 0 : i32
    %c0_i32_0 = arith.constant 0 : i32
    %c0_i32_1 = arith.constant 0 : i32
    return %arg0, %c0_i32, %c0_i32_0 : i32, i32, i32
  }
  func.func @transform_1(%arg0: i32, %arg1: i32) -> (i32, i32) {
    %c0_i32 = arith.constant 0 : i32
    %c0_i32_0 = arith.constant 0 : i32
    %c0_i32_1 = arith.constant 0 : i32
    return %c0_i32, %c0_i32_0 : i32, i32
  }
  func.func @transform_2(%arg0: i32, %arg1: i32) -> (i32, i32) {
    %c0_i32 = arith.constant 0 : i32
    %c0_i32_0 = arith.constant 0 : i32
    %c0_i32_1 = arith.constant 0 : i32
    return %c0_i32, %c0_i32_0 : i32, i32
  }
  func.func @transform_3(%arg0: i32, %arg1: i32) -> (i32, i32) {
    %c0_i32 = arith.constant 0 : i32
    %c0_i32_0 = arith.constant 0 : i32
    %c0_i32_1 = arith.constant 0 : i32
    return %c0_i32, %c0_i32_0 : i32, i32
  }
  func.func @transform_4(%arg0: i32, %arg1: i32) -> (i32, i32) {
    %c0_i32 = arith.constant 0 : i32
    %c0_i32_0 = arith.constant 0 : i32
    %c0_i32_1 = arith.constant 0 : i32
    return %c0_i32, %c0_i32_0 : i32, i32
  }
  func.func @transform_5(%arg0: i32, %arg1: i32) -> (i32, i32) {
    %c0_i32 = arith.constant 0 : i32
    %c0_i32_0 = arith.constant 0 : i32
    %c0_i32_1 = arith.constant 0 : i32
    return %c0_i32, %c0_i32_0 : i32, i32
  }
  func.func @transform_6(%arg0: i32, %arg1: i32) -> (i32, i32) {
    %c0_i32 = arith.constant 0 : i32
    %c0_i32_0 = arith.constant 0 : i32
    %c0_i32_1 = arith.constant 0 : i32
    return %c0_i32, %c0_i32_0 : i32, i32
  }
  func.func @transform_7(%arg0: i32, %arg1: i32) -> (i32, i32, i32) {
    %c0_i32 = arith.constant 0 : i32
    %c0_i32_0 = arith.constant 0 : i32
    return %arg0, %arg1, %c0_i32 : i32, i32, i32
  }
}

module attributes {stable_mosaic.version = 11 : i64} {
  func.func @bottleneck_kernel(%arg0: i32, %arg1: i32, %arg2: memref<1x32x128xf32, #tpu.memory_space<vmem>>, %arg3: memref<128x128xf32, #tpu.memory_space<vmem>>, %arg4: memref<384x128xf32, #tpu.memory_space<vmem>>, %arg5: memref<128x128xf32, #tpu.memory_space<vmem>>, %arg6: memref<1x128xf32, #tpu.memory_space<vmem>>, %arg7: memref<1x128xf32, #tpu.memory_space<vmem>>, %arg8: memref<1x128xf32, #tpu.memory_space<vmem>>, %arg9: memref<1x16x128xf32, #tpu.memory_space<vmem>>) attributes {dimension_semantics = [#tpu.dimension_semantics<parallel>, #tpu.dimension_semantics<arbitrary>], iteration_bounds = array<i64: 2, 1>, scalar_prefetch = 0 : i64, scratch_operands = 0 : i64, tpu.core_type = #tpu.core_type<tc>, window_params = [{transform_indices = @transform_0, window_bounds = array<i64: 1, 32, 128>}, {pipeline_mode = #tpu.pipeline_mode<synchronous>, transform_indices = @transform_1, window_bounds = array<i64: 128, 128>}, {pipeline_mode = #tpu.pipeline_mode<synchronous>, transform_indices = @transform_2, window_bounds = array<i64: 384, 128>}, {pipeline_mode = #tpu.pipeline_mode<synchronous>, transform_indices = @transform_3, window_bounds = array<i64: 128, 128>}, {pipeline_mode = #tpu.pipeline_mode<synchronous>, transform_indices = @transform_4, window_bounds = array<i64: 1, 128>}, {pipeline_mode = #tpu.pipeline_mode<synchronous>, transform_indices = @transform_5, window_bounds = array<i64: 1, 128>}, {pipeline_mode = #tpu.pipeline_mode<synchronous>, transform_indices = @transform_6, window_bounds = array<i64: 1, 128>}, {transform_indices = @transform_7, window_bounds = array<i64: 1, 16, 128>}]} {
    %c16_i32 = arith.constant 16 : i32
    %0 = arith.muli %arg1, %c16_i32 : i32
    %1 = tpu.assume_multiple %0, 16 : i32
    %c0 = arith.constant 0 : index
    %2 = arith.index_cast %1 : i32 to index
    %c0_0 = arith.constant 0 : index
    %3 = vector.load %arg2[%c0, %2, %c0_0] : memref<1x32x128xf32, #tpu.memory_space<vmem>>, vector<1x32x128xf32>
    %4 = vector.shape_cast %3 : vector<1x32x128xf32> to vector<32x128xf32>
    %c0_1 = arith.constant 0 : index
    %c0_2 = arith.constant 0 : index
    %5 = vector.load %arg3[%c0_1, %c0_2] : memref<128x128xf32, #tpu.memory_space<vmem>>, vector<128x128xf32>
    %cst = arith.constant dense<0.000000e+00> : vector<32x128xf32>
    %6 = tpu.matmul %4, %5, %cst {dimension_numbers = #tpu.dot_dimension_numbers<[1], [0], [0], [1], [0, 0, 1, 1], [], []>} : vector<32x128xf32>, vector<128x128xf32>, vector<32x128xf32> -> vector<32x128xf32>
    %c0_3 = arith.constant 0 : index
    %c0_4 = arith.constant 0 : index
    %7 = vector.load %arg6[%c0_3, %c0_4] : memref<1x128xf32, #tpu.memory_space<vmem>>, vector<1x128xf32>
    %8 = vector.broadcast %7 : vector<1x128xf32> to vector<32x128xf32>
    %9 = arith.addf %6, %8 : vector<32x128xf32>
    %cst_5 = arith.constant 0.000000e+00 : f32
    %10 = vector.broadcast %cst_5 : f32 to vector<32x128xf32>
    %11 = arith.maximumf %9, %10 : vector<32x128xf32>
    %12 = tpu.iota {dimensions = array<i32: 0>} : vector<32x1xi32>
    %13 = vector.broadcast %1 : i32 to vector<32x1xi32>
    %14 = arith.addi %13, %12 : vector<32x1xi32>
    %c8_i32 = arith.constant 8 : i32
    %15 = vector.broadcast %c8_i32 : i32 to vector<32x1xi32>
    %16 = arith.cmpi sge, %14, %15 : vector<32x1xi32>
    %c24_i32 = arith.constant 24 : i32
    %17 = vector.broadcast %c24_i32 : i32 to vector<32x1xi32>
    %18 = arith.cmpi slt, %14, %17 : vector<32x1xi32>
    %19 = arith.andi %16, %18 : vector<32x1xi1>
    %cst_6 = arith.constant 0.000000e+00 : f32
    %20 = vector.shape_cast %19 : vector<32x1xi1> to vector<32x1xi1>
    %21 = vector.broadcast %20 : vector<32x1xi1> to vector<32x128xi1>
    %22 = vector.broadcast %cst_6 : f32 to vector<32x128xf32>
    %23 = arith.select %21, %11, %22 : vector<32x128xi1>, vector<32x128xf32>
    %c1_i32 = arith.constant 1 : i32
    %24 = tpu.dynamic_rotate %23 by %c1_i32 dim 0 : vector<32x128xf32>, i32 -> vector<32x128xf32>
    %c31_i32 = arith.constant 31 : i32
    %25 = tpu.dynamic_rotate %23 by %c31_i32 dim 0 : vector<32x128xf32>, i32 -> vector<32x128xf32>
    %26 = vector.extract_strided_slice %24 {offsets = [8, 0], sizes = [16, 128], strides = [1, 1]} : vector<32x128xf32> to vector<16x128xf32>
    %27 = vector.extract_strided_slice %23 {offsets = [8, 0], sizes = [16, 128], strides = [1, 1]} : vector<32x128xf32> to vector<16x128xf32>
    %28 = vector.extract_strided_slice %25 {offsets = [8, 0], sizes = [16, 128], strides = [1, 1]} : vector<32x128xf32> to vector<16x128xf32>
    %29 = tpu.concatenate %26, %27, %28 in 1 : vector<16x128xf32>, vector<16x128xf32>, vector<16x128xf32> -> vector<16x384xf32>
    %c0_7 = arith.constant 0 : index
    %c0_8 = arith.constant 0 : index
    %30 = vector.load %arg4[%c0_7, %c0_8] : memref<384x128xf32, #tpu.memory_space<vmem>>, vector<384x128xf32>
    %cst_9 = arith.constant dense<0.000000e+00> : vector<16x128xf32>
    %31 = tpu.matmul %29, %30, %cst_9 {dimension_numbers = #tpu.dot_dimension_numbers<[1], [0], [0], [1], [0, 0, 1, 1], [], []>} : vector<16x384xf32>, vector<384x128xf32>, vector<16x128xf32> -> vector<16x128xf32>
    %c0_10 = arith.constant 0 : index
    %c0_11 = arith.constant 0 : index
    %32 = vector.load %arg7[%c0_10, %c0_11] : memref<1x128xf32, #tpu.memory_space<vmem>>, vector<1x128xf32>
    %33 = vector.broadcast %32 : vector<1x128xf32> to vector<16x128xf32>
    %34 = arith.addf %31, %33 : vector<16x128xf32>
    %cst_12 = arith.constant 0.000000e+00 : f32
    %35 = vector.broadcast %cst_12 : f32 to vector<16x128xf32>
    %36 = arith.maximumf %34, %35 : vector<16x128xf32>
    %c0_13 = arith.constant 0 : index
    %c0_14 = arith.constant 0 : index
    %37 = vector.load %arg5[%c0_13, %c0_14] : memref<128x128xf32, #tpu.memory_space<vmem>>, vector<128x128xf32>
    %cst_15 = arith.constant dense<0.000000e+00> : vector<16x128xf32>
    %38 = tpu.matmul %36, %37, %cst_15 {dimension_numbers = #tpu.dot_dimension_numbers<[1], [0], [0], [1], [0, 0, 1, 1], [], []>} : vector<16x128xf32>, vector<128x128xf32>, vector<16x128xf32> -> vector<16x128xf32>
    %c0_16 = arith.constant 0 : index
    %c0_17 = arith.constant 0 : index
    %39 = vector.load %arg8[%c0_16, %c0_17] : memref<1x128xf32, #tpu.memory_space<vmem>>, vector<1x128xf32>
    %40 = vector.broadcast %39 : vector<1x128xf32> to vector<16x128xf32>
    %41 = arith.addf %38, %40 : vector<16x128xf32>
    %c8_i32_18 = arith.constant 8 : i32
    %42 = arith.addi %1, %c8_i32_18 : i32
    %43 = tpu.assume_multiple %42, 8 : i32
    %c0_19 = arith.constant 0 : index
    %44 = arith.index_cast %43 : i32 to index
    %c0_20 = arith.constant 0 : index
    %45 = vector.load %arg2[%c0_19, %44, %c0_20] : memref<1x32x128xf32, #tpu.memory_space<vmem>>, vector<1x16x128xf32>
    %46 = vector.shape_cast %45 : vector<1x16x128xf32> to vector<16x128xf32>
    %47 = arith.addf %41, %46 : vector<16x128xf32>
    %cst_21 = arith.constant 0.000000e+00 : f32
    %48 = vector.broadcast %cst_21 : f32 to vector<16x128xf32>
    %49 = arith.maximumf %47, %48 : vector<16x128xf32>
    %c0_22 = arith.constant 0 : index
    %c0_23 = arith.constant 0 : index
    %c0_24 = arith.constant 0 : index
    %50 = vector.load %arg9[%c0_22, %c0_23, %c0_24] : memref<1x16x128xf32, #tpu.memory_space<vmem>>, vector<1x16x128xf32>
    %51 = vector.shape_cast %50 : vector<1x16x128xf32> to vector<16x128xf32>
    %52 = vector.shape_cast %49 : vector<16x128xf32> to vector<1x16x128xf32>
    tpu.vector_store %arg9[%c0_22, %c0_23, %c0_24], %52 {strides = array<i32>} : memref<1x16x128xf32, #tpu.memory_space<vmem>>, vector<1x16x128xf32>,
    return
  }
  func.func @transform_0(%arg0: i32, %arg1: i32) -> (i32, i32, i32) {
    %c0_i32 = arith.constant 0 : i32
    %c0_i32_0 = arith.constant 0 : i32
    %c0_i32_1 = arith.constant 0 : i32
    return %arg0, %c0_i32, %c0_i32_0 : i32, i32, i32
  }
  func.func @transform_1(%arg0: i32, %arg1: i32) -> (i32, i32) {
    %c0_i32 = arith.constant 0 : i32
    %c0_i32_0 = arith.constant 0 : i32
    %c0_i32_1 = arith.constant 0 : i32
    return %c0_i32, %c0_i32_0 : i32, i32
  }
  func.func @transform_2(%arg0: i32, %arg1: i32) -> (i32, i32) {
    %c0_i32 = arith.constant 0 : i32
    %c0_i32_0 = arith.constant 0 : i32
    %c0_i32_1 = arith.constant 0 : i32
    return %c0_i32, %c0_i32_0 : i32, i32
  }
  func.func @transform_3(%arg0: i32, %arg1: i32) -> (i32, i32) {
    %c0_i32 = arith.constant 0 : i32
    %c0_i32_0 = arith.constant 0 : i32
    %c0_i32_1 = arith.constant 0 : i32
    return %c0_i32, %c0_i32_0 : i32, i32
  }
  func.func @transform_4(%arg0: i32, %arg1: i32) -> (i32, i32) {
    %c0_i32 = arith.constant 0 : i32
    %c0_i32_0 = arith.constant 0 : i32
    %c0_i32_1 = arith.constant 0 : i32
    return %c0_i32, %c0_i32_0 : i32, i32
  }
  func.func @transform_5(%arg0: i32, %arg1: i32) -> (i32, i32) {
    %c0_i32 = arith.constant 0 : i32
    %c0_i32_0 = arith.constant 0 : i32
    %c0_i32_1 = arith.constant 0 : i32
    return %c0_i32, %c0_i32_0 : i32, i32
  }
  func.func @transform_6(%arg0: i32, %arg1: i32) -> (i32, i32) {
    %c0_i32 = arith.constant 0 : i32
    %c0_i32_0 = arith.constant 0 : i32
    %c0_i32_1 = arith.constant 0 : i32
    return %c0_i32, %c0_i32_0 : i32, i32
  }
  func.func @transform_7(%arg0: i32, %arg1: i32) -> (i32, i32, i32) {
    %c0_i32 = arith.constant 0 : i32
    %c0_i32_0 = arith.constant 0 : i32
    return %arg0, %arg1, %c0_i32 : i32, i32, i32
  }
}

module attributes {stable_mosaic.version = 11 : i64} {
  func.func @bottleneck_kernel(%arg0: i32, %arg1: i32, %arg2: memref<1x32x128xf32, #tpu.memory_space<vmem>>, %arg3: memref<128x128xf32, #tpu.memory_space<vmem>>, %arg4: memref<384x128xf32, #tpu.memory_space<vmem>>, %arg5: memref<128x128xf32, #tpu.memory_space<vmem>>, %arg6: memref<1x128xf32, #tpu.memory_space<vmem>>, %arg7: memref<1x128xf32, #tpu.memory_space<vmem>>, %arg8: memref<1x128xf32, #tpu.memory_space<vmem>>, %arg9: memref<1x16x128xf32, #tpu.memory_space<vmem>>) attributes {dimension_semantics = [#tpu.dimension_semantics<parallel>, #tpu.dimension_semantics<arbitrary>], iteration_bounds = array<i64: 2, 1>, scalar_prefetch = 0 : i64, scratch_operands = 0 : i64, tpu.core_type = #tpu.core_type<tc>, window_params = [{pipeline_mode = #tpu.pipeline_mode<synchronous>, transform_indices = @transform_0, window_bounds = array<i64: 1, 32, 128>}, {pipeline_mode = #tpu.pipeline_mode<synchronous>, transform_indices = @transform_1, window_bounds = array<i64: 128, 128>}, {pipeline_mode = #tpu.pipeline_mode<synchronous>, transform_indices = @transform_2, window_bounds = array<i64: 384, 128>}, {pipeline_mode = #tpu.pipeline_mode<synchronous>, transform_indices = @transform_3, window_bounds = array<i64: 128, 128>}, {pipeline_mode = #tpu.pipeline_mode<synchronous>, transform_indices = @transform_4, window_bounds = array<i64: 1, 128>}, {pipeline_mode = #tpu.pipeline_mode<synchronous>, transform_indices = @transform_5, window_bounds = array<i64: 1, 128>}, {pipeline_mode = #tpu.pipeline_mode<synchronous>, transform_indices = @transform_6, window_bounds = array<i64: 1, 128>}, {transform_indices = @transform_7, window_bounds = array<i64: 1, 16, 128>}]} {
    %c16_i32 = arith.constant 16 : i32
    %0 = arith.muli %arg1, %c16_i32 : i32
    %1 = tpu.assume_multiple %0, 16 : i32
    %c0 = arith.constant 0 : index
    %2 = arith.index_cast %1 : i32 to index
    %c0_0 = arith.constant 0 : index
    %3 = vector.load %arg2[%c0, %2, %c0_0] : memref<1x32x128xf32, #tpu.memory_space<vmem>>, vector<1x32x128xf32>
    %4 = vector.shape_cast %3 : vector<1x32x128xf32> to vector<32x128xf32>
    %c0_1 = arith.constant 0 : index
    %c0_2 = arith.constant 0 : index
    %5 = vector.load %arg3[%c0_1, %c0_2] : memref<128x128xf32, #tpu.memory_space<vmem>>, vector<128x128xf32>
    %cst = arith.constant dense<0.000000e+00> : vector<32x128xf32>
    %6 = tpu.matmul %4, %5, %cst {dimension_numbers = #tpu.dot_dimension_numbers<[1], [0], [0], [1], [0, 0, 1, 1], [], []>} : vector<32x128xf32>, vector<128x128xf32>, vector<32x128xf32> -> vector<32x128xf32>
    %c0_3 = arith.constant 0 : index
    %c0_4 = arith.constant 0 : index
    %7 = vector.load %arg6[%c0_3, %c0_4] : memref<1x128xf32, #tpu.memory_space<vmem>>, vector<1x128xf32>
    %8 = vector.broadcast %7 : vector<1x128xf32> to vector<32x128xf32>
    %9 = arith.addf %6, %8 : vector<32x128xf32>
    %cst_5 = arith.constant 0.000000e+00 : f32
    %10 = vector.broadcast %cst_5 : f32 to vector<32x128xf32>
    %11 = arith.maximumf %9, %10 : vector<32x128xf32>
    %12 = tpu.iota {dimensions = array<i32: 0>} : vector<32x1xi32>
    %13 = vector.broadcast %1 : i32 to vector<32x1xi32>
    %14 = arith.addi %13, %12 : vector<32x1xi32>
    %c8_i32 = arith.constant 8 : i32
    %15 = vector.broadcast %c8_i32 : i32 to vector<32x1xi32>
    %16 = arith.cmpi sge, %14, %15 : vector<32x1xi32>
    %c24_i32 = arith.constant 24 : i32
    %17 = vector.broadcast %c24_i32 : i32 to vector<32x1xi32>
    %18 = arith.cmpi slt, %14, %17 : vector<32x1xi32>
    %19 = arith.andi %16, %18 : vector<32x1xi1>
    %cst_6 = arith.constant 0.000000e+00 : f32
    %20 = vector.shape_cast %19 : vector<32x1xi1> to vector<32x1xi1>
    %21 = vector.broadcast %20 : vector<32x1xi1> to vector<32x128xi1>
    %22 = vector.broadcast %cst_6 : f32 to vector<32x128xf32>
    %23 = arith.select %21, %11, %22 : vector<32x128xi1>, vector<32x128xf32>
    %24 = vector.extract_strided_slice %23 {offsets = [7, 0], sizes = [16, 128], strides = [1, 1]} : vector<32x128xf32> to vector<16x128xf32>
    %25 = vector.extract_strided_slice %23 {offsets = [8, 0], sizes = [16, 128], strides = [1, 1]} : vector<32x128xf32> to vector<16x128xf32>
    %26 = vector.extract_strided_slice %23 {offsets = [9, 0], sizes = [16, 128], strides = [1, 1]} : vector<32x128xf32> to vector<16x128xf32>
    %27 = tpu.concatenate %24, %25, %26 in 1 : vector<16x128xf32>, vector<16x128xf32>, vector<16x128xf32> -> vector<16x384xf32>
    %c0_7 = arith.constant 0 : index
    %c0_8 = arith.constant 0 : index
    %28 = vector.load %arg4[%c0_7, %c0_8] : memref<384x128xf32, #tpu.memory_space<vmem>>, vector<384x128xf32>
    %cst_9 = arith.constant dense<0.000000e+00> : vector<16x128xf32>
    %29 = tpu.matmul %27, %28, %cst_9 {dimension_numbers = #tpu.dot_dimension_numbers<[1], [0], [0], [1], [0, 0, 1, 1], [], []>} : vector<16x384xf32>, vector<384x128xf32>, vector<16x128xf32> -> vector<16x128xf32>
    %c0_10 = arith.constant 0 : index
    %c0_11 = arith.constant 0 : index
    %30 = vector.load %arg7[%c0_10, %c0_11] : memref<1x128xf32, #tpu.memory_space<vmem>>, vector<1x128xf32>
    %31 = vector.broadcast %30 : vector<1x128xf32> to vector<16x128xf32>
    %32 = arith.addf %29, %31 : vector<16x128xf32>
    %cst_12 = arith.constant 0.000000e+00 : f32
    %33 = vector.broadcast %cst_12 : f32 to vector<16x128xf32>
    %34 = arith.maximumf %32, %33 : vector<16x128xf32>
    %c0_13 = arith.constant 0 : index
    %c0_14 = arith.constant 0 : index
    %35 = vector.load %arg5[%c0_13, %c0_14] : memref<128x128xf32, #tpu.memory_space<vmem>>, vector<128x128xf32>
    %cst_15 = arith.constant dense<0.000000e+00> : vector<16x128xf32>
    %36 = tpu.matmul %34, %35, %cst_15 {dimension_numbers = #tpu.dot_dimension_numbers<[1], [0], [0], [1], [0, 0, 1, 1], [], []>} : vector<16x128xf32>, vector<128x128xf32>, vector<16x128xf32> -> vector<16x128xf32>
    %c0_16 = arith.constant 0 : index
    %c0_17 = arith.constant 0 : index
    %37 = vector.load %arg8[%c0_16, %c0_17] : memref<1x128xf32, #tpu.memory_space<vmem>>, vector<1x128xf32>
    %38 = vector.broadcast %37 : vector<1x128xf32> to vector<16x128xf32>
    %39 = arith.addf %36, %38 : vector<16x128xf32>
    %c8_i32_18 = arith.constant 8 : i32
    %40 = arith.addi %1, %c8_i32_18 : i32
    %41 = tpu.assume_multiple %40, 8 : i32
    %c0_19 = arith.constant 0 : index
    %42 = arith.index_cast %41 : i32 to index
    %c0_20 = arith.constant 0 : index
    %43 = vector.load %arg2[%c0_19, %42, %c0_20] : memref<1x32x128xf32, #tpu.memory_space<vmem>>, vector<1x16x128xf32>
    %44 = vector.shape_cast %43 : vector<1x16x128xf32> to vector<16x128xf32>
    %45 = arith.addf %39, %44 : vector<16x128xf32>
    %cst_21 = arith.constant 0.000000e+00 : f32
    %46 = vector.broadcast %cst_21 : f32 to vector<16x128xf32>
    %47 = arith.maximumf %45, %46 : vector<16x128xf32>
    %c0_22 = arith.constant 0 : index
    %c0_23 = arith.constant 0 : index
    %c0_24 = arith.constant 0 : index
    %48 = vector.load %arg9[%c0_22, %c0_23, %c0_24] : memref<1x16x128xf32, #tpu.memory_space<vmem>>, vector<1x16x128xf32>
    %49 = vector.shape_cast %48 : vector<1x16x128xf32> to vector<16x128xf32>
    %50 = vector.shape_cast %47 : vector<16x128xf32> to vector<1x16x128xf32>
    tpu.vector_store %arg9[%c0_22, %c0_23, %c0_24], %50 {strides = array<i32>} : memref<1x16x128xf32, #tpu.memory_space<vmem>>, vector<1x16x128xf32>,
    return
  }
  func.func @transform_0(%arg0: i32, %arg1: i32) -> (i32, i32, i32) {
    %c0_i32 = arith.constant 0 : i32
    %c0_i32_0 = arith.constant 0 : i32
    %c0_i32_1 = arith.constant 0 : i32
    return %arg0, %c0_i32, %c0_i32_0 : i32, i32, i32
  }
  func.func @transform_1(%arg0: i32, %arg1: i32) -> (i32, i32) {
    %c0_i32 = arith.constant 0 : i32
    %c0_i32_0 = arith.constant 0 : i32
    %c0_i32_1 = arith.constant 0 : i32
    return %c0_i32, %c0_i32_0 : i32, i32
  }
  func.func @transform_2(%arg0: i32, %arg1: i32) -> (i32, i32) {
    %c0_i32 = arith.constant 0 : i32
    %c0_i32_0 = arith.constant 0 : i32
    %c0_i32_1 = arith.constant 0 : i32
    return %c0_i32, %c0_i32_0 : i32, i32
  }
  func.func @transform_3(%arg0: i32, %arg1: i32) -> (i32, i32) {
    %c0_i32 = arith.constant 0 : i32
    %c0_i32_0 = arith.constant 0 : i32
    %c0_i32_1 = arith.constant 0 : i32
    return %c0_i32, %c0_i32_0 : i32, i32
  }
  func.func @transform_4(%arg0: i32, %arg1: i32) -> (i32, i32) {
    %c0_i32 = arith.constant 0 : i32
    %c0_i32_0 = arith.constant 0 : i32
    %c0_i32_1 = arith.constant 0 : i32
    return %c0_i32, %c0_i32_0 : i32, i32
  }
  func.func @transform_5(%arg0: i32, %arg1: i32) -> (i32, i32) {
    %c0_i32 = arith.constant 0 : i32
    %c0_i32_0 = arith.constant 0 : i32
    %c0_i32_1 = arith.constant 0 : i32
    return %c0_i32, %c0_i32_0 : i32, i32
  }
  func.func @transform_6(%arg0: i32, %arg1: i32) -> (i32, i32) {
    %c0_i32 = arith.constant 0 : i32
    %c0_i32_0 = arith.constant 0 : i32
    %c0_i32_1 = arith.constant 0 : i32
    return %c0_i32, %c0_i32_0 : i32, i32
  }
  func.func @transform_7(%arg0: i32, %arg1: i32) -> (i32, i32, i32) {
    %c0_i32 = arith.constant 0 : i32
    %c0_i32_0 = arith.constant 0 : i32
    return %arg0, %arg1, %c0_i32 : i32, i32, i32
  }
}

module attributes {stable_mosaic.version = 11 : i64} {
  func.func @bottleneck_kernel(%arg0: i32, %arg1: i32, %arg2: memref<1x32x128xf32, #tpu.memory_space<vmem>>, %arg3: memref<128x128xf32, #tpu.memory_space<vmem>>, %arg4: memref<384x128xf32, #tpu.memory_space<vmem>>, %arg5: memref<128x128xf32, #tpu.memory_space<vmem>>, %arg6: memref<1x128xf32, #tpu.memory_space<vmem>>, %arg7: memref<1x128xf32, #tpu.memory_space<vmem>>, %arg8: memref<1x128xf32, #tpu.memory_space<vmem>>, %arg9: memref<1x16x128xf32, #tpu.memory_space<vmem>>) attributes {dimension_semantics = [#tpu.dimension_semantics<parallel>, #tpu.dimension_semantics<arbitrary>], iteration_bounds = array<i64: 2, 1>, scalar_prefetch = 0 : i64, scratch_operands = 0 : i64, tpu.core_type = #tpu.core_type<tc>, window_params = [{transform_indices = @transform_0, window_bounds = array<i64: 1, 32, 128>}, {pipeline_mode = #tpu.pipeline_mode<synchronous>, transform_indices = @transform_1, window_bounds = array<i64: 128, 128>}, {pipeline_mode = #tpu.pipeline_mode<synchronous>, transform_indices = @transform_2, window_bounds = array<i64: 384, 128>}, {pipeline_mode = #tpu.pipeline_mode<synchronous>, transform_indices = @transform_3, window_bounds = array<i64: 128, 128>}, {pipeline_mode = #tpu.pipeline_mode<synchronous>, transform_indices = @transform_4, window_bounds = array<i64: 1, 128>}, {pipeline_mode = #tpu.pipeline_mode<synchronous>, transform_indices = @transform_5, window_bounds = array<i64: 1, 128>}, {pipeline_mode = #tpu.pipeline_mode<synchronous>, transform_indices = @transform_6, window_bounds = array<i64: 1, 128>}, {transform_indices = @transform_7, window_bounds = array<i64: 1, 16, 128>}]} {
    %c16_i32 = arith.constant 16 : i32
    %0 = arith.muli %arg1, %c16_i32 : i32
    %1 = tpu.assume_multiple %0, 16 : i32
    %c0 = arith.constant 0 : index
    %2 = arith.index_cast %1 : i32 to index
    %c0_0 = arith.constant 0 : index
    %3 = vector.load %arg2[%c0, %2, %c0_0] : memref<1x32x128xf32, #tpu.memory_space<vmem>>, vector<1x32x128xf32>
    %4 = vector.shape_cast %3 : vector<1x32x128xf32> to vector<32x128xf32>
    %c0_1 = arith.constant 0 : index
    %c0_2 = arith.constant 0 : index
    %5 = vector.load %arg3[%c0_1, %c0_2] : memref<128x128xf32, #tpu.memory_space<vmem>>, vector<128x128xf32>
    %cst = arith.constant dense<0.000000e+00> : vector<32x128xf32>
    %6 = tpu.matmul %4, %5, %cst {dimension_numbers = #tpu.dot_dimension_numbers<[1], [0], [0], [1], [0, 0, 1, 1], [], []>} : vector<32x128xf32>, vector<128x128xf32>, vector<32x128xf32> -> vector<32x128xf32>
    %c0_3 = arith.constant 0 : index
    %c0_4 = arith.constant 0 : index
    %7 = vector.load %arg6[%c0_3, %c0_4] : memref<1x128xf32, #tpu.memory_space<vmem>>, vector<1x128xf32>
    %8 = vector.broadcast %7 : vector<1x128xf32> to vector<32x128xf32>
    %9 = arith.addf %6, %8 : vector<32x128xf32>
    %cst_5 = arith.constant 0.000000e+00 : f32
    %10 = vector.broadcast %cst_5 : f32 to vector<32x128xf32>
    %11 = arith.maximumf %9, %10 : vector<32x128xf32>
    %12 = tpu.iota {dimensions = array<i32: 0>} : vector<32x1xi32>
    %13 = vector.broadcast %1 : i32 to vector<32x1xi32>
    %14 = arith.addi %13, %12 : vector<32x1xi32>
    %c8_i32 = arith.constant 8 : i32
    %15 = vector.broadcast %c8_i32 : i32 to vector<32x1xi32>
    %16 = arith.cmpi sge, %14, %15 : vector<32x1xi32>
    %c24_i32 = arith.constant 24 : i32
    %17 = vector.broadcast %c24_i32 : i32 to vector<32x1xi32>
    %18 = arith.cmpi slt, %14, %17 : vector<32x1xi32>
    %19 = arith.andi %16, %18 : vector<32x1xi1>
    %cst_6 = arith.constant 0.000000e+00 : f32
    %20 = vector.shape_cast %19 : vector<32x1xi1> to vector<32x1xi1>
    %21 = vector.broadcast %20 : vector<32x1xi1> to vector<32x128xi1>
    %22 = vector.broadcast %cst_6 : f32 to vector<32x128xf32>
    %23 = arith.select %21, %11, %22 : vector<32x128xi1>, vector<32x128xf32>
    %24 = vector.extract_strided_slice %23 {offsets = [7, 0], sizes = [16, 128], strides = [1, 1]} : vector<32x128xf32> to vector<16x128xf32>
    %25 = vector.extract_strided_slice %23 {offsets = [8, 0], sizes = [16, 128], strides = [1, 1]} : vector<32x128xf32> to vector<16x128xf32>
    %26 = vector.extract_strided_slice %23 {offsets = [9, 0], sizes = [16, 128], strides = [1, 1]} : vector<32x128xf32> to vector<16x128xf32>
    %27 = tpu.concatenate %24, %25, %26 in 1 : vector<16x128xf32>, vector<16x128xf32>, vector<16x128xf32> -> vector<16x384xf32>
    %c0_7 = arith.constant 0 : index
    %c0_8 = arith.constant 0 : index
    %28 = vector.load %arg4[%c0_7, %c0_8] : memref<384x128xf32, #tpu.memory_space<vmem>>, vector<384x128xf32>
    %cst_9 = arith.constant dense<0.000000e+00> : vector<16x128xf32>
    %29 = tpu.matmul %27, %28, %cst_9 {dimension_numbers = #tpu.dot_dimension_numbers<[1], [0], [0], [1], [0, 0, 1, 1], [], []>} : vector<16x384xf32>, vector<384x128xf32>, vector<16x128xf32> -> vector<16x128xf32>
    %c0_10 = arith.constant 0 : index
    %c0_11 = arith.constant 0 : index
    %30 = vector.load %arg7[%c0_10, %c0_11] : memref<1x128xf32, #tpu.memory_space<vmem>>, vector<1x128xf32>
    %31 = vector.broadcast %30 : vector<1x128xf32> to vector<16x128xf32>
    %32 = arith.addf %29, %31 : vector<16x128xf32>
    %cst_12 = arith.constant 0.000000e+00 : f32
    %33 = vector.broadcast %cst_12 : f32 to vector<16x128xf32>
    %34 = arith.maximumf %32, %33 : vector<16x128xf32>
    %c0_13 = arith.constant 0 : index
    %c0_14 = arith.constant 0 : index
    %35 = vector.load %arg5[%c0_13, %c0_14] : memref<128x128xf32, #tpu.memory_space<vmem>>, vector<128x128xf32>
    %cst_15 = arith.constant dense<0.000000e+00> : vector<16x128xf32>
    %36 = tpu.matmul %34, %35, %cst_15 {dimension_numbers = #tpu.dot_dimension_numbers<[1], [0], [0], [1], [0, 0, 1, 1], [], []>} : vector<16x128xf32>, vector<128x128xf32>, vector<16x128xf32> -> vector<16x128xf32>
    %c0_16 = arith.constant 0 : index
    %c0_17 = arith.constant 0 : index
    %37 = vector.load %arg8[%c0_16, %c0_17] : memref<1x128xf32, #tpu.memory_space<vmem>>, vector<1x128xf32>
    %38 = vector.broadcast %37 : vector<1x128xf32> to vector<16x128xf32>
    %39 = arith.addf %36, %38 : vector<16x128xf32>
    %c8_i32_18 = arith.constant 8 : i32
    %40 = arith.addi %1, %c8_i32_18 : i32
    %41 = tpu.assume_multiple %40, 8 : i32
    %c0_19 = arith.constant 0 : index
    %42 = arith.index_cast %41 : i32 to index
    %c0_20 = arith.constant 0 : index
    %43 = vector.load %arg2[%c0_19, %42, %c0_20] : memref<1x32x128xf32, #tpu.memory_space<vmem>>, vector<1x16x128xf32>
    %44 = vector.shape_cast %43 : vector<1x16x128xf32> to vector<16x128xf32>
    %45 = arith.addf %39, %44 : vector<16x128xf32>
    %cst_21 = arith.constant 0.000000e+00 : f32
    %46 = vector.broadcast %cst_21 : f32 to vector<16x128xf32>
    %47 = arith.maximumf %45, %46 : vector<16x128xf32>
    %c0_22 = arith.constant 0 : index
    %c0_23 = arith.constant 0 : index
    %c0_24 = arith.constant 0 : index
    %48 = vector.load %arg9[%c0_22, %c0_23, %c0_24] : memref<1x16x128xf32, #tpu.memory_space<vmem>>, vector<1x16x128xf32>
    %49 = vector.shape_cast %48 : vector<1x16x128xf32> to vector<16x128xf32>
    %50 = vector.shape_cast %47 : vector<16x128xf32> to vector<1x16x128xf32>
    tpu.vector_store %arg9[%c0_22, %c0_23, %c0_24], %50 {strides = array<i32>} : memref<1x16x128xf32, #tpu.memory_space<vmem>>, vector<1x16x128xf32>,
    return
  }
  func.func @transform_0(%arg0: i32, %arg1: i32) -> (i32, i32, i32) {
    %c0_i32 = arith.constant 0 : i32
    %c0_i32_0 = arith.constant 0 : i32
    %c0_i32_1 = arith.constant 0 : i32
    return %arg0, %c0_i32, %c0_i32_0 : i32, i32, i32
  }
  func.func @transform_1(%arg0: i32, %arg1: i32) -> (i32, i32) {
    %c0_i32 = arith.constant 0 : i32
    %c0_i32_0 = arith.constant 0 : i32
    %c0_i32_1 = arith.constant 0 : i32
    return %c0_i32, %c0_i32_0 : i32, i32
  }
  func.func @transform_2(%arg0: i32, %arg1: i32) -> (i32, i32) {
    %c0_i32 = arith.constant 0 : i32
    %c0_i32_0 = arith.constant 0 : i32
    %c0_i32_1 = arith.constant 0 : i32
    return %c0_i32, %c0_i32_0 : i32, i32
  }
  func.func @transform_3(%arg0: i32, %arg1: i32) -> (i32, i32) {
    %c0_i32 = arith.constant 0 : i32
    %c0_i32_0 = arith.constant 0 : i32
    %c0_i32_1 = arith.constant 0 : i32
    return %c0_i32, %c0_i32_0 : i32, i32
  }
  func.func @transform_4(%arg0: i32, %arg1: i32) -> (i32, i32) {
    %c0_i32 = arith.constant 0 : i32
    %c0_i32_0 = arith.constant 0 : i32
    %c0_i32_1 = arith.constant 0 : i32
    return %c0_i32, %c0_i32_0 : i32, i32
  }
  func.func @transform_5(%arg0: i32, %arg1: i32) -> (i32, i32) {
    %c0_i32 = arith.constant 0 : i32
    %c0_i32_0 = arith.constant 0 : i32
    %c0_i32_1 = arith.constant 0 : i32
    return %c0_i32, %c0_i32_0 : i32, i32
  }
  func.func @transform_6(%arg0: i32, %arg1: i32) -> (i32, i32) {
    %c0_i32 = arith.constant 0 : i32
    %c0_i32_0 = arith.constant 0 : i32
    %c0_i32_1 = arith.constant 0 : i32
    return %c0_i32, %c0_i32_0 : i32, i32
  }
  func.func @transform_7(%arg0: i32, %arg1: i32) -> (i32, i32, i32) {
    %c0_i32 = arith.constant 0 : i32
    %c0_i32_0 = arith.constant 0 : i32
    return %arg0, %arg1, %c0_i32 : i32, i32, i32
  }
}

</mosaic_0001>

<llo_original>
// kernel: _bottleneck_impl.1
$region0: #{_bottleneck_impl.1}
  #allocation0 [shape = 'u32[]', space=smem, size = 0x4, offset = 0x4, fixed_abs, tag = 'smem constant byte address 0x4 - core index']
  #allocation1 [shape = 'u32[144,128]{1,0:T(1,128)}', space=vmem, size = 0x12000, scoped, tag = 'internal scratch']
  %s0 = inlined_call_operand.vmem [shape: f32[2,32,128], index: 0, kind: input, shape index: {}]
  %s1 = inlined_call_operand.vmem [shape: f32[128,128], index: 1, kind: input, shape index: {}]
  %s2 = inlined_call_operand.vmem [shape: f32[384,128], index: 2, kind: input, shape index: {}]
  %s3 = inlined_call_operand.vmem [shape: f32[128,128], index: 3, kind: input, shape index: {}]
  %s4 = inlined_call_operand.vmem [shape: f32[1,128], index: 4, kind: input, shape index: {}]
  %s5 = inlined_call_operand.vmem [shape: f32[1,128], index: 5, kind: input, shape index: {}]
  %s6 = inlined_call_operand.vmem [shape: f32[1,128], index: 6, kind: input, shape index: {}]
  %s7 = inlined_call_operand.vmem [shape: f32[2,16,128], index: 7, kind: output, shape index: {}]
  %s8 = sld [smem:[#allocation0]]
  $region61: #{_bottleneck_impl.1} parent=0
    _
  %s10 = ssub.s32 1, %s8
  %s11 = scalar_select 0, %s10, %s8
  loop: start=0, step=1, limit=4
  $region2: #{_bottleneck_impl.1} parent=0 // loop_pre_header
    _
  $region3: #{_bottleneck_impl.1} parent=0 // loop_header
    %s13 = sphi 0, %s17
    %p14 = scmp.ge.s32.totalorder %s13, 4
    %s20 = sphi 0, %s32
    %s21 = sphi 0, %s28
    %s22 = sphi 0, %s20
    %s23 = sphi 0, %s21
    %s24 = sphi 0, %s22
    %s25 = sphi 0, %s23
    %s35 = sphi 0, %s37
    %s38 = sphi 0, %s35
    %s39 = sphi 0, %s38
    %s55 = sphi 0, %s39
    %s59 = sphi 0, %s59
    %s61 = sphi 0, %s59
    %s62 = sphi 0, %s61
    %s76 = sphi 0, %s62
    %s80 = sphi 0, %s80
    %s82 = sphi 0, %s80
    %s83 = sphi 0, %s82
    %s97 = sphi 0, %s83
    %s101 = sphi 0, %s101
    %s103 = sphi 0, %s101
    %s104 = sphi 0, %s103
    %s118 = sphi 0, %s104
    %s122 = sphi 0, %s122
    %s124 = sphi 0, %s122
    %s125 = sphi 0, %s124
    %s139 = sphi 0, %s125
    %s143 = sphi 0, %s143
    %s145 = sphi 0, %s143
    %s146 = sphi 0, %s145
    %s160 = sphi 0, %s146
    %s164 = sphi 0, %s164
    %s166 = sphi 0, %s164
    %s167 = sphi 0, %s166
    %s181 = sphi 0, %s167
    %s189 = sphi 0, %s191
    %s192 = sphi 0, %s189
    %s193 = sphi 0, %s192
    %s209 = sphi 0, %s193
  $region4: #{_bottleneck_impl.1} parent=0 // loop_header_branch
    %16 = sbr.rel (%p14) target = $region8
  $region5: #{_bottleneck_impl.1} parent=0 // loop_body
    %s18 = ssub.s32 %s13, 1
    %s19 = ssub.s32 %s13, 2
    %s26 = sadd.s32 1, %s21
    %p27 = scmp.ge.s32.totalorder %s26, 1
    %s28 = scalar_select %p27, 0, %s26
    %s29 = sadd.s32 1, %s20
    %s30 = scalar_select %p27, %s29, %s20
    %p31 = scmp.ge.s32.totalorder %s30, 2
    %s32 = scalar_select %p31, 0, %s30
    %s33 = ssub.s32 %s20, %s32
    %p34 = scmp.eq.s32.totalorder %s33, 0
    %s36 = sadd.s32 %s35, 1
    %s37 = scalar_select %p34, %s35, %s36
    %p40 = pneg %p34
    %p41 = scmp.eq.s32.totalorder %s13, 1
    %p42 = por %p40, %p41
    %p43 = scmp.ne.s32.totalorder %s35, %s38
    %p44 = scmp.eq.s32.totalorder %s13, 0
    %p45 = por %p43, %p44
    %p46 = scmp.ne.s32.totalorder %s35, %s38
    %p47 = scmp.eq.s32.totalorder %s18, 1
    %p48 = por %p46, %p47
    %p49 = scmp.ne.s32.totalorder %s38, %s39
    %p50 = scmp.eq.s32.totalorder %s18, 0
    %p51 = por %p49, %p50
    %p52 = scmp.ne.s32.totalorder %s38, %s39
    %p53 = scmp.eq.s32.totalorder %s19, 1
    %p54 = por %p52, %p53
    %p56 = scmp.ne.s32.totalorder %s39, %s55
    %p57 = scmp.eq.s32.totalorder %s19, 0
    %p58 = por %p56, %p57
    %s60 = sadd.s32 %s59, 1
    %p63 = scmp.eq.s32.totalorder %s13, 1
    %p64 = scmp.ne.s32.totalorder %s59, %s61
    %p65 = scmp.eq.s32.totalorder %s13, 0
    %p66 = por %p64, %p65
    %p67 = scmp.ne.s32.totalorder %s59, %s61
    %p68 = scmp.eq.s32.totalorder %s18, 1
    %p69 = por %p67, %p68
    %p70 = scmp.ne.s32.totalorder %s61, %s62
    %p71 = scmp.eq.s32.totalorder %s18, 0
    %p72 = por %p70, %p71
    %p73 = scmp.ne.s32.totalorder %s61, %s62
    %p74 = scmp.eq.s32.totalorder %s19, 1
    %p75 = por %p73, %p74
    %p77 = scmp.ne.s32.totalorder %s62, %s76
    %p78 = scmp.eq.s32.totalorder %s19, 0
    %p79 = por %p77, %p78
    %s81 = sadd.s32 %s80, 1
    %p84 = scmp.eq.s32.totalorder %s13, 1
    %p85 = scmp.ne.s32.totalorder %s80, %s82
    %p86 = scmp.eq.s32.totalorder %s13, 0
    %p87 = por %p85, %p86
    %p88 = scmp.ne.s32.totalorder %s80, %s82
    %p89 = scmp.eq.s32.totalorder %s18, 1
    %p90 = por %p88, %p89
    %p91 = scmp.ne.s32.totalorder %s82, %s83
    %p92 = scmp.eq.s32.totalorder %s18, 0
    %p93 = por %p91, %p92
    %p94 = scmp.ne.s32.totalorder %s82, %s83
    %p95 = scmp.eq.s32.totalorder %s19, 1
    %p96 = por %p94, %p95
    %p98 = scmp.ne.s32.totalorder %s83, %s97
    %p99 = scmp.eq.s32.totalorder %s19, 0
    %p100 = por %p98, %p99
    %s102 = sadd.s32 %s101, 1
    %p105 = scmp.eq.s32.totalorder %s13, 1
    %p106 = scmp.ne.s32.totalorder %s101, %s103
    %p107 = scmp.eq.s32.totalorder %s13, 0
    %p108 = por %p106, %p107
    %p109 = scmp.ne.s32.totalorder %s101, %s103
    %p110 = scmp.eq.s32.totalorder %s18, 1
    %p111 = por %p109, %p110
    %p112 = scmp.ne.s32.totalorder %s103, %s104
    %p113 = scmp.eq.s32.totalorder %s18, 0
    %p114 = por %p112, %p113
    %p115 = scmp.ne.s32.totalorder %s103, %s104
    %p116 = scmp.eq.s32.totalorder %s19, 1
    %p117 = por %p115, %p116
    %p119 = scmp.ne.s32.totalorder %s104, %s118
    %p120 = scmp.eq.s32.totalorder %s19, 0
    %p121 = por %p119, %p120
    %s123 = sadd.s32 %s122, 1
    %p126 = scmp.eq.s32.totalorder %s13, 1
    %p127 = scmp.ne.s32.totalorder %s122, %s124
    %p128 = scmp.eq.s32.totalorder %s13, 0
    %p129 = por %p127, %p128
    %p130 = scmp.ne.s32.totalorder %s122, %s124
    %p131 = scmp.eq.s32.totalorder %s18, 1
    %p132 = por %p130, %p131
    %p133 = scmp.ne.s32.totalorder %s124, %s125
    %p134 = scmp.eq.s32.totalorder %s18, 0
    %p135 = por %p133, %p134
    %p136 = scmp.ne.s32.totalorder %s124, %s125
    %p137 = scmp.eq.s32.totalorder %s19, 1
    %p138 = por %p136, %p137
    %p140 = scmp.ne.s32.totalorder %s125, %s139
    %p141 = scmp.eq.s32.totalorder %s19, 0
    %p142 = por %p140, %p141
    %s144 = sadd.s32 %s143, 1
    %p147 = scmp.eq.s32.totalorder %s13, 1
    %p148 = scmp.ne.s32.totalorder %s143, %s145
    %p149 = scmp.eq.s32.totalorder %s13, 0
    %p150 = por %p148, %p149
    %p151 = scmp.ne.s32.totalorder %s143, %s145
    %p152 = scmp.eq.s32.totalorder %s18, 1
    %p153 = por %p151, %p152
    %p154 = scmp.ne.s32.totalorder %s145, %s146
    %p155 = scmp.eq.s32.totalorder %s18, 0
    %p156 = por %p154, %p155
    %p157 = scmp.ne.s32.totalorder %s145, %s146
    %p158 = scmp.eq.s32.totalorder %s19, 1
    %p159 = por %p157, %p158
    %p161 = scmp.ne.s32.totalorder %s146, %s160
    %p162 = scmp.eq.s32.totalorder %s19, 0
    %p163 = por %p161, %p162
    %s165 = sadd.s32 %s164, 1
    %p168 = scmp.eq.s32.totalorder %s13, 1
    %p169 = scmp.ne.s32.totalorder %s164, %s166
    %p170 = scmp.eq.s32.totalorder %s13, 0
    %p171 = por %p169, %p170
    %p172 = scmp.ne.s32.totalorder %s164, %s166
    %p173 = scmp.eq.s32.totalorder %s18, 1
    %p174 = por %p172, %p173
    %p175 = scmp.ne.s32.totalorder %s166, %s167
    %p176 = scmp.eq.s32.totalorder %s18, 0
    %p177 = por %p175, %p176
    %p178 = scmp.ne.s32.totalorder %s166, %s167
    %p179 = scmp.eq.s32.totalorder %s19, 1
    %p180 = por %p178, %p179
    %p182 = scmp.ne.s32.totalorder %s167, %s181
    %p183 = scmp.eq.s32.totalorder %s19, 0
    %p184 = por %p182, %p183
    %s185 = ssub.s32 %s20, %s32
    %s186 = ssub.s32 %s21, %s28
    %s187 = sor.u32 %s185, %s186
    %p188 = scmp.eq.s32.totalorder %s187, 0
    %s190 = sadd.s32 %s189, 1
    %s191 = scalar_select %p188, %s189, %s190
    %p194 = pneg %p188
    %p195 = scmp.eq.s32.totalorder %s13, 1
    %p196 = por %p194, %p195
    %p197 = scmp.ne.s32.totalorder %s189, %s192
    %p198 = scmp.eq.s32.totalorder %s13, 0
    %p199 = por %p197, %p198
    %p200 = scmp.ne.s32.totalorder %s189, %s192
    %p201 = scmp.eq.s32.totalorder %s18, 1
    %p202 = por %p200, %p201
    %p203 = scmp.ne.s32.totalorder %s192, %s193
    %p204 = scmp.eq.s32.totalorder %s18, 0
    %p205 = por %p203, %p204
    %p206 = scmp.ne.s32.totalorder %s192, %s193
    %p207 = scmp.eq.s32.totalorder %s19, 1
    %p208 = por %p206, %p207
    %p210 = scmp.ne.s32.totalorder %s193, %s209
    %p211 = scmp.eq.s32.totalorder %s19, 0
    %p212 = por %p210, %p211
    %p213 = scmp.le.s32.totalorder 1, %s13
    %p214 = scmp.lt.s32.totalorder %s13, 3
    %p215 = pnand %p213, %p214
    %p216 = pneg %p215
    // Predicated region
    $region9: #{_bottleneck_impl.1} parent=5 // pred_check
      _
    $region10: #{_bottleneck_impl.1} parent=5 // pred_check_branch
      %218 = sbr.rel (%p215) target = $region12
    $region11: #{_bottleneck_impl.1} parent=5 // pred_region
      %s219 = ssub.s32 %s13, 1
      // Predicated region
      $region13: #{_bottleneck_impl.1} parent=11 // pred_check
        %p220 = pneg %p51
      $region14: #{_bottleneck_impl.1} parent=11 // pred_check_branch
        %222 = sbr.rel (%p220) target = $region16
      $region15: #{_bottleneck_impl.1} parent=11 // pred_region
        %p223 = scmp.lt.s32.totalorder %s22, 1
        %s224 = scalar_select %p223, %s22, 1
        %s225 = smul.addr %s224, 4
        %s226 = smul.addr %s225, 8
        %s227 = scalar_lea.vmem %s0, %s226
      $region16: #{_bottleneck_impl.1} parent=11 // pred_fallthru
        _
      // Predicated region
      $region17: #{_bottleneck_impl.1} parent=11 // pred_check
        %p228 = pneg %p72
      $region18: #{_bottleneck_impl.1} parent=11 // pred_check_branch
        %230 = sbr.rel (%p228) target = $region20
      $region19: #{_bottleneck_impl.1} parent=11 // pred_region
        _
      $region20: #{_bottleneck_impl.1} parent=11 // pred_fallthru
        _
      // Predicated region
      $region21: #{_bottleneck_impl.1} parent=11 // pred_check
        %p231 = pneg %p93
      $region22: #{_bottleneck_impl.1} parent=11 // pred_check_branch
        %233 = sbr.rel (%p231) target = $region24
      $region23: #{_bottleneck_impl.1} parent=11 // pred_region
        _
      $region24: #{_bottleneck_impl.1} parent=11 // pred_fallthru
        _
      // Predicated region
      $region25: #{_bottleneck_impl.1} parent=11 // pred_check
        %p234 = pneg %p114
      $region26: #{_bottleneck_impl.1} parent=11 // pred_check_branch
        %236 = sbr.rel (%p234) target = $region28
      $region27: #{_bottleneck_impl.1} parent=11 // pred_region
        _
      $region28: #{_bottleneck_impl.1} parent=11 // pred_fallthru
        _
      // Predicated region
      $region29: #{_bottleneck_impl.1} parent=11 // pred_check
        %p237 = pneg %p135
      $region30: #{_bottleneck_impl.1} parent=11 // pred_check_branch
        %239 = sbr.rel (%p237) target = $region32
      $region31: #{_bottleneck_impl.1} parent=11 // pred_region
        _
      $region32: #{_bottleneck_impl.1} parent=11 // pred_fallthru
        _
      // Predicated region
      $region33: #{_bottleneck_impl.1} parent=11 // pred_check
        %p240 = pneg %p156
      $region34: #{_bottleneck_impl.1} parent=11 // pred_check_branch
        %242 = sbr.rel (%p240) target = $region36
      $region35: #{_bottleneck_impl.1} parent=11 // pred_region
        _
      $region36: #{_bottleneck_impl.1} parent=11 // pred_fallthru
        _
      // Predicated region
      $region37: #{_bottleneck_impl.1} parent=11 // pred_check
        %p243 = pneg %p177
      $region38: #{_bottleneck_impl.1} parent=11 // pred_check_branch
        %245 = sbr.rel (%p243) target = $region40
      $region39: #{_bottleneck_impl.1} parent=11 // pred_region
        _
      $region40: #{_bottleneck_impl.1} parent=11 // pred_fallthru
        _
    $region12: #{_bottleneck_impl.1} parent=5 // pred_fallthru
      _
    %p246 = scmp.lt.s32.totalorder %s13, 2
    // Predicated region
    $region41: #{_bottleneck_impl.1} parent=5 // pred_check
      %p247 = pneg %p246
    $region42: #{_bottleneck_impl.1} parent=5 // pred_check_branch
      %249 = sbr.rel (%p247) target = $region44
    $region43: #{_bottleneck_impl.1} parent=5 // pred_region
      _
    $region44: #{_bottleneck_impl.1} parent=5 // pred_fallthru
      _
    %p250 = scmp.le.s32.totalorder 1, %s13
    %p251 = scmp.lt.s32.totalorder %s13, 3
    %p252 = pnand %p250, %p251
    %p253 = pneg %p252
    // Predicated region
    $region45: #{_bottleneck_impl.1} parent=5 // pred_check
      _
    $region46: #{_bottleneck_impl.1} parent=5 // pred_check_branch
      %255 = sbr.rel (%p252) target = $region48
    $region47: #{_bottleneck_impl.1} parent=5 // pred_region
      %s256 = ssub.s32 %s13, 1
      %p257 = scmp.lt.s32.totalorder %s22, 1
      %s258 = scalar_select %p257, %s22, 1
      %s259 = smul.addr %s258, 4
      %s260 = smul.addr %s259, 8
      %s261 = scalar_lea.vmem %s0, %s260
      %p262 = pneg %p51
      %p263 = pneg %p48
      %p264 = pneg %p72
      %p265 = pneg %p69
      %p266 = pneg %p93
      %p267 = pneg %p90
      %p268 = pneg %p114
      %p269 = pneg %p111
      %p270 = pneg %p135
      %p271 = pneg %p132
      %p272 = pneg %p156
      %p273 = pneg %p153
      %p274 = pneg %p177
      %p275 = pneg %p174
      %p276 = pneg %p205
      %p277 = pneg %p202
      %s278 = smul.u32 2, %s23
      %p279 = scmp.lt.s32.totalorder %s22, 1
      %s280 = scalar_select %p279, %s22, 1
      %p281 = scmp.lt.s32.totalorder %s278, 1
      %s282 = scalar_select %p281, %s278, 1
      %s283 = smul.addr %s280, 2
      %s284 = sadd.s32 %s282, %s283
      %s285 = smul.addr %s284, 8
      %s286 = scalar_lea.vmem %s7, %s285
      %p287 = scmp.lt.s32.totalorder %s22, 1
      %s288 = scalar_select %p287, %s22, 1
      %s289 = smul.addr %s288, 4
      %s290 = smul.addr %s289, 8
      %s291 = scalar_lea.vmem %s0, %s290
      %s292 = smul.u32 2, %s23
      %p293 = scmp.lt.s32.totalorder %s22, 1
      %s294 = scalar_select %p293, %s22, 1
      %p295 = scmp.lt.s32.totalorder %s292, 1
      %s296 = scalar_select %p295, %s292, 1
      %s297 = smul.addr %s294, 2
      %s298 = sadd.s32 %s296, %s297
      %s299 = smul.addr %s298, 8
      %s300 = scalar_lea.vmem %s7, %s299
      %s301 = smul.u32 2, %s23
      %s302 = smul.u32 %s23, 16
      %s303 = scalar_lea.vmem %s291, %s302
      %v304 = vld [vmem:[%s303] sm:$0xff]
      %v305 = vld [vmem:[%s303 + $0x8] sm:$0xff]
      %v306 = vld [vmem:[%s303 + $0x10] sm:$0xff]
      %v307 = vld [vmem:[%s303 + $0x18] sm:$0xff]
      %v308 = vld [vmem:[%s1] sm:$0xff]
      %v309 = vld [vmem:[%s1 + $0x8] sm:$0xff]
      %v310 = vld [vmem:[%s1 + $0x10] sm:$0xff]
      %v311 = vld [vmem:[%s1 + $0x18] sm:$0xff]
      %v312 = vld [vmem:[%s1 + $0x20] sm:$0xff]
      %v313 = vld [vmem:[%s1 + $0x28] sm:$0xff]
      %v314 = vld [vmem:[%s1 + $0x30] sm:$0xff]
      %v315 = vld [vmem:[%s1 + $0x38] sm:$0xff]
      %v316 = vld [vmem:[%s1 + $0x40] sm:$0xff]
      %v317 = vld [vmem:[%s1 + $0x48] sm:$0xff]
      %v318 = vld [vmem:[%s1 + $0x50] sm:$0xff]
      %v319 = vld [vmem:[%s1 + $0x58] sm:$0xff]
      %v320 = vld [vmem:[%s1 + $0x60] sm:$0xff]
      %v321 = vld [vmem:[%s1 + $0x68] sm:$0xff]
      %v322 = vld [vmem:[%s1 + $0x70] sm:$0xff]
      %v323 = vld [vmem:[%s1 + $0x78] sm:$0xff]
      %v324 = vld [vmem:[%s4] sm:$0x1]
      %v326 = vlaneseq
      %v327 = vshrl.u32 %v326, 7
      %v328 = vsub.s32 0, %v327
      %v329 = vrot.slane %v324, %v328
      %331 = vmatprep.subr.mxu0 0.0
      %332 = vmatpush1.msra.mxu0 %v308
      %333 = vmatprep.subr.mxu0 0.0
      %334 = vmatpush1.msra.mxu0 %v309
      %335 = vmatprep.subr.mxu0 0.0
      %336 = vmatpush1.msra.mxu0 %v310
      %337 = vmatprep.subr.mxu0 0.0
      %338 = vmatpush1.msra.mxu0 %v311
      %339 = vmatprep.subr.mxu0 0.0
      %340 = vmatpush1.msra.mxu0 %v312
      %341 = vmatprep.subr.mxu0 0.0
      %342 = vmatpush1.msra.mxu0 %v313
      %343 = vmatprep.subr.mxu0 0.0
      %344 = vmatpush1.msra.mxu0 %v314
      %345 = vmatprep.subr.mxu0 0.0
      %346 = vmatpush1.msra.mxu0 %v315
      %347 = vmatprep.subr.mxu0 0.0
      %348 = vmatpush1.msra.mxu0 %v316
      %349 = vmatprep.subr.mxu0 0.0
      %350 = vmatpush1.msra.mxu0 %v317
      %351 = vmatprep.subr.mxu0 0.0
      %352 = vmatpush1.msra.mxu0 %v318
      %353 = vmatprep.subr.mxu0 0.0
      %354 = vmatpush1.msra.mxu0 %v319
      %355 = vmatprep.subr.mxu0 0.0
      %356 = vmatpush1.msra.mxu0 %v320
      %357 = vmatprep.subr.mxu0 0.0
      %358 = vmatpush1.msra.mxu0 %v321
      %359 = vmatprep.subr.mxu0 0.0
      %360 = vmatpush1.msra.mxu0 %v322
      %361 = vmatprep.subr.mxu0 0.0
      %362 = vmatpush1.msra.mxu0 %v323
      %363 = vmatprep.subr.mxu0 0.0
      %364 = vmatpush1.msra.mxu0 0.0
      %365 = vmatprep.subr.mxu0 0.0
      %366 = vmatpush1.msra.mxu0 0.0
      %367 = vmatprep.subr.mxu0 0.0
      %368 = vmatpush1.msra.mxu0 0.0
      %369 = vmatprep.subr.mxu0 0.0
      %370 = vmatpush1.msra.mxu0 0.0
      %371 = vmatprep.subr.mxu0 0.0
      %372 = vmatpush1.msra.mxu0 0.0
      %373 = vmatprep.subr.mxu0 0.0
      %374 = vmatpush1.msra.mxu0 0.0
      %375 = vmatprep.subr.mxu0 0.0
      %376 = vmatpush1.msra.mxu0 0.0
      %377 = vmatprep.subr.mxu0 0.0
      %378 = vmatpush1.msra.mxu0 0.0
      %379 = vmatprep.subr.mxu0 0.0
      %380 = vmatpush1.msra.mxu0 0.0
      %381 = vmatprep.subr.mxu0 0.0
      %382 = vmatpush1.msra.mxu0 0.0
      %383 = vmatprep.subr.mxu0 0.0
      %384 = vmatpush1.msra.mxu0 0.0
      %385 = vmatprep.subr.mxu0 0.0
      %386 = vmatpush1.msra.mxu0 0.0
      %387 = vmatprep.subr.mxu0 0.0
      %388 = vmatpush1.msra.mxu0 0.0
      %389 = vmatprep.subr.mxu0 0.0
      %390 = vmatpush1.msra.mxu0 0.0
      %391 = vmatprep.subr.mxu0 0.0
      %392 = vmatpush1.msra.mxu0 0.0
      %393 = vmatprep.subr.mxu0 0.0
      %394 = vmatpush1.msra.mxu0 0.0
      %395 = vmatprep.mubr.f32.mxu0 0.0
      %396 = vmatmul.mubr.f32.gmra.mrb[0].mxu0 %v304
      %v397 = vpop.f32.mrb[0].mxu0
      %v398 = vadd.f32 %v329, %v397
      %v399 = vpop.f32.mrb[0].mxu0
      %400 = vmatprep.mubr.f32.mxu0 0.0
      %401 = vmatmul.mubr.f32.gmra.mrb[0].mxu0 %v305
      %v402 = vpop.f32.mrb[0].mxu0
      %v403 = vadd.f32 %v329, %v402
      %v404 = vpop.f32.mrb[0].mxu0
      %405 = vmatprep.mubr.f32.mxu0 0.0
      %406 = vmatmul.mubr.f32.gmra.mrb[0].mxu0 %v306
      %v407 = vpop.f32.mrb[0].mxu0
      %v408 = vadd.f32 %v329, %v407
      %v409 = vpop.f32.mrb[0].mxu0
      %410 = vmatprep.mubr.f32.mxu0 0.0
      %411 = vmatmul.mubr.f32.gmra.mrb[0].mxu0 %v307
      %v412 = vpop.f32.mrb[0].mxu0
      %v413 = vadd.f32 %v329, %v412
      %v414 = vpop.f32.mrb[0].mxu0
      %415 = vdwg.mxu0
      %v416 = vmax.f32 %v398, 0.0
      %v417 = vmax.f32 %v403, 0.0
      %v418 = vmax.f32 %v408, 0.0
      %v419 = vmax.f32 %v413, 0.0
      %v420 = vlaneseq
      %v421 = vshrl.u32 %v420, 7
      %v422 = vadd.s32 %v421, 8
      %v423 = vadd.s32 %v421, 16
      %v424 = vadd.s32 %v421, 24
      %v425 = vstv %s302
      %v426 = vadd.s32 %v425, %v421
      %v427 = vadd.s32 %v425, %v422
      %v428 = vadd.s32 %v425, %v423
      %v429 = vadd.s32 %v425, %v424
      %vm430 = vcmp.ge.s32.totalorder %v426, 8
      %vm431 = vcmp.ge.s32.totalorder %v427, 8
      %vm432 = vcmp.ge.s32.totalorder %v428, 8
      %vm433 = vcmp.ge.s32.totalorder %v429, 8
      %vm434 = vcmp.lt.s32.totalorder %v426, 24
      %vm435 = vcmp.lt.s32.totalorder %v427, 24
      %vm436 = vcmp.lt.s32.totalorder %v428, 24
      %vm437 = vcmp.lt.s32.totalorder %v429, 24
      %vm438 = vmand %vm430, %vm434
      %vm439 = vmand %vm431, %vm435
      %vm440 = vmand %vm432, %vm436
      %vm441 = vmand %vm433, %vm437
      %v442 = vsel %vm438, 1, 0
      %v443 = vsel %vm439, 1, 0
      %v444 = vsel %vm440, 1, 0
      %v445 = vsel %vm441, 1, 0
      %vm446 = vcmp.eq.s32.totalorder %v442, 1
      %vm447 = vcmp.eq.s32.totalorder %v443, 1
      %vm448 = vcmp.eq.s32.totalorder %v444, 1
      %vm449 = vcmp.eq.s32.totalorder %v445, 1
      %v450 = vsel %vm446, %v416, 0.0
      %v451 = vsel %vm447, %v417, 0.0
      %v452 = vsel %vm448, %v418, 0.0
      %v453 = vsel %vm449, %v419, 0.0
      %v454 = vrot.slane %v450, 7
      %v455 = vrot.slane %v451, 7
      %v456 = vrot.slane %v452, 7
      %vm457 = vcmp.lt.s32.totalorder %v421, 1
      %v458 = vsel %vm457, %v455, %v456
      %v459 = vsel %vm457, %v454, %v455
      %v460 = vrot.slane %v451, 1
      %v461 = vrot.slane %v452, 1
      %v462 = vrot.slane %v453, 1
      %vm463 = vcmp.lt.s32.totalorder %v421, 7
      %v464 = vsel %vm463, %v461, %v462
      %v465 = vsel %vm463, %v460, %v461
      %v466 = vld [vmem:[%s2] sm:$0xff]
      %v467 = vld [vmem:[%s2 + $0x8] sm:$0xff]
      %v468 = vld [vmem:[%s2 + $0x10] sm:$0xff]
      %v469 = vld [vmem:[%s2 + $0x18] sm:$0xff]
      %v470 = vld [vmem:[%s2 + $0x20] sm:$0xff]
      %v471 = vld [vmem:[%s2 + $0x28] sm:$0xff]
      %v472 = vld [vmem:[%s2 + $0x30] sm:$0xff]
      %v473 = vld [vmem:[%s2 + $0x38] sm:$0xff]
      %v474 = vld [vmem:[%s2 + $0x40] sm:$0xff]
      %v475 = vld [vmem:[%s2 + $0x48] sm:$0xff]
      %v476 = vld [vmem:[%s2 + $0x50] sm:$0xff]
      %v477 = vld [vmem:[%s2 + $0x58] sm:$0xff]
      %v478 = vld [vmem:[%s2 + $0x60] sm:$0xff]
      %v479 = vld [vmem:[%s2 + $0x68] sm:$0xff]
      %v480 = vld [vmem:[%s2 + $0x70] sm:$0xff]
      %v481 = vld [vmem:[%s2 + $0x78] sm:$0xff]
      %v482 = vld [vmem:[%s2 + $0x80] sm:$0xff]
      %v483 = vld [vmem:[%s2 + $0x88] sm:$0xff]
      %v484 = vld [vmem:[%s2 + $0x90] sm:$0xff]
      %v485 = vld [vmem:[%s2 + $0x98] sm:$0xff]
      %v486 = vld [vmem:[%s2 + $0xa0] sm:$0xff]
      %v487 = vld [vmem:[%s2 + $0xa8] sm:$0xff]
      %v488 = vld [vmem:[%s2 + $0xb0] sm:$0xff]
      %v489 = vld [vmem:[%s2 + $0xb8] sm:$0xff]
      %v490 = vld [vmem:[%s2 + $0xc0] sm:$0xff]
      %v491 = vld [vmem:[%s2 + $0xc8] sm:$0xff]
      %v492 = vld [vmem:[%s2 + $0xd0] sm:$0xff]
      %v493 = vld [vmem:[%s2 + $0xd8] sm:$0xff]
      %v494 = vld [vmem:[%s2 + $0xe0] sm:$0xff]
      %v495 = vld [vmem:[%s2 + $0xe8] sm:$0xff]
      %v496 = vld [vmem:[%s2 + $0xf0] sm:$0xff]
      %v497 = vld [vmem:[%s2 + $0xf8] sm:$0xff]
      %v498 = vld [vmem:[%s2 + $0x100] sm:$0xff]
      %v499 = vld [vmem:[%s2 + $0x108] sm:$0xff]
      %v500 = vld [vmem:[%s2 + $0x110] sm:$0xff]
      %v501 = vld [vmem:[%s2 + $0x118] sm:$0xff]
      %v502 = vld [vmem:[%s2 + $0x120] sm:$0xff]
      %v503 = vld [vmem:[%s2 + $0x128] sm:$0xff]
      %v504 = vld [vmem:[%s2 + $0x130] sm:$0xff]
      %v505 = vld [vmem:[%s2 + $0x138] sm:$0xff]
      %v506 = vld [vmem:[%s2 + $0x140] sm:$0xff]
      %v507 = vld [vmem:[%s2 + $0x148] sm:$0xff]
      %v508 = vld [vmem:[%s2 + $0x150] sm:$0xff]
      %v509 = vld [vmem:[%s2 + $0x158] sm:$0xff]
      %v510 = vld [vmem:[%s2 + $0x160] sm:$0xff]
      %v511 = vld [vmem:[%s2 + $0x168] sm:$0xff]
      %v512 = vld [vmem:[%s2 + $0x170] sm:$0xff]
      %v513 = vld [vmem:[%s2 + $0x178] sm:$0xff]
      %v514 = vld [vmem:[%s5] sm:$0x1]
      %v516 = vlaneseq
      %v517 = vshrl.u32 %v516, 7
      %v518 = vsub.s32 0, %v517
      %v519 = vrot.slane %v514, %v518
      %521 = vmatprep.subr.mxu0 0.0
      %522 = vmatpush1.msra.mxu0 %v466
      %523 = vmatprep.subr.mxu0 0.0
      %524 = vmatpush1.msra.mxu0 %v467
      %525 = vmatprep.subr.mxu0 0.0
      %526 = vmatpush1.msra.mxu0 %v468
      %527 = vmatprep.subr.mxu0 0.0
      %528 = vmatpush1.msra.mxu0 %v469
      %529 = vmatprep.subr.mxu0 0.0
      %530 = vmatpush1.msra.mxu0 %v470
      %531 = vmatprep.subr.mxu0 0.0
      %532 = vmatpush1.msra.mxu0 %v471
      %533 = vmatprep.subr.mxu0 0.0
      %534 = vmatpush1.msra.mxu0 %v472
      %535 = vmatprep.subr.mxu0 0.0
      %536 = vmatpush1.msra.mxu0 %v473
      %537 = vmatprep.subr.mxu0 0.0
      %538 = vmatpush1.msra.mxu0 %v474
      %539 = vmatprep.subr.mxu0 0.0
      %540 = vmatpush1.msra.mxu0 %v475
      %541 = vmatprep.subr.mxu0 0.0
      %542 = vmatpush1.msra.mxu0 %v476
      %543 = vmatprep.subr.mxu0 0.0
      %544 = vmatpush1.msra.mxu0 %v477
      %545 = vmatprep.subr.mxu0 0.0
      %546 = vmatpush1.msra.mxu0 %v478
      %547 = vmatprep.subr.mxu0 0.0
      %548 = vmatpush1.msra.mxu0 %v479
      %549 = vmatprep.subr.mxu0 0.0
      %550 = vmatpush1.msra.mxu0 %v480
      %551 = vmatprep.subr.mxu0 0.0
      %552 = vmatpush1.msra.mxu0 %v481
      %553 = vmatprep.subr.mxu0 0.0
      %554 = vmatpush1.msra.mxu0 %v482
      %555 = vmatprep.subr.mxu0 0.0
      %556 = vmatpush1.msra.mxu0 %v483
      %557 = vmatprep.subr.mxu0 0.0
      %558 = vmatpush1.msra.mxu0 %v484
      %559 = vmatprep.subr.mxu0 0.0
      %560 = vmatpush1.msra.mxu0 %v485
      %561 = vmatprep.subr.mxu0 0.0
      %562 = vmatpush1.msra.mxu0 %v486
      %563 = vmatprep.subr.mxu0 0.0
      %564 = vmatpush1.msra.mxu0 %v487
      %565 = vmatprep.subr.mxu0 0.0
      %566 = vmatpush1.msra.mxu0 %v488
      %567 = vmatprep.subr.mxu0 0.0
      %568 = vmatpush1.msra.mxu0 %v489
      %569 = vmatprep.subr.mxu0 0.0
      %570 = vmatpush1.msra.mxu0 %v490
      %571 = vmatprep.subr.mxu0 0.0
      %572 = vmatpush1.msra.mxu0 %v491
      %573 = vmatprep.subr.mxu0 0.0
      %574 = vmatpush1.msra.mxu0 %v492
      %575 = vmatprep.subr.mxu0 0.0
      %576 = vmatpush1.msra.mxu0 %v493
      %577 = vmatprep.subr.mxu0 0.0
      %578 = vmatpush1.msra.mxu0 %v494
      %579 = vmatprep.subr.mxu0 0.0
      %580 = vmatpush1.msra.mxu0 %v495
      %581 = vmatprep.subr.mxu0 0.0
      %582 = vmatpush1.msra.mxu0 %v496
      %583 = vmatprep.subr.mxu0 0.0
      %584 = vmatpush1.msra.mxu0 %v497
      %585 = vmatprep.mubr.f32.mxu0 %v451
      %586 = vmatmul.mubr.f32.gmra.mrb[0].mxu0 %v459
      %v587 = vpop.f32.mrb[0].mxu0
      %v588 = vadd.f32 %v519, %v587
      %v589 = vpop.f32.mrb[0].mxu0
      %590 = vmatprep.mubr.f32.mxu0 %v452
      %591 = vmatmul.mubr.f32.gmra.mrb[0].mxu0 %v458
      %v592 = vpop.f32.mrb[0].mxu0
      %v593 = vadd.f32 %v519, %v592
      %v594 = vpop.f32.mrb[0].mxu0
      %595 = vdwg.mxu0
      %596 = vmatprep.subr.mxu0 0.0
      %597 = vmatpush1.msra.mxu0 %v498
      %598 = vmatprep.subr.mxu0 0.0
      %599 = vmatpush1.msra.mxu0 %v499
      %600 = vmatprep.subr.mxu0 0.0
      %601 = vmatpush1.msra.mxu0 %v500
      %602 = vmatprep.subr.mxu0 0.0
      %603 = vmatpush1.msra.mxu0 %v501
      %604 = vmatprep.subr.mxu0 0.0
      %605 = vmatpush1.msra.mxu0 %v502
      %606 = vmatprep.subr.mxu0 0.0
      %607 = vmatpush1.msra.mxu0 %v503
      %608 = vmatprep.subr.mxu0 0.0
      %609 = vmatpush1.msra.mxu0 %v504
      %610 = vmatprep.subr.mxu0 0.0
      %611 = vmatpush1.msra.mxu0 %v505
      %612 = vmatprep.subr.mxu0 0.0
      %613 = vmatpush1.msra.mxu0 %v506
      %614 = vmatprep.subr.mxu0 0.0
      %615 = vmatpush1.msra.mxu0 %v507
      %616 = vmatprep.subr.mxu0 0.0
      %617 = vmatpush1.msra.mxu0 %v508
      %618 = vmatprep.subr.mxu0 0.0
      %619 = vmatpush1.msra.mxu0 %v509
      %620 = vmatprep.subr.mxu0 0.0
      %621 = vmatpush1.msra.mxu0 %v510
      %622 = vmatprep.subr.mxu0 0.0
      %623 = vmatpush1.msra.mxu0 %v511
      %624 = vmatprep.subr.mxu0 0.0
      %625 = vmatpush1.msra.mxu0 %v512
      %626 = vmatprep.subr.mxu0 0.0
      %627 = vmatpush1.msra.mxu0 %v513
      %628 = vmatprep.subr.mxu0 0.0
      %629 = vmatpush1.msra.mxu0 0.0
      %630 = vmatprep.subr.mxu0 0.0
      %631 = vmatpush1.msra.mxu0 0.0
      %632 = vmatprep.subr.mxu0 0.0
      %633 = vmatpush1.msra.mxu0 0.0
      %634 = vmatprep.subr.mxu0 0.0
      %635 = vmatpush1.msra.mxu0 0.0
      %636 = vmatprep.subr.mxu0 0.0
      %637 = vmatpush1.msra.mxu0 0.0
      %638 = vmatprep.subr.mxu0 0.0
      %639 = vmatpush1.msra.mxu0 0.0
      %640 = vmatprep.subr.mxu0 0.0
      %641 = vmatpush1.msra.mxu0 0.0
      %642 = vmatprep.subr.mxu0 0.0
      %643 = vmatpush1.msra.mxu0 0.0
      %644 = vmatprep.subr.mxu0 0.0
      %645 = vmatpush1.msra.mxu0 0.0
      %646 = vmatprep.subr.mxu0 0.0
      %647 = vmatpush1.msra.mxu0 0.0
      %648 = vmatprep.subr.mxu0 0.0
      %649 = vmatpush1.msra.mxu0 0.0
      %650 = vmatprep.subr.mxu0 0.0
      %651 = vmatpush1.msra.mxu0 0.0
      %652 = vmatprep.subr.mxu0 0.0
      %653 = vmatpush1.msra.mxu0 0.0
      %654 = vmatprep.subr.mxu0 0.0
      %655 = vmatpush1.msra.mxu0 0.0
      %656 = vmatprep.subr.mxu0 0.0
      %657 = vmatpush1.msra.mxu0 0.0
      %658 = vmatprep.subr.mxu0 0.0
      %659 = vmatpush1.msra.mxu0 0.0
      %660 = vmatprep.mubr.f32.mxu0 0.0
      %661 = vmatmul.mubr.f32.gmra.mrb[0].mxu0 %v465
      %v662 = vpop.f32.mrb[0].mxu0
      %v663 = vadd.f32 %v588, %v662
      %v664 = vpop.f32.mrb[0].mxu0
      %665 = vmatprep.mubr.f32.mxu0 0.0
      %666 = vmatmul.mubr.f32.gmra.mrb[0].mxu0 %v464
      %v667 = vpop.f32.mrb[0].mxu0
      %v668 = vadd.f32 %v593, %v667
      %v669 = vpop.f32.mrb[0].mxu0
      %670 = vdwg.mxu0
      %v671 = vmax.f32 %v663, 0.0
      %v672 = vmax.f32 %v668, 0.0
      %v673 = vld [vmem:[%s3] sm:$0xff]
      %v674 = vld [vmem:[%s3 + $0x8] sm:$0xff]
      %v675 = vld [vmem:[%s3 + $0x10] sm:$0xff]
      %v676 = vld [vmem:[%s3 + $0x18] sm:$0xff]
      %v677 = vld [vmem:[%s3 + $0x20] sm:$0xff]
      %v678 = vld [vmem:[%s3 + $0x28] sm:$0xff]
      %v679 = vld [vmem:[%s3 + $0x30] sm:$0xff]
      %v680 = vld [vmem:[%s3 + $0x38] sm:$0xff]
      %v681 = vld [vmem:[%s3 + $0x40] sm:$0xff]
      %v682 = vld [vmem:[%s3 + $0x48] sm:$0xff]
      %v683 = vld [vmem:[%s3 + $0x50] sm:$0xff]
      %v684 = vld [vmem:[%s3 + $0x58] sm:$0xff]
      %v685 = vld [vmem:[%s3 + $0x60] sm:$0xff]
      %v686 = vld [vmem:[%s3 + $0x68] sm:$0xff]
      %v687 = vld [vmem:[%s3 + $0x70] sm:$0xff]
      %v688 = vld [vmem:[%s3 + $0x78] sm:$0xff]
      %v689 = vld [vmem:[%s6] sm:$0x1]
      %v691 = vlaneseq
      %v692 = vshrl.u32 %v691, 7
      %v693 = vsub.s32 0, %v692
      %v694 = vrot.slane %v689, %v693
      %696 = vmatprep.subr.mxu0 0.0
      %697 = vmatpush1.msra.mxu0 %v673
      %698 = vmatprep.subr.mxu0 0.0
      %699 = vmatpush1.msra.mxu0 %v674
      %700 = vmatprep.subr.mxu0 0.0
      %701 = vmatpush1.msra.mxu0 %v675
      %702 = vmatprep.subr.mxu0 0.0
      %703 = vmatpush1.msra.mxu0 %v676
      %704 = vmatprep.subr.mxu0 0.0
      %705 = vmatpush1.msra.mxu0 %v677
      %706 = vmatprep.subr.mxu0 0.0
      %707 = vmatpush1.msra.mxu0 %v678
      %708 = vmatprep.subr.mxu0 0.0
      %709 = vmatpush1.msra.mxu0 %v679
      %710 = vmatprep.subr.mxu0 0.0
      %711 = vmatpush1.msra.mxu0 %v680
      %712 = vmatprep.subr.mxu0 0.0
      %713 = vmatpush1.msra.mxu0 %v681
      %714 = vmatprep.subr.mxu0 0.0
      %715 = vmatpush1.msra.mxu0 %v682
      %716 = vmatprep.subr.mxu0 0.0
      %717 = vmatpush1.msra.mxu0 %v683
      %718 = vmatprep.subr.mxu0 0.0
      %719 = vmatpush1.msra.mxu0 %v684
      %720 = vmatprep.subr.mxu0 0.0
      %721 = vmatpush1.msra.mxu0 %v685
      %722 = vmatprep.subr.mxu0 0.0
      %723 = vmatpush1.msra.mxu0 %v686
      %724 = vmatprep.subr.mxu0 0.0
      %725 = vmatpush1.msra.mxu0 %v687
      %726 = vmatprep.subr.mxu0 0.0
      %727 = vmatpush1.msra.mxu0 %v688
      %728 = vmatprep.subr.mxu0 0.0
      %729 = vmatpush1.msra.mxu0 0.0
      %730 = vmatprep.subr.mxu0 0.0
      %731 = vmatpush1.msra.mxu0 0.0
      %732 = vmatprep.subr.mxu0 0.0
      %733 = vmatpush1.msra.mxu0 0.0
      %734 = vmatprep.subr.mxu0 0.0
      %735 = vmatpush1.msra.mxu0 0.0
      %736 = vmatprep.subr.mxu0 0.0
      %737 = vmatpush1.msra.mxu0 0.0
      %738 = vmatprep.subr.mxu0 0.0
      %739 = vmatpush1.msra.mxu0 0.0
      %740 = vmatprep.subr.mxu0 0.0
      %741 = vmatpush1.msra.mxu0 0.0
      %742 = vmatprep.subr.mxu0 0.0
      %743 = vmatpush1.msra.mxu0 0.0
      %744 = vmatprep.subr.mxu0 0.0
      %745 = vmatpush1.msra.mxu0 0.0
      %746 = vmatprep.subr.mxu0 0.0
      %747 = vmatpush1.msra.mxu0 0.0
      %748 = vmatprep.subr.mxu0 0.0
      %749 = vmatpush1.msra.mxu0 0.0
      %750 = vmatprep.subr.mxu0 0.0
      %751 = vmatpush1.msra.mxu0 0.0
      %752 = vmatprep.subr.mxu0 0.0
      %753 = vmatpush1.msra.mxu0 0.0
      %754 = vmatprep.subr.mxu0 0.0
      %755 = vmatpush1.msra.mxu0 0.0
      %756 = vmatprep.subr.mxu0 0.0
      %757 = vmatpush1.msra.mxu0 0.0
      %758 = vmatprep.subr.mxu0 0.0
      %759 = vmatpush1.msra.mxu0 0.0
      %760 = vmatprep.mubr.f32.mxu0 0.0
      %761 = vmatmul.mubr.f32.gmra.mrb[0].mxu0 %v671
      %v762 = vpop.f32.mrb[0].mxu0
      %v763 = vadd.f32 %v694, %v762
      %v764 = vpop.f32.mrb[0].mxu0
      %765 = vmatprep.mubr.f32.mxu0 0.0
      %766 = vmatmul.mubr.f32.gmra.mrb[0].mxu0 %v672
      %v767 = vpop.f32.mrb[0].mxu0
      %v768 = vadd.f32 %v694, %v767
      %v769 = vpop.f32.mrb[0].mxu0
      %770 = vdwg.mxu0
      %s771 = sadd.s32 %s302, 8
      %s772 = scalar_lea.vmem %s291, %s771
      %v773 = vld [vmem:[%s772] sm:$0xff]
      %v774 = vld [vmem:[%s772 + $0x8] sm:$0xff]
      %v775 = vadd.f32 %v763, %v773
      %v776 = vadd.f32 %v768, %v774
      %v777 = vmax.f32 %v775, 0.0
      %v778 = vmax.f32 %v776, 0.0
      %779 = vst [vmem:[%s300] sm:$0xff] %v777
      %780 = vst [vmem:[%s300 + $0x8] sm:$0xff] %v778
      %s781 = smul.u32 2, %s23
      %p782 = scmp.lt.s32.totalorder %s22, 1
      %s783 = scalar_select %p782, %s22, 1
      %p784 = scmp.lt.s32.totalorder %s781, 1
      %s785 = scalar_select %p784, %s781, 1
      %s786 = smul.addr %s783, 2
      %s787 = sadd.s32 %s785, %s786
      %s788 = smul.addr %s787, 8
      %s789 = scalar_lea.vmem %s7, %s788
      // Predicated region
      $region49: #{_bottleneck_impl.1} parent=47 // pred_check
        %p790 = pneg %p202
      $region50: #{_bottleneck_impl.1} parent=47 // pred_check_branch
        %792 = sbr.rel (%p790) target = $region52
      $region51: #{_bottleneck_impl.1} parent=47 // pred_region
        %s793 = smul.u32 2, %s23
      $region52: #{_bottleneck_impl.1} parent=47 // pred_fallthru
        _
    $region48: #{_bottleneck_impl.1} parent=5 // pred_fallthru
      _
    %p794 = scmp.le.s32.totalorder 2, %s13
    // Predicated region
    $region53: #{_bottleneck_impl.1} parent=5 // pred_check
      %p795 = pneg %p794
    $region54: #{_bottleneck_impl.1} parent=5 // pred_check_branch
      %797 = sbr.rel (%p795) target = $region56
    $region55: #{_bottleneck_impl.1} parent=5 // pred_region
      %s798 = ssub.s32 %s13, 2
      // Predicated region
      $region57: #{_bottleneck_impl.1} parent=55 // pred_check
        %p799 = pneg %p208
      $region58: #{_bottleneck_impl.1} parent=55 // pred_check_branch
        %801 = sbr.rel (%p799) target = $region60
      $region59: #{_bottleneck_impl.1} parent=55 // pred_region
        %s802 = smul.u32 2, %s25
        %p803 = scmp.lt.s32.totalorder %s24, 1
        %s804 = scalar_select %p803, %s24, 1
        %p805 = scmp.lt.s32.totalorder %s802, 1
        %s806 = scalar_select %p805, %s802, 1
        %s807 = smul.addr %s804, 2
        %s808 = sadd.s32 %s806, %s807
        %s809 = smul.addr %s808, 8
        %s810 = scalar_lea.vmem %s7, %s809
      $region60: #{_bottleneck_impl.1} parent=55 // pred_fallthru
        _
    $region56: #{_bottleneck_impl.1} parent=5 // pred_fallthru
      _
  $region6: #{_bottleneck_impl.1} parent=0 // loop_footer
    %s17 = sadd.s32 1, %s13
  $region7: #{_bottleneck_impl.1} parent=0 // loop_footer_branch
    %12 = sbr.rel target = $region3
  $region8: #{_bottleneck_impl.1} parent=0 // loop_exit
    _

// kernel: _bottleneck_impl.1
$region0: #{_bottleneck_impl.1}
  #allocation0 [shape = 'u32[]', space=smem, size = 0x4, offset = 0x4, fixed_abs, tag = 'smem constant byte address 0x4 - core index']
  #allocation1 [shape = 'u32[144,128]{1,0:T(1,128)}', space=vmem, size = 0x12000, scoped, tag = 'internal scratch']
  %s0 = inlined_call_operand.vmem [shape: f32[2,32,128], index: 0, kind: input, shape index: {}]
  %s1 = inlined_call_operand.vmem [shape: f32[128,128], index: 1, kind: input, shape index: {}]
  %s2 = inlined_call_operand.vmem [shape: f32[384,128], index: 2, kind: input, shape index: {}]
  %s3 = inlined_call_operand.vmem [shape: f32[128,128], index: 3, kind: input, shape index: {}]
  %s4 = inlined_call_operand.vmem [shape: f32[1,128], index: 4, kind: input, shape index: {}]
  %s5 = inlined_call_operand.vmem [shape: f32[1,128], index: 5, kind: input, shape index: {}]
  %s6 = inlined_call_operand.vmem [shape: f32[1,128], index: 6, kind: input, shape index: {}]
  %s7 = inlined_call_operand.vmem [shape: f32[2,16,128], index: 7, kind: output, shape index: {}]
  %s8 = sld [smem:[#allocation0]]
  $region61: #{_bottleneck_impl.1} parent=0
    _
  %s10 = ssub.s32 1, %s8
  %s11 = scalar_select 0, %s10, %s8
  loop: start=0, step=1, limit=4
  $region2: #{_bottleneck_impl.1} parent=0 // loop_pre_header
    _
  $region3: #{_bottleneck_impl.1} parent=0 // loop_header
    %s13 = sphi 0, %s17
    %p14 = scmp.ge.s32.totalorder %s13, 4
    %s20 = sphi 0, %s32
    %s21 = sphi 0, %s28
    %s22 = sphi 0, %s20
    %s23 = sphi 0, %s21
    %s24 = sphi 0, %s22
    %s25 = sphi 0, %s23
    %s35 = sphi 0, %s37
    %s38 = sphi 0, %s35
    %s39 = sphi 0, %s38
    %s55 = sphi 0, %s39
    %s59 = sphi 0, %s59
    %s61 = sphi 0, %s59
    %s62 = sphi 0, %s61
    %s76 = sphi 0, %s62
    %s80 = sphi 0, %s80
    %s82 = sphi 0, %s80
    %s83 = sphi 0, %s82
    %s97 = sphi 0, %s83
    %s101 = sphi 0, %s101
    %s103 = sphi 0, %s101
    %s104 = sphi 0, %s103
    %s118 = sphi 0, %s104
    %s122 = sphi 0, %s122
    %s124 = sphi 0, %s122
    %s125 = sphi 0, %s124
    %s139 = sphi 0, %s125
    %s143 = sphi 0, %s143
    %s145 = sphi 0, %s143
    %s146 = sphi 0, %s145
    %s160 = sphi 0, %s146
    %s164 = sphi 0, %s164
    %s166 = sphi 0, %s164
    %s167 = sphi 0, %s166
    %s181 = sphi 0, %s167
    %s189 = sphi 0, %s191
    %s192 = sphi 0, %s189
    %s193 = sphi 0, %s192
    %s209 = sphi 0, %s193
  $region4: #{_bottleneck_impl.1} parent=0 // loop_header_branch
    %16 = sbr.rel (%p14) target = $region8
  $region5: #{_bottleneck_impl.1} parent=0 // loop_body
    %s18 = ssub.s32 %s13, 1
    %s19 = ssub.s32 %s13, 2
    %s26 = sadd.s32 1, %s21
    %p27 = scmp.ge.s32.totalorder %s26, 1
    %s28 = scalar_select %p27, 0, %s26
    %s29 = sadd.s32 1, %s20
    %s30 = scalar_select %p27, %s29, %s20
    %p31 = scmp.ge.s32.totalorder %s30, 2
    %s32 = scalar_select %p31, 0, %s30
    %s33 = ssub.s32 %s20, %s32
    %p34 = scmp.eq.s32.totalorder %s33, 0
    %s36 = sadd.s32 %s35, 1
    %s37 = scalar_select %p34, %s35, %s36
    %p40 = pneg %p34
    %p41 = scmp.eq.s32.totalorder %s13, 1
    %p42 = por %p40, %p41
    %p43 = scmp.ne.s32.totalorder %s35, %s38
    %p44 = scmp.eq.s32.totalorder %s13, 0
    %p45 = por %p43, %p44
    %p46 = scmp.ne.s32.totalorder %s35, %s38
    %p47 = scmp.eq.s32.totalorder %s18, 1
    %p48 = por %p46, %p47
    %p49 = scmp.ne.s32.totalorder %s38, %s39
    %p50 = scmp.eq.s32.totalorder %s18, 0
    %p51 = por %p49, %p50
    %p52 = scmp.ne.s32.totalorder %s38, %s39
    %p53 = scmp.eq.s32.totalorder %s19, 1
    %p54 = por %p52, %p53
    %p56 = scmp.ne.s32.totalorder %s39, %s55
    %p57 = scmp.eq.s32.totalorder %s19, 0
    %p58 = por %p56, %p57
    %s60 = sadd.s32 %s59, 1
    %p63 = scmp.eq.s32.totalorder %s13, 1
    %p64 = scmp.ne.s32.totalorder %s59, %s61
    %p65 = scmp.eq.s32.totalorder %s13, 0
    %p66 = por %p64, %p65
    %p67 = scmp.ne.s32.totalorder %s59, %s61
    %p68 = scmp.eq.s32.totalorder %s18, 1
    %p69 = por %p67, %p68
    %p70 = scmp.ne.s32.totalorder %s61, %s62
    %p71 = scmp.eq.s32.totalorder %s18, 0
    %p72 = por %p70, %p71
    %p73 = scmp.ne.s32.totalorder %s61, %s62
    %p74 = scmp.eq.s32.totalorder %s19, 1
    %p75 = por %p73, %p74
    %p77 = scmp.ne.s32.totalorder %s62, %s76
    %p78 = scmp.eq.s32.totalorder %s19, 0
    %p79 = por %p77, %p78
    %s81 = sadd.s32 %s80, 1
    %p84 = scmp.eq.s32.totalorder %s13, 1
    %p85 = scmp.ne.s32.totalorder %s80, %s82
    %p86 = scmp.eq.s32.totalorder %s13, 0
    %p87 = por %p85, %p86
    %p88 = scmp.ne.s32.totalorder %s80, %s82
    %p89 = scmp.eq.s32.totalorder %s18, 1
    %p90 = por %p88, %p89
    %p91 = scmp.ne.s32.totalorder %s82, %s83
    %p92 = scmp.eq.s32.totalorder %s18, 0
    %p93 = por %p91, %p92
    %p94 = scmp.ne.s32.totalorder %s82, %s83
    %p95 = scmp.eq.s32.totalorder %s19, 1
    %p96 = por %p94, %p95
    %p98 = scmp.ne.s32.totalorder %s83, %s97
    %p99 = scmp.eq.s32.totalorder %s19, 0
    %p100 = por %p98, %p99
    %s102 = sadd.s32 %s101, 1
    %p105 = scmp.eq.s32.totalorder %s13, 1
    %p106 = scmp.ne.s32.totalorder %s101, %s103
    %p107 = scmp.eq.s32.totalorder %s13, 0
    %p108 = por %p106, %p107
    %p109 = scmp.ne.s32.totalorder %s101, %s103
    %p110 = scmp.eq.s32.totalorder %s18, 1
    %p111 = por %p109, %p110
    %p112 = scmp.ne.s32.totalorder %s103, %s104
    %p113 = scmp.eq.s32.totalorder %s18, 0
    %p114 = por %p112, %p113
    %p115 = scmp.ne.s32.totalorder %s103, %s104
    %p116 = scmp.eq.s32.totalorder %s19, 1
    %p117 = por %p115, %p116
    %p119 = scmp.ne.s32.totalorder %s104, %s118
    %p120 = scmp.eq.s32.totalorder %s19, 0
    %p121 = por %p119, %p120
    %s123 = sadd.s32 %s122, 1
    %p126 = scmp.eq.s32.totalorder %s13, 1
    %p127 = scmp.ne.s32.totalorder %s122, %s124
    %p128 = scmp.eq.s32.totalorder %s13, 0
    %p129 = por %p127, %p128
    %p130 = scmp.ne.s32.totalorder %s122, %s124
    %p131 = scmp.eq.s32.totalorder %s18, 1
    %p132 = por %p130, %p131
    %p133 = scmp.ne.s32.totalorder %s124, %s125
    %p134 = scmp.eq.s32.totalorder %s18, 0
    %p135 = por %p133, %p134
    %p136 = scmp.ne.s32.totalorder %s124, %s125
    %p137 = scmp.eq.s32.totalorder %s19, 1
    %p138 = por %p136, %p137
    %p140 = scmp.ne.s32.totalorder %s125, %s139
    %p141 = scmp.eq.s32.totalorder %s19, 0
    %p142 = por %p140, %p141
    %s144 = sadd.s32 %s143, 1
    %p147 = scmp.eq.s32.totalorder %s13, 1
    %p148 = scmp.ne.s32.totalorder %s143, %s145
    %p149 = scmp.eq.s32.totalorder %s13, 0
    %p150 = por %p148, %p149
    %p151 = scmp.ne.s32.totalorder %s143, %s145
    %p152 = scmp.eq.s32.totalorder %s18, 1
    %p153 = por %p151, %p152
    %p154 = scmp.ne.s32.totalorder %s145, %s146
    %p155 = scmp.eq.s32.totalorder %s18, 0
    %p156 = por %p154, %p155
    %p157 = scmp.ne.s32.totalorder %s145, %s146
    %p158 = scmp.eq.s32.totalorder %s19, 1
    %p159 = por %p157, %p158
    %p161 = scmp.ne.s32.totalorder %s146, %s160
    %p162 = scmp.eq.s32.totalorder %s19, 0
    %p163 = por %p161, %p162
    %s165 = sadd.s32 %s164, 1
    %p168 = scmp.eq.s32.totalorder %s13, 1
    %p169 = scmp.ne.s32.totalorder %s164, %s166
    %p170 = scmp.eq.s32.totalorder %s13, 0
    %p171 = por %p169, %p170
    %p172 = scmp.ne.s32.totalorder %s164, %s166
    %p173 = scmp.eq.s32.totalorder %s18, 1
    %p174 = por %p172, %p173
    %p175 = scmp.ne.s32.totalorder %s166, %s167
    %p176 = scmp.eq.s32.totalorder %s18, 0
    %p177 = por %p175, %p176
    %p178 = scmp.ne.s32.totalorder %s166, %s167
    %p179 = scmp.eq.s32.totalorder %s19, 1
    %p180 = por %p178, %p179
    %p182 = scmp.ne.s32.totalorder %s167, %s181
    %p183 = scmp.eq.s32.totalorder %s19, 0
    %p184 = por %p182, %p183
    %s185 = ssub.s32 %s20, %s32
    %s186 = ssub.s32 %s21, %s28
    %s187 = sor.u32 %s185, %s186
    %p188 = scmp.eq.s32.totalorder %s187, 0
    %s190 = sadd.s32 %s189, 1
    %s191 = scalar_select %p188, %s189, %s190
    %p194 = pneg %p188
    %p195 = scmp.eq.s32.totalorder %s13, 1
    %p196 = por %p194, %p195
    %p197 = scmp.ne.s32.totalorder %s189, %s192
    %p198 = scmp.eq.s32.totalorder %s13, 0
    %p199 = por %p197, %p198
    %p200 = scmp.ne.s32.totalorder %s189, %s192
    %p201 = scmp.eq.s32.totalorder %s18, 1
    %p202 = por %p200, %p201
    %p203 = scmp.ne.s32.totalorder %s192, %s193
    %p204 = scmp.eq.s32.totalorder %s18, 0
    %p205 = por %p203, %p204
    %p206 = scmp.ne.s32.totalorder %s192, %s193
    %p207 = scmp.eq.s32.totalorder %s19, 1
    %p208 = por %p206, %p207
    %p210 = scmp.ne.s32.totalorder %s193, %s209
    %p211 = scmp.eq.s32.totalorder %s19, 0
    %p212 = por %p210, %p211
    %p213 = scmp.le.s32.totalorder 1, %s13
    %p214 = scmp.lt.s32.totalorder %s13, 3
    %p215 = pnand %p213, %p214
    %p216 = pneg %p215
    // Predicated region
    $region9: #{_bottleneck_impl.1} parent=5 // pred_check
      _
    $region10: #{_bottleneck_impl.1} parent=5 // pred_check_branch
      %218 = sbr.rel (%p215) target = $region12
    $region11: #{_bottleneck_impl.1} parent=5 // pred_region
      %s219 = ssub.s32 %s13, 1
      // Predicated region
      $region13: #{_bottleneck_impl.1} parent=11 // pred_check
        %p220 = pneg %p72
      $region14: #{_bottleneck_impl.1} parent=11 // pred_check_branch
        %222 = sbr.rel (%p220) target = $region16
      $region15: #{_bottleneck_impl.1} parent=11 // pred_region
        _
      $region16: #{_bottleneck_impl.1} parent=11 // pred_fallthru
        _
      // Predicated region
      $region17: #{_bottleneck_impl.1} parent=11 // pred_check
        %p223 = pneg %p93
      $region18: #{_bottleneck_impl.1} parent=11 // pred_check_branch
        %225 = sbr.rel (%p223) target = $region20
      $region19: #{_bottleneck_impl.1} parent=11 // pred_region
        _
      $region20: #{_bottleneck_impl.1} parent=11 // pred_fallthru
        _
      // Predicated region
      $region21: #{_bottleneck_impl.1} parent=11 // pred_check
        %p226 = pneg %p114
      $region22: #{_bottleneck_impl.1} parent=11 // pred_check_branch
        %228 = sbr.rel (%p226) target = $region24
      $region23: #{_bottleneck_impl.1} parent=11 // pred_region
        _
      $region24: #{_bottleneck_impl.1} parent=11 // pred_fallthru
        _
      // Predicated region
      $region25: #{_bottleneck_impl.1} parent=11 // pred_check
        %p229 = pneg %p135
      $region26: #{_bottleneck_impl.1} parent=11 // pred_check_branch
        %231 = sbr.rel (%p229) target = $region28
      $region27: #{_bottleneck_impl.1} parent=11 // pred_region
        _
      $region28: #{_bottleneck_impl.1} parent=11 // pred_fallthru
        _
      // Predicated region
      $region29: #{_bottleneck_impl.1} parent=11 // pred_check
        %p232 = pneg %p156
      $region30: #{_bottleneck_impl.1} parent=11 // pred_check_branch
        %234 = sbr.rel (%p232) target = $region32
      $region31: #{_bottleneck_impl.1} parent=11 // pred_region
        _
      $region32: #{_bottleneck_impl.1} parent=11 // pred_fallthru
        _
      // Predicated region
      $region33: #{_bottleneck_impl.1} parent=11 // pred_check
        %p235 = pneg %p177
      $region34: #{_bottleneck_impl.1} parent=11 // pred_check_branch
        %237 = sbr.rel (%p235) target = $region36
      $region35: #{_bottleneck_impl.1} parent=11 // pred_region
        _
      $region36: #{_bottleneck_impl.1} parent=11 // pred_fallthru
        _
    $region12: #{_bottleneck_impl.1} parent=5 // pred_fallthru
      _
    %p238 = scmp.lt.s32.totalorder %s13, 2
    // Predicated region
    $region37: #{_bottleneck_impl.1} parent=5 // pred_check
      %p239 = pneg %p238
    $region38: #{_bottleneck_impl.1} parent=5 // pred_check_branch
      %241 = sbr.rel (%p239) target = $region40
    $region39: #{_bottleneck_impl.1} parent=5 // pred_region
      // Predicated region
      $region41: #{_bottleneck_impl.1} parent=39 // pred_check
        %p242 = pneg %p45
      $region42: #{_bottleneck_impl.1} parent=39 // pred_check_branch
        %244 = sbr.rel (%p242) target = $region44
      $region43: #{_bottleneck_impl.1} parent=39 // pred_region
        %p245 = scmp.lt.s32.totalorder %s20, 1
        %s246 = scalar_select %p245, %s20, 1
        %s247 = smul.addr %s246, 4
        %s248 = smul.addr %s247, 8
        %s249 = scalar_lea.vmem %s0, %s248
      $region44: #{_bottleneck_impl.1} parent=39 // pred_fallthru
        _
    $region40: #{_bottleneck_impl.1} parent=5 // pred_fallthru
      _
    %p250 = scmp.le.s32.totalorder 1, %s13
    %p251 = scmp.lt.s32.totalorder %s13, 3
    %p252 = pnand %p250, %p251
    %p253 = pneg %p252
    // Predicated region
    $region45: #{_bottleneck_impl.1} parent=5 // pred_check
      _
    $region46: #{_bottleneck_impl.1} parent=5 // pred_check_branch
      %255 = sbr.rel (%p252) target = $region48
    $region47: #{_bottleneck_impl.1} parent=5 // pred_region
      %s256 = ssub.s32 %s13, 1
      %p257 = scmp.lt.s32.totalorder %s22, 1
      %s258 = scalar_select %p257, %s22, 1
      %s259 = smul.addr %s258, 4
      %s260 = smul.addr %s259, 8
      %s261 = scalar_lea.vmem %s0, %s260
      %p262 = pneg %p51
      %p263 = pneg %p48
      %p264 = pneg %p72
      %p265 = pneg %p69
      %p266 = pneg %p93
      %p267 = pneg %p90
      %p268 = pneg %p114
      %p269 = pneg %p111
      %p270 = pneg %p135
      %p271 = pneg %p132
      %p272 = pneg %p156
      %p273 = pneg %p153
      %p274 = pneg %p177
      %p275 = pneg %p174
      %p276 = pneg %p205
      %p277 = pneg %p202
      %s278 = smul.u32 2, %s23
      %p279 = scmp.lt.s32.totalorder %s22, 1
      %s280 = scalar_select %p279, %s22, 1
      %p281 = scmp.lt.s32.totalorder %s278, 1
      %s282 = scalar_select %p281, %s278, 1
      %s283 = smul.addr %s280, 2
      %s284 = sadd.s32 %s282, %s283
      %s285 = smul.addr %s284, 8
      %s286 = scalar_lea.vmem %s7, %s285
      %p287 = scmp.lt.s32.totalorder %s22, 1
      %s288 = scalar_select %p287, %s22, 1
      %s289 = smul.addr %s288, 4
      %s290 = smul.addr %s289, 8
      %s291 = scalar_lea.vmem %s0, %s290
      %s292 = smul.u32 2, %s23
      %p293 = scmp.lt.s32.totalorder %s22, 1
      %s294 = scalar_select %p293, %s22, 1
      %p295 = scmp.lt.s32.totalorder %s292, 1
      %s296 = scalar_select %p295, %s292, 1
      %s297 = smul.addr %s294, 2
      %s298 = sadd.s32 %s296, %s297
      %s299 = smul.addr %s298, 8
      %s300 = scalar_lea.vmem %s7, %s299
      %s301 = smul.u32 2, %s23
      %s302 = smul.u32 %s23, 16
      %s303 = scalar_lea.vmem %s291, %s302
      %v304 = vld [vmem:[%s303] sm:$0xff]
      %v305 = vld [vmem:[%s303 + $0x8] sm:$0xff]
      %v306 = vld [vmem:[%s303 + $0x10] sm:$0xff]
      %v307 = vld [vmem:[%s303 + $0x18] sm:$0xff]
      %v308 = vld [vmem:[%s1] sm:$0xff]
      %v309 = vld [vmem:[%s1 + $0x8] sm:$0xff]
      %v310 = vld [vmem:[%s1 + $0x10] sm:$0xff]
      %v311 = vld [vmem:[%s1 + $0x18] sm:$0xff]
      %v312 = vld [vmem:[%s1 + $0x20] sm:$0xff]
      %v313 = vld [vmem:[%s1 + $0x28] sm:$0xff]
      %v314 = vld [vmem:[%s1 + $0x30] sm:$0xff]
      %v315 = vld [vmem:[%s1 + $0x38] sm:$0xff]
      %v316 = vld [vmem:[%s1 + $0x40] sm:$0xff]
      %v317 = vld [vmem:[%s1 + $0x48] sm:$0xff]
      %v318 = vld [vmem:[%s1 + $0x50] sm:$0xff]
      %v319 = vld [vmem:[%s1 + $0x58] sm:$0xff]
      %v320 = vld [vmem:[%s1 + $0x60] sm:$0xff]
      %v321 = vld [vmem:[%s1 + $0x68] sm:$0xff]
      %v322 = vld [vmem:[%s1 + $0x70] sm:$0xff]
      %v323 = vld [vmem:[%s1 + $0x78] sm:$0xff]
      %v324 = vld [vmem:[%s4] sm:$0x1]
      %v326 = vlaneseq
      %v327 = vshrl.u32 %v326, 7
      %v328 = vsub.s32 0, %v327
      %v329 = vrot.slane %v324, %v328
      %331 = vmatprep.subr.mxu0 0.0
      %332 = vmatpush1.msra.mxu0 %v308
      %333 = vmatprep.subr.mxu0 0.0
      %334 = vmatpush1.msra.mxu0 %v309
      %335 = vmatprep.subr.mxu0 0.0
      %336 = vmatpush1.msra.mxu0 %v310
      %337 = vmatprep.subr.mxu0 0.0
      %338 = vmatpush1.msra.mxu0 %v311
      %339 = vmatprep.subr.mxu0 0.0
      %340 = vmatpush1.msra.mxu0 %v312
      %341 = vmatprep.subr.mxu0 0.0
      %342 = vmatpush1.msra.mxu0 %v313
      %343 = vmatprep.subr.mxu0 0.0
      %344 = vmatpush1.msra.mxu0 %v314
      %345 = vmatprep.subr.mxu0 0.0
      %346 = vmatpush1.msra.mxu0 %v315
      %347 = vmatprep.subr.mxu0 0.0
      %348 = vmatpush1.msra.mxu0 %v316
      %349 = vmatprep.subr.mxu0 0.0
      %350 = vmatpush1.msra.mxu0 %v317
      %351 = vmatprep.subr.mxu0 0.0
      %352 = vmatpush1.msra.mxu0 %v318
      %353 = vmatprep.subr.mxu0 0.0
      %354 = vmatpush1.msra.mxu0 %v319
      %355 = vmatprep.subr.mxu0 0.0
      %356 = vmatpush1.msra.mxu0 %v320
      %357 = vmatprep.subr.mxu0 0.0
      %358 = vmatpush1.msra.mxu0 %v321
      %359 = vmatprep.subr.mxu0 0.0
      %360 = vmatpush1.msra.mxu0 %v322
      %361 = vmatprep.subr.mxu0 0.0
      %362 = vmatpush1.msra.mxu0 %v323
      %363 = vmatprep.subr.mxu0 0.0
      %364 = vmatpush1.msra.mxu0 0.0
      %365 = vmatprep.subr.mxu0 0.0
      %366 = vmatpush1.msra.mxu0 0.0
      %367 = vmatprep.subr.mxu0 0.0
      %368 = vmatpush1.msra.mxu0 0.0
      %369 = vmatprep.subr.mxu0 0.0
      %370 = vmatpush1.msra.mxu0 0.0
      %371 = vmatprep.subr.mxu0 0.0
      %372 = vmatpush1.msra.mxu0 0.0
      %373 = vmatprep.subr.mxu0 0.0
      %374 = vmatpush1.msra.mxu0 0.0
      %375 = vmatprep.subr.mxu0 0.0
      %376 = vmatpush1.msra.mxu0 0.0
      %377 = vmatprep.subr.mxu0 0.0
      %378 = vmatpush1.msra.mxu0 0.0
      %379 = vmatprep.subr.mxu0 0.0
      %380 = vmatpush1.msra.mxu0 0.0
      %381 = vmatprep.subr.mxu0 0.0
      %382 = vmatpush1.msra.mxu0 0.0
      %383 = vmatprep.subr.mxu0 0.0
      %384 = vmatpush1.msra.mxu0 0.0
      %385 = vmatprep.subr.mxu0 0.0
      %386 = vmatpush1.msra.mxu0 0.0
      %387 = vmatprep.subr.mxu0 0.0
      %388 = vmatpush1.msra.mxu0 0.0
      %389 = vmatprep.subr.mxu0 0.0
      %390 = vmatpush1.msra.mxu0 0.0
      %391 = vmatprep.subr.mxu0 0.0
      %392 = vmatpush1.msra.mxu0 0.0
      %393 = vmatprep.subr.mxu0 0.0
      %394 = vmatpush1.msra.mxu0 0.0
      %395 = vmatprep.mubr.f32.mxu0 0.0
      %396 = vmatmul.mubr.f32.gmra.mrb[0].mxu0 %v304
      %v397 = vpop.f32.mrb[0].mxu0
      %v398 = vadd.f32 %v329, %v397
      %v399 = vpop.f32.mrb[0].mxu0
      %400 = vmatprep.mubr.f32.mxu0 0.0
      %401 = vmatmul.mubr.f32.gmra.mrb[0].mxu0 %v305
      %v402 = vpop.f32.mrb[0].mxu0
      %v403 = vadd.f32 %v329, %v402
      %v404 = vpop.f32.mrb[0].mxu0
      %405 = vmatprep.mubr.f32.mxu0 0.0
      %406 = vmatmul.mubr.f32.gmra.mrb[0].mxu0 %v306
      %v407 = vpop.f32.mrb[0].mxu0
      %v408 = vadd.f32 %v329, %v407
      %v409 = vpop.f32.mrb[0].mxu0
      %410 = vmatprep.mubr.f32.mxu0 0.0
      %411 = vmatmul.mubr.f32.gmra.mrb[0].mxu0 %v307
      %v412 = vpop.f32.mrb[0].mxu0
      %v413 = vadd.f32 %v329, %v412
      %v414 = vpop.f32.mrb[0].mxu0
      %415 = vdwg.mxu0
      %v416 = vmax.f32 %v398, 0.0
      %v417 = vmax.f32 %v403, 0.0
      %v418 = vmax.f32 %v408, 0.0
      %v419 = vmax.f32 %v413, 0.0
      %v420 = vlaneseq
      %v421 = vshrl.u32 %v420, 7
      %v422 = vadd.s32 %v421, 8
      %v423 = vadd.s32 %v421, 16
      %v424 = vadd.s32 %v421, 24
      %v425 = vstv %s302
      %v426 = vadd.s32 %v425, %v421
      %v427 = vadd.s32 %v425, %v422
      %v428 = vadd.s32 %v425, %v423
      %v429 = vadd.s32 %v425, %v424
      %vm430 = vcmp.ge.s32.totalorder %v426, 8
      %vm431 = vcmp.ge.s32.totalorder %v427, 8
      %vm432 = vcmp.ge.s32.totalorder %v428, 8
      %vm433 = vcmp.ge.s32.totalorder %v429, 8
      %vm434 = vcmp.lt.s32.totalorder %v426, 24
      %vm435 = vcmp.lt.s32.totalorder %v427, 24
      %vm436 = vcmp.lt.s32.totalorder %v428, 24
      %vm437 = vcmp.lt.s32.totalorder %v429, 24
      %vm438 = vmand %vm430, %vm434
      %vm439 = vmand %vm431, %vm435
      %vm440 = vmand %vm432, %vm436
      %vm441 = vmand %vm433, %vm437
      %v442 = vsel %vm438, 1, 0
      %v443 = vsel %vm439, 1, 0
      %v444 = vsel %vm440, 1, 0
      %v445 = vsel %vm441, 1, 0
      %vm446 = vcmp.eq.s32.totalorder %v442, 1
      %vm447 = vcmp.eq.s32.totalorder %v443, 1
      %vm448 = vcmp.eq.s32.totalorder %v444, 1
      %vm449 = vcmp.eq.s32.totalorder %v445, 1
      %v450 = vsel %vm446, %v416, 0.0
      %v451 = vsel %vm447, %v417, 0.0
      %v452 = vsel %vm448, %v418, 0.0
      %v453 = vsel %vm449, %v419, 0.0
      %v454 = vrot.slane %v450, 7
      %v455 = vrot.slane %v451, 7
      %v456 = vrot.slane %v452, 7
      %vm457 = vcmp.lt.s32.totalorder %v421, 1
      %v458 = vsel %vm457, %v455, %v456
      %v459 = vsel %vm457, %v454, %v455
      %v460 = vrot.slane %v451, 1
      %v461 = vrot.slane %v452, 1
      %v462 = vrot.slane %v453, 1
      %vm463 = vcmp.lt.s32.totalorder %v421, 7
      %v464 = vsel %vm463, %v461, %v462
      %v465 = vsel %vm463, %v460, %v461
      %v466 = vld [vmem:[%s2] sm:$0xff]
      %v467 = vld [vmem:[%s2 + $0x8] sm:$0xff]
      %v468 = vld [vmem:[%s2 + $0x10] sm:$0xff]
      %v469 = vld [vmem:[%s2 + $0x18] sm:$0xff]
      %v470 = vld [vmem:[%s2 + $0x20] sm:$0xff]
      %v471 = vld [vmem:[%s2 + $0x28] sm:$0xff]
      %v472 = vld [vmem:[%s2 + $0x30] sm:$0xff]
      %v473 = vld [vmem:[%s2 + $0x38] sm:$0xff]
      %v474 = vld [vmem:[%s2 + $0x40] sm:$0xff]
      %v475 = vld [vmem:[%s2 + $0x48] sm:$0xff]
      %v476 = vld [vmem:[%s2 + $0x50] sm:$0xff]
      %v477 = vld [vmem:[%s2 + $0x58] sm:$0xff]
      %v478 = vld [vmem:[%s2 + $0x60] sm:$0xff]
      %v479 = vld [vmem:[%s2 + $0x68] sm:$0xff]
      %v480 = vld [vmem:[%s2 + $0x70] sm:$0xff]
      %v481 = vld [vmem:[%s2 + $0x78] sm:$0xff]
      %v482 = vld [vmem:[%s2 + $0x80] sm:$0xff]
      %v483 = vld [vmem:[%s2 + $0x88] sm:$0xff]
      %v484 = vld [vmem:[%s2 + $0x90] sm:$0xff]
      %v485 = vld [vmem:[%s2 + $0x98] sm:$0xff]
      %v486 = vld [vmem:[%s2 + $0xa0] sm:$0xff]
      %v487 = vld [vmem:[%s2 + $0xa8] sm:$0xff]
      %v488 = vld [vmem:[%s2 + $0xb0] sm:$0xff]
      %v489 = vld [vmem:[%s2 + $0xb8] sm:$0xff]
      %v490 = vld [vmem:[%s2 + $0xc0] sm:$0xff]
      %v491 = vld [vmem:[%s2 + $0xc8] sm:$0xff]
      %v492 = vld [vmem:[%s2 + $0xd0] sm:$0xff]
      %v493 = vld [vmem:[%s2 + $0xd8] sm:$0xff]
      %v494 = vld [vmem:[%s2 + $0xe0] sm:$0xff]
      %v495 = vld [vmem:[%s2 + $0xe8] sm:$0xff]
      %v496 = vld [vmem:[%s2 + $0xf0] sm:$0xff]
      %v497 = vld [vmem:[%s2 + $0xf8] sm:$0xff]
      %v498 = vld [vmem:[%s2 + $0x100] sm:$0xff]
      %v499 = vld [vmem:[%s2 + $0x108] sm:$0xff]
      %v500 = vld [vmem:[%s2 + $0x110] sm:$0xff]
      %v501 = vld [vmem:[%s2 + $0x118] sm:$0xff]
      %v502 = vld [vmem:[%s2 + $0x120] sm:$0xff]
      %v503 = vld [vmem:[%s2 + $0x128] sm:$0xff]
      %v504 = vld [vmem:[%s2 + $0x130] sm:$0xff]
      %v505 = vld [vmem:[%s2 + $0x138] sm:$0xff]
      %v506 = vld [vmem:[%s2 + $0x140] sm:$0xff]
      %v507 = vld [vmem:[%s2 + $0x148] sm:$0xff]
      %v508 = vld [vmem:[%s2 + $0x150] sm:$0xff]
      %v509 = vld [vmem:[%s2 + $0x158] sm:$0xff]
      %v510 = vld [vmem:[%s2 + $0x160] sm:$0xff]
      %v511 = vld [vmem:[%s2 + $0x168] sm:$0xff]
      %v512 = vld [vmem:[%s2 + $0x170] sm:$0xff]
      %v513 = vld [vmem:[%s2 + $0x178] sm:$0xff]
      %v514 = vld [vmem:[%s5] sm:$0x1]
      %v516 = vlaneseq
      %v517 = vshrl.u32 %v516, 7
      %v518 = vsub.s32 0, %v517
      %v519 = vrot.slane %v514, %v518
      %521 = vmatprep.subr.mxu0 0.0
      %522 = vmatpush1.msra.mxu0 %v466
      %523 = vmatprep.subr.mxu0 0.0
      %524 = vmatpush1.msra.mxu0 %v467
      %525 = vmatprep.subr.mxu0 0.0
      %526 = vmatpush1.msra.mxu0 %v468
      %527 = vmatprep.subr.mxu0 0.0
      %528 = vmatpush1.msra.mxu0 %v469
      %529 = vmatprep.subr.mxu0 0.0
      %530 = vmatpush1.msra.mxu0 %v470
      %531 = vmatprep.subr.mxu0 0.0
      %532 = vmatpush1.msra.mxu0 %v471
      %533 = vmatprep.subr.mxu0 0.0
      %534 = vmatpush1.msra.mxu0 %v472
      %535 = vmatprep.subr.mxu0 0.0
      %536 = vmatpush1.msra.mxu0 %v473
      %537 = vmatprep.subr.mxu0 0.0
      %538 = vmatpush1.msra.mxu0 %v474
      %539 = vmatprep.subr.mxu0 0.0
      %540 = vmatpush1.msra.mxu0 %v475
      %541 = vmatprep.subr.mxu0 0.0
      %542 = vmatpush1.msra.mxu0 %v476
      %543 = vmatprep.subr.mxu0 0.0
      %544 = vmatpush1.msra.mxu0 %v477
      %545 = vmatprep.subr.mxu0 0.0
      %546 = vmatpush1.msra.mxu0 %v478
      %547 = vmatprep.subr.mxu0 0.0
      %548 = vmatpush1.msra.mxu0 %v479
      %549 = vmatprep.subr.mxu0 0.0
      %550 = vmatpush1.msra.mxu0 %v480
      %551 = vmatprep.subr.mxu0 0.0
      %552 = vmatpush1.msra.mxu0 %v481
      %553 = vmatprep.subr.mxu0 0.0
      %554 = vmatpush1.msra.mxu0 %v482
      %555 = vmatprep.subr.mxu0 0.0
      %556 = vmatpush1.msra.mxu0 %v483
      %557 = vmatprep.subr.mxu0 0.0
      %558 = vmatpush1.msra.mxu0 %v484
      %559 = vmatprep.subr.mxu0 0.0
      %560 = vmatpush1.msra.mxu0 %v485
      %561 = vmatprep.subr.mxu0 0.0
      %562 = vmatpush1.msra.mxu0 %v486
      %563 = vmatprep.subr.mxu0 0.0
      %564 = vmatpush1.msra.mxu0 %v487
      %565 = vmatprep.subr.mxu0 0.0
      %566 = vmatpush1.msra.mxu0 %v488
      %567 = vmatprep.subr.mxu0 0.0
      %568 = vmatpush1.msra.mxu0 %v489
      %569 = vmatprep.subr.mxu0 0.0
      %570 = vmatpush1.msra.mxu0 %v490
      %571 = vmatprep.subr.mxu0 0.0
      %572 = vmatpush1.msra.mxu0 %v491
      %573 = vmatprep.subr.mxu0 0.0
      %574 = vmatpush1.msra.mxu0 %v492
      %575 = vmatprep.subr.mxu0 0.0
      %576 = vmatpush1.msra.mxu0 %v493
      %577 = vmatprep.subr.mxu0 0.0
      %578 = vmatpush1.msra.mxu0 %v494
      %579 = vmatprep.subr.mxu0 0.0
      %580 = vmatpush1.msra.mxu0 %v495
      %581 = vmatprep.subr.mxu0 0.0
      %582 = vmatpush1.msra.mxu0 %v496
      %583 = vmatprep.subr.mxu0 0.0
      %584 = vmatpush1.msra.mxu0 %v497
      %585 = vmatprep.mubr.f32.mxu0 %v451
      %586 = vmatmul.mubr.f32.gmra.mrb[0].mxu0 %v459
      %v587 = vpop.f32.mrb[0].mxu0
      %v588 = vadd.f32 %v519, %v587
      %v589 = vpop.f32.mrb[0].mxu0
      %590 = vmatprep.mubr.f32.mxu0 %v452
      %591 = vmatmul.mubr.f32.gmra.mrb[0].mxu0 %v458
      %v592 = vpop.f32.mrb[0].mxu0
      %v593 = vadd.f32 %v519, %v592
      %v594 = vpop.f32.mrb[0].mxu0
      %595 = vdwg.mxu0
      %596 = vmatprep.subr.mxu0 0.0
      %597 = vmatpush1.msra.mxu0 %v498
      %598 = vmatprep.subr.mxu0 0.0
      %599 = vmatpush1.msra.mxu0 %v499
      %600 = vmatprep.subr.mxu0 0.0
      %601 = vmatpush1.msra.mxu0 %v500
      %602 = vmatprep.subr.mxu0 0.0
      %603 = vmatpush1.msra.mxu0 %v501
      %604 = vmatprep.subr.mxu0 0.0
      %605 = vmatpush1.msra.mxu0 %v502
      %606 = vmatprep.subr.mxu0 0.0
      %607 = vmatpush1.msra.mxu0 %v503
      %608 = vmatprep.subr.mxu0 0.0
      %609 = vmatpush1.msra.mxu0 %v504
      %610 = vmatprep.subr.mxu0 0.0
      %611 = vmatpush1.msra.mxu0 %v505
      %612 = vmatprep.subr.mxu0 0.0
      %613 = vmatpush1.msra.mxu0 %v506
      %614 = vmatprep.subr.mxu0 0.0
      %615 = vmatpush1.msra.mxu0 %v507
      %616 = vmatprep.subr.mxu0 0.0
      %617 = vmatpush1.msra.mxu0 %v508
      %618 = vmatprep.subr.mxu0 0.0
      %619 = vmatpush1.msra.mxu0 %v509
      %620 = vmatprep.subr.mxu0 0.0
      %621 = vmatpush1.msra.mxu0 %v510
      %622 = vmatprep.subr.mxu0 0.0
      %623 = vmatpush1.msra.mxu0 %v511
      %624 = vmatprep.subr.mxu0 0.0
      %625 = vmatpush1.msra.mxu0 %v512
      %626 = vmatprep.subr.mxu0 0.0
      %627 = vmatpush1.msra.mxu0 %v513
      %628 = vmatprep.subr.mxu0 0.0
      %629 = vmatpush1.msra.mxu0 0.0
      %630 = vmatprep.subr.mxu0 0.0
      %631 = vmatpush1.msra.mxu0 0.0
      %632 = vmatprep.subr.mxu0 0.0
      %633 = vmatpush1.msra.mxu0 0.0
      %634 = vmatprep.subr.mxu0 0.0
      %635 = vmatpush1.msra.mxu0 0.0
      %636 = vmatprep.subr.mxu0 0.0
      %637 = vmatpush1.msra.mxu0 0.0
      %638 = vmatprep.subr.mxu0 0.0
      %639 = vmatpush1.msra.mxu0 0.0
      %640 = vmatprep.subr.mxu0 0.0
      %641 = vmatpush1.msra.mxu0 0.0
      %642 = vmatprep.subr.mxu0 0.0
      %643 = vmatpush1.msra.mxu0 0.0
      %644 = vmatprep.subr.mxu0 0.0
      %645 = vmatpush1.msra.mxu0 0.0
      %646 = vmatprep.subr.mxu0 0.0
      %647 = vmatpush1.msra.mxu0 0.0
      %648 = vmatprep.subr.mxu0 0.0
      %649 = vmatpush1.msra.mxu0 0.0
      %650 = vmatprep.subr.mxu0 0.0
      %651 = vmatpush1.msra.mxu0 0.0
      %652 = vmatprep.subr.mxu0 0.0
      %653 = vmatpush1.msra.mxu0 0.0
      %654 = vmatprep.subr.mxu0 0.0
      %655 = vmatpush1.msra.mxu0 0.0
      %656 = vmatprep.subr.mxu0 0.0
      %657 = vmatpush1.msra.mxu0 0.0
      %658 = vmatprep.subr.mxu0 0.0
      %659 = vmatpush1.msra.mxu0 0.0
      %660 = vmatprep.mubr.f32.mxu0 0.0
      %661 = vmatmul.mubr.f32.gmra.mrb[0].mxu0 %v465
      %v662 = vpop.f32.mrb[0].mxu0
      %v663 = vadd.f32 %v588, %v662
      %v664 = vpop.f32.mrb[0].mxu0
      %665 = vmatprep.mubr.f32.mxu0 0.0
      %666 = vmatmul.mubr.f32.gmra.mrb[0].mxu0 %v464
      %v667 = vpop.f32.mrb[0].mxu0
      %v668 = vadd.f32 %v593, %v667
      %v669 = vpop.f32.mrb[0].mxu0
      %670 = vdwg.mxu0
      %v671 = vmax.f32 %v663, 0.0
      %v672 = vmax.f32 %v668, 0.0
      %v673 = vld [vmem:[%s3] sm:$0xff]
      %v674 = vld [vmem:[%s3 + $0x8] sm:$0xff]
      %v675 = vld [vmem:[%s3 + $0x10] sm:$0xff]
      %v676 = vld [vmem:[%s3 + $0x18] sm:$0xff]
      %v677 = vld [vmem:[%s3 + $0x20] sm:$0xff]
      %v678 = vld [vmem:[%s3 + $0x28] sm:$0xff]
      %v679 = vld [vmem:[%s3 + $0x30] sm:$0xff]
      %v680 = vld [vmem:[%s3 + $0x38] sm:$0xff]
      %v681 = vld [vmem:[%s3 + $0x40] sm:$0xff]
      %v682 = vld [vmem:[%s3 + $0x48] sm:$0xff]
      %v683 = vld [vmem:[%s3 + $0x50] sm:$0xff]
      %v684 = vld [vmem:[%s3 + $0x58] sm:$0xff]
      %v685 = vld [vmem:[%s3 + $0x60] sm:$0xff]
      %v686 = vld [vmem:[%s3 + $0x68] sm:$0xff]
      %v687 = vld [vmem:[%s3 + $0x70] sm:$0xff]
      %v688 = vld [vmem:[%s3 + $0x78] sm:$0xff]
      %v689 = vld [vmem:[%s6] sm:$0x1]
      %v691 = vlaneseq
      %v692 = vshrl.u32 %v691, 7
      %v693 = vsub.s32 0, %v692
      %v694 = vrot.slane %v689, %v693
      %696 = vmatprep.subr.mxu0 0.0
      %697 = vmatpush1.msra.mxu0 %v673
      %698 = vmatprep.subr.mxu0 0.0
      %699 = vmatpush1.msra.mxu0 %v674
      %700 = vmatprep.subr.mxu0 0.0
      %701 = vmatpush1.msra.mxu0 %v675
      %702 = vmatprep.subr.mxu0 0.0
      %703 = vmatpush1.msra.mxu0 %v676
      %704 = vmatprep.subr.mxu0 0.0
      %705 = vmatpush1.msra.mxu0 %v677
      %706 = vmatprep.subr.mxu0 0.0
      %707 = vmatpush1.msra.mxu0 %v678
      %708 = vmatprep.subr.mxu0 0.0
      %709 = vmatpush1.msra.mxu0 %v679
      %710 = vmatprep.subr.mxu0 0.0
      %711 = vmatpush1.msra.mxu0 %v680
      %712 = vmatprep.subr.mxu0 0.0
      %713 = vmatpush1.msra.mxu0 %v681
      %714 = vmatprep.subr.mxu0 0.0
      %715 = vmatpush1.msra.mxu0 %v682
      %716 = vmatprep.subr.mxu0 0.0
      %717 = vmatpush1.msra.mxu0 %v683
      %718 = vmatprep.subr.mxu0 0.0
      %719 = vmatpush1.msra.mxu0 %v684
      %720 = vmatprep.subr.mxu0 0.0
      %721 = vmatpush1.msra.mxu0 %v685
      %722 = vmatprep.subr.mxu0 0.0
      %723 = vmatpush1.msra.mxu0 %v686
      %724 = vmatprep.subr.mxu0 0.0
      %725 = vmatpush1.msra.mxu0 %v687
      %726 = vmatprep.subr.mxu0 0.0
      %727 = vmatpush1.msra.mxu0 %v688
      %728 = vmatprep.subr.mxu0 0.0
      %729 = vmatpush1.msra.mxu0 0.0
      %730 = vmatprep.subr.mxu0 0.0
      %731 = vmatpush1.msra.mxu0 0.0
      %732 = vmatprep.subr.mxu0 0.0
      %733 = vmatpush1.msra.mxu0 0.0
      %734 = vmatprep.subr.mxu0 0.0
      %735 = vmatpush1.msra.mxu0 0.0
      %736 = vmatprep.subr.mxu0 0.0
      %737 = vmatpush1.msra.mxu0 0.0
      %738 = vmatprep.subr.mxu0 0.0
      %739 = vmatpush1.msra.mxu0 0.0
      %740 = vmatprep.subr.mxu0 0.0
      %741 = vmatpush1.msra.mxu0 0.0
      %742 = vmatprep.subr.mxu0 0.0
      %743 = vmatpush1.msra.mxu0 0.0
      %744 = vmatprep.subr.mxu0 0.0
      %745 = vmatpush1.msra.mxu0 0.0
      %746 = vmatprep.subr.mxu0 0.0
      %747 = vmatpush1.msra.mxu0 0.0
      %748 = vmatprep.subr.mxu0 0.0
      %749 = vmatpush1.msra.mxu0 0.0
      %750 = vmatprep.subr.mxu0 0.0
      %751 = vmatpush1.msra.mxu0 0.0
      %752 = vmatprep.subr.mxu0 0.0
      %753 = vmatpush1.msra.mxu0 0.0
      %754 = vmatprep.subr.mxu0 0.0
      %755 = vmatpush1.msra.mxu0 0.0
      %756 = vmatprep.subr.mxu0 0.0
      %757 = vmatpush1.msra.mxu0 0.0
      %758 = vmatprep.subr.mxu0 0.0
      %759 = vmatpush1.msra.mxu0 0.0
      %760 = vmatprep.mubr.f32.mxu0 0.0
      %761 = vmatmul.mubr.f32.gmra.mrb[0].mxu0 %v671
      %v762 = vpop.f32.mrb[0].mxu0
      %v763 = vadd.f32 %v694, %v762
      %v764 = vpop.f32.mrb[0].mxu0
      %765 = vmatprep.mubr.f32.mxu0 0.0
      %766 = vmatmul.mubr.f32.gmra.mrb[0].mxu0 %v672
      %v767 = vpop.f32.mrb[0].mxu0
      %v768 = vadd.f32 %v694, %v767
      %v769 = vpop.f32.mrb[0].mxu0
      %770 = vdwg.mxu0
      %s771 = sadd.s32 %s302, 8
      %s772 = scalar_lea.vmem %s291, %s771
      %v773 = vld [vmem:[%s772] sm:$0xff]
      %v774 = vld [vmem:[%s772 + $0x8] sm:$0xff]
      %v775 = vadd.f32 %v763, %v773
      %v776 = vadd.f32 %v768, %v774
      %v777 = vmax.f32 %v775, 0.0
      %v778 = vmax.f32 %v776, 0.0
      %779 = vst [vmem:[%s300] sm:$0xff] %v777
      %780 = vst [vmem:[%s300 + $0x8] sm:$0xff] %v778
      %s781 = smul.u32 2, %s23
      %p782 = scmp.lt.s32.totalorder %s22, 1
      %s783 = scalar_select %p782, %s22, 1
      %p784 = scmp.lt.s32.totalorder %s781, 1
      %s785 = scalar_select %p784, %s781, 1
      %s786 = smul.addr %s783, 2
      %s787 = sadd.s32 %s785, %s786
      %s788 = smul.addr %s787, 8
      %s789 = scalar_lea.vmem %s7, %s788
      // Predicated region
      $region49: #{_bottleneck_impl.1} parent=47 // pred_check
        %p790 = pneg %p202
      $region50: #{_bottleneck_impl.1} parent=47 // pred_check_branch
        %792 = sbr.rel (%p790) target = $region52
      $region51: #{_bottleneck_impl.1} parent=47 // pred_region
        %s793 = smul.u32 2, %s23
      $region52: #{_bottleneck_impl.1} parent=47 // pred_fallthru
        _
    $region48: #{_bottleneck_impl.1} parent=5 // pred_fallthru
      _
    %p794 = scmp.le.s32.totalorder 2, %s13
    // Predicated region
    $region53: #{_bottleneck_impl.1} parent=5 // pred_check
      %p795 = pneg %p794
    $region54: #{_bottleneck_impl.1} parent=5 // pred_check_branch
      %797 = sbr.rel (%p795) target = $region56
    $region55: #{_bottleneck_impl.1} parent=5 // pred_region
      %s798 = ssub.s32 %s13, 2
      // Predicated region
      $region57: #{_bottleneck_impl.1} parent=55 // pred_check
        %p799 = pneg %p208
      $region58: #{_bottleneck_impl.1} parent=55 // pred_check_branch
        %801 = sbr.rel (%p799) target = $region60
      $region59: #{_bottleneck_impl.1} parent=55 // pred_region
        %s802 = smul.u32 2, %s25
        %p803 = scmp.lt.s32.totalorder %s24, 1
        %s804 = scalar_select %p803, %s24, 1
        %p805 = scmp.lt.s32.totalorder %s802, 1
        %s806 = scalar_select %p805, %s802, 1
        %s807 = smul.addr %s804, 2
        %s808 = sadd.s32 %s806, %s807
        %s809 = smul.addr %s808, 8
        %s810 = scalar_lea.vmem %s7, %s809
      $region60: #{_bottleneck_impl.1} parent=55 // pred_fallthru
        _
    $region56: #{_bottleneck_impl.1} parent=5 // pred_fallthru
      _
  $region6: #{_bottleneck_impl.1} parent=0 // loop_footer
    %s17 = sadd.s32 1, %s13
  $region7: #{_bottleneck_impl.1} parent=0 // loop_footer_branch
    %12 = sbr.rel target = $region3
  $region8: #{_bottleneck_impl.1} parent=0 // loop_exit
    _

// kernel: _bottleneck_impl.1
$region0: #{_bottleneck_impl.1}
  #allocation0 [shape = 'u32[]', space=smem, size = 0x4, offset = 0x4, fixed_abs, tag = 'smem constant byte address 0x4 - core index']
  #allocation1 [shape = 'u32[144,128]{1,0:T(1,128)}', space=vmem, size = 0x12000, scoped, tag = 'internal scratch']
  %s0 = inlined_call_operand.vmem [shape: f32[2,32,128], index: 0, kind: input, shape index: {}]
  %s1 = inlined_call_operand.vmem [shape: f32[128,128], index: 1, kind: input, shape index: {}]
  %s2 = inlined_call_operand.vmem [shape: f32[384,128], index: 2, kind: input, shape index: {}]
  %s3 = inlined_call_operand.vmem [shape: f32[128,128], index: 3, kind: input, shape index: {}]
  %s4 = inlined_call_operand.vmem [shape: f32[1,128], index: 4, kind: input, shape index: {}]
  %s5 = inlined_call_operand.vmem [shape: f32[1,128], index: 5, kind: input, shape index: {}]
  %s6 = inlined_call_operand.vmem [shape: f32[1,128], index: 6, kind: input, shape index: {}]
  %s7 = inlined_call_operand.vmem [shape: f32[2,16,128], index: 7, kind: output, shape index: {}]
  %s8 = sld [smem:[#allocation0]]
  $region61: #{_bottleneck_impl.1} parent=0
    _
  %s10 = ssub.s32 1, %s8
  %s11 = scalar_select 0, %s10, %s8
  loop: start=0, step=1, limit=4
  $region2: #{_bottleneck_impl.1} parent=0 // loop_pre_header
    _
  $region3: #{_bottleneck_impl.1} parent=0 // loop_header
    %s13 = sphi 0, %s17
    %p14 = scmp.ge.s32.totalorder %s13, 4
    %s20 = sphi 0, %s32
    %s21 = sphi 0, %s28
    %s22 = sphi 0, %s20
    %s23 = sphi 0, %s21
    %s24 = sphi 0, %s22
    %s25 = sphi 0, %s23
    %s35 = sphi 0, %s37
    %s38 = sphi 0, %s35
    %s39 = sphi 0, %s38
    %s55 = sphi 0, %s39
    %s59 = sphi 0, %s59
    %s61 = sphi 0, %s59
    %s62 = sphi 0, %s61
    %s76 = sphi 0, %s62
    %s80 = sphi 0, %s80
    %s82 = sphi 0, %s80
    %s83 = sphi 0, %s82
    %s97 = sphi 0, %s83
    %s101 = sphi 0, %s101
    %s103 = sphi 0, %s101
    %s104 = sphi 0, %s103
    %s118 = sphi 0, %s104
    %s122 = sphi 0, %s122
    %s124 = sphi 0, %s122
    %s125 = sphi 0, %s124
    %s139 = sphi 0, %s125
    %s143 = sphi 0, %s143
    %s145 = sphi 0, %s143
    %s146 = sphi 0, %s145
    %s160 = sphi 0, %s146
    %s164 = sphi 0, %s164
    %s166 = sphi 0, %s164
    %s167 = sphi 0, %s166
    %s181 = sphi 0, %s167
    %s189 = sphi 0, %s191
    %s192 = sphi 0, %s189
    %s193 = sphi 0, %s192
    %s209 = sphi 0, %s193
  $region4: #{_bottleneck_impl.1} parent=0 // loop_header_branch
    %16 = sbr.rel (%p14) target = $region8
  $region5: #{_bottleneck_impl.1} parent=0 // loop_body
    %s18 = ssub.s32 %s13, 1
    %s19 = ssub.s32 %s13, 2
    %s26 = sadd.s32 1, %s21
    %p27 = scmp.ge.s32.totalorder %s26, 1
    %s28 = scalar_select %p27, 0, %s26
    %s29 = sadd.s32 1, %s20
    %s30 = scalar_select %p27, %s29, %s20
    %p31 = scmp.ge.s32.totalorder %s30, 2
    %s32 = scalar_select %p31, 0, %s30
    %s33 = ssub.s32 %s20, %s32
    %p34 = scmp.eq.s32.totalorder %s33, 0
    %s36 = sadd.s32 %s35, 1
    %s37 = scalar_select %p34, %s35, %s36
    %p40 = pneg %p34
    %p41 = scmp.eq.s32.totalorder %s13, 1
    %p42 = por %p40, %p41
    %p43 = scmp.ne.s32.totalorder %s35, %s38
    %p44 = scmp.eq.s32.totalorder %s13, 0
    %p45 = por %p43, %p44
    %p46 = scmp.ne.s32.totalorder %s35, %s38
    %p47 = scmp.eq.s32.totalorder %s18, 1
    %p48 = por %p46, %p47
    %p49 = scmp.ne.s32.totalorder %s38, %s39
    %p50 = scmp.eq.s32.totalorder %s18, 0
    %p51 = por %p49, %p50
    %p52 = scmp.ne.s32.totalorder %s38, %s39
    %p53 = scmp.eq.s32.totalorder %s19, 1
    %p54 = por %p52, %p53
    %p56 = scmp.ne.s32.totalorder %s39, %s55
    %p57 = scmp.eq.s32.totalorder %s19, 0
    %p58 = por %p56, %p57
    %s60 = sadd.s32 %s59, 1
    %p63 = scmp.eq.s32.totalorder %s13, 1
    %p64 = scmp.ne.s32.totalorder %s59, %s61
    %p65 = scmp.eq.s32.totalorder %s13, 0
    %p66 = por %p64, %p65
    %p67 = scmp.ne.s32.totalorder %s59, %s61
    %p68 = scmp.eq.s32.totalorder %s18, 1
    %p69 = por %p67, %p68
    %p70 = scmp.ne.s32.totalorder %s61, %s62
    %p71 = scmp.eq.s32.totalorder %s18, 0
    %p72 = por %p70, %p71
    %p73 = scmp.ne.s32.totalorder %s61, %s62
    %p74 = scmp.eq.s32.totalorder %s19, 1
    %p75 = por %p73, %p74
    %p77 = scmp.ne.s32.totalorder %s62, %s76
    %p78 = scmp.eq.s32.totalorder %s19, 0
    %p79 = por %p77, %p78
    %s81 = sadd.s32 %s80, 1
    %p84 = scmp.eq.s32.totalorder %s13, 1
    %p85 = scmp.ne.s32.totalorder %s80, %s82
    %p86 = scmp.eq.s32.totalorder %s13, 0
    %p87 = por %p85, %p86
    %p88 = scmp.ne.s32.totalorder %s80, %s82
    %p89 = scmp.eq.s32.totalorder %s18, 1
    %p90 = por %p88, %p89
    %p91 = scmp.ne.s32.totalorder %s82, %s83
    %p92 = scmp.eq.s32.totalorder %s18, 0
    %p93 = por %p91, %p92
    %p94 = scmp.ne.s32.totalorder %s82, %s83
    %p95 = scmp.eq.s32.totalorder %s19, 1
    %p96 = por %p94, %p95
    %p98 = scmp.ne.s32.totalorder %s83, %s97
    %p99 = scmp.eq.s32.totalorder %s19, 0
    %p100 = por %p98, %p99
    %s102 = sadd.s32 %s101, 1
    %p105 = scmp.eq.s32.totalorder %s13, 1
    %p106 = scmp.ne.s32.totalorder %s101, %s103
    %p107 = scmp.eq.s32.totalorder %s13, 0
    %p108 = por %p106, %p107
    %p109 = scmp.ne.s32.totalorder %s101, %s103
    %p110 = scmp.eq.s32.totalorder %s18, 1
    %p111 = por %p109, %p110
    %p112 = scmp.ne.s32.totalorder %s103, %s104
    %p113 = scmp.eq.s32.totalorder %s18, 0
    %p114 = por %p112, %p113
    %p115 = scmp.ne.s32.totalorder %s103, %s104
    %p116 = scmp.eq.s32.totalorder %s19, 1
    %p117 = por %p115, %p116
    %p119 = scmp.ne.s32.totalorder %s104, %s118
    %p120 = scmp.eq.s32.totalorder %s19, 0
    %p121 = por %p119, %p120
    %s123 = sadd.s32 %s122, 1
    %p126 = scmp.eq.s32.totalorder %s13, 1
    %p127 = scmp.ne.s32.totalorder %s122, %s124
    %p128 = scmp.eq.s32.totalorder %s13, 0
    %p129 = por %p127, %p128
    %p130 = scmp.ne.s32.totalorder %s122, %s124
    %p131 = scmp.eq.s32.totalorder %s18, 1
    %p132 = por %p130, %p131
    %p133 = scmp.ne.s32.totalorder %s124, %s125
    %p134 = scmp.eq.s32.totalorder %s18, 0
    %p135 = por %p133, %p134
    %p136 = scmp.ne.s32.totalorder %s124, %s125
    %p137 = scmp.eq.s32.totalorder %s19, 1
    %p138 = por %p136, %p137
    %p140 = scmp.ne.s32.totalorder %s125, %s139
    %p141 = scmp.eq.s32.totalorder %s19, 0
    %p142 = por %p140, %p141
    %s144 = sadd.s32 %s143, 1
    %p147 = scmp.eq.s32.totalorder %s13, 1
    %p148 = scmp.ne.s32.totalorder %s143, %s145
    %p149 = scmp.eq.s32.totalorder %s13, 0
    %p150 = por %p148, %p149
    %p151 = scmp.ne.s32.totalorder %s143, %s145
    %p152 = scmp.eq.s32.totalorder %s18, 1
    %p153 = por %p151, %p152
    %p154 = scmp.ne.s32.totalorder %s145, %s146
    %p155 = scmp.eq.s32.totalorder %s18, 0
    %p156 = por %p154, %p155
    %p157 = scmp.ne.s32.totalorder %s145, %s146
    %p158 = scmp.eq.s32.totalorder %s19, 1
    %p159 = por %p157, %p158
    %p161 = scmp.ne.s32.totalorder %s146, %s160
    %p162 = scmp.eq.s32.totalorder %s19, 0
    %p163 = por %p161, %p162
    %s165 = sadd.s32 %s164, 1
    %p168 = scmp.eq.s32.totalorder %s13, 1
    %p169 = scmp.ne.s32.totalorder %s164, %s166
    %p170 = scmp.eq.s32.totalorder %s13, 0
    %p171 = por %p169, %p170
    %p172 = scmp.ne.s32.totalorder %s164, %s166
    %p173 = scmp.eq.s32.totalorder %s18, 1
    %p174 = por %p172, %p173
    %p175 = scmp.ne.s32.totalorder %s166, %s167
    %p176 = scmp.eq.s32.totalorder %s18, 0
    %p177 = por %p175, %p176
    %p178 = scmp.ne.s32.totalorder %s166, %s167
    %p179 = scmp.eq.s32.totalorder %s19, 1
    %p180 = por %p178, %p179
    %p182 = scmp.ne.s32.totalorder %s167, %s181
    %p183 = scmp.eq.s32.totalorder %s19, 0
    %p184 = por %p182, %p183
    %s185 = ssub.s32 %s20, %s32
    %s186 = ssub.s32 %s21, %s28
    %s187 = sor.u32 %s185, %s186
    %p188 = scmp.eq.s32.totalorder %s187, 0
    %s190 = sadd.s32 %s189, 1
    %s191 = scalar_select %p188, %s189, %s190
    %p194 = pneg %p188
    %p195 = scmp.eq.s32.totalorder %s13, 1
    %p196 = por %p194, %p195
    %p197 = scmp.ne.s32.totalorder %s189, %s192
    %p198 = scmp.eq.s32.totalorder %s13, 0
    %p199 = por %p197, %p198
    %p200 = scmp.ne.s32.totalorder %s189, %s192
    %p201 = scmp.eq.s32.totalorder %s18, 1
    %p202 = por %p200, %p201
    %p203 = scmp.ne.s32.totalorder %s192, %s193
    %p204 = scmp.eq.s32.totalorder %s18, 0
    %p205 = por %p203, %p204
    %p206 = scmp.ne.s32.totalorder %s192, %s193
    %p207 = scmp.eq.s32.totalorder %s19, 1
    %p208 = por %p206, %p207
    %p210 = scmp.ne.s32.totalorder %s193, %s209
    %p211 = scmp.eq.s32.totalorder %s19, 0
    %p212 = por %p210, %p211
    %p213 = scmp.le.s32.totalorder 1, %s13
    %p214 = scmp.lt.s32.totalorder %s13, 3
    %p215 = pnand %p213, %p214
    %p216 = pneg %p215
    // Predicated region
    $region9: #{_bottleneck_impl.1} parent=5 // pred_check
      _
    $region10: #{_bottleneck_impl.1} parent=5 // pred_check_branch
      %218 = sbr.rel (%p215) target = $region12
    $region11: #{_bottleneck_impl.1} parent=5 // pred_region
      %s219 = ssub.s32 %s13, 1
      // Predicated region
      $region13: #{_bottleneck_impl.1} parent=11 // pred_check
        %p220 = pneg %p51
      $region14: #{_bottleneck_impl.1} parent=11 // pred_check_branch
        %222 = sbr.rel (%p220) target = $region16
      $region15: #{_bottleneck_impl.1} parent=11 // pred_region
        %p223 = scmp.lt.s32.totalorder %s22, 1
        %s224 = scalar_select %p223, %s22, 1
        %s225 = smul.addr %s224, 4
        %s226 = smul.addr %s225, 8
        %s227 = scalar_lea.vmem %s0, %s226
      $region16: #{_bottleneck_impl.1} parent=11 // pred_fallthru
        _
      // Predicated region
      $region17: #{_bottleneck_impl.1} parent=11 // pred_check
        %p228 = pneg %p72
      $region18: #{_bottleneck_impl.1} parent=11 // pred_check_branch
        %230 = sbr.rel (%p228) target = $region20
      $region19: #{_bottleneck_impl.1} parent=11 // pred_region
        _
      $region20: #{_bottleneck_impl.1} parent=11 // pred_fallthru
        _
      // Predicated region
      $region21: #{_bottleneck_impl.1} parent=11 // pred_check
        %p231 = pneg %p93
      $region22: #{_bottleneck_impl.1} parent=11 // pred_check_branch
        %233 = sbr.rel (%p231) target = $region24
      $region23: #{_bottleneck_impl.1} parent=11 // pred_region
        _
      $region24: #{_bottleneck_impl.1} parent=11 // pred_fallthru
        _
      // Predicated region
      $region25: #{_bottleneck_impl.1} parent=11 // pred_check
        %p234 = pneg %p114
      $region26: #{_bottleneck_impl.1} parent=11 // pred_check_branch
        %236 = sbr.rel (%p234) target = $region28
      $region27: #{_bottleneck_impl.1} parent=11 // pred_region
        _
      $region28: #{_bottleneck_impl.1} parent=11 // pred_fallthru
        _
      // Predicated region
      $region29: #{_bottleneck_impl.1} parent=11 // pred_check
        %p237 = pneg %p135
      $region30: #{_bottleneck_impl.1} parent=11 // pred_check_branch
        %239 = sbr.rel (%p237) target = $region32
      $region31: #{_bottleneck_impl.1} parent=11 // pred_region
        _
      $region32: #{_bottleneck_impl.1} parent=11 // pred_fallthru
        _
      // Predicated region
      $region33: #{_bottleneck_impl.1} parent=11 // pred_check
        %p240 = pneg %p156
      $region34: #{_bottleneck_impl.1} parent=11 // pred_check_branch
        %242 = sbr.rel (%p240) target = $region36
      $region35: #{_bottleneck_impl.1} parent=11 // pred_region
        _
      $region36: #{_bottleneck_impl.1} parent=11 // pred_fallthru
        _
      // Predicated region
      $region37: #{_bottleneck_impl.1} parent=11 // pred_check
        %p243 = pneg %p177
      $region38: #{_bottleneck_impl.1} parent=11 // pred_check_branch
        %245 = sbr.rel (%p243) target = $region40
      $region39: #{_bottleneck_impl.1} parent=11 // pred_region
        _
      $region40: #{_bottleneck_impl.1} parent=11 // pred_fallthru
        _
    $region12: #{_bottleneck_impl.1} parent=5 // pred_fallthru
      _
    %p246 = scmp.lt.s32.totalorder %s13, 2
    // Predicated region
    $region41: #{_bottleneck_impl.1} parent=5 // pred_check
      %p247 = pneg %p246
    $region42: #{_bottleneck_impl.1} parent=5 // pred_check_branch
      %249 = sbr.rel (%p247) target = $region44
    $region43: #{_bottleneck_impl.1} parent=5 // pred_region
      _
    $region44: #{_bottleneck_impl.1} parent=5 // pred_fallthru
      _
    %p250 = scmp.le.s32.totalorder 1, %s13
    %p251 = scmp.lt.s32.totalorder %s13, 3
    %p252 = pnand %p250, %p251
    %p253 = pneg %p252
    // Predicated region
    $region45: #{_bottleneck_impl.1} parent=5 // pred_check
      _
    $region46: #{_bottleneck_impl.1} parent=5 // pred_check_branch
      %255 = sbr.rel (%p252) target = $region48
    $region47: #{_bottleneck_impl.1} parent=5 // pred_region
      %s256 = ssub.s32 %s13, 1
      %p257 = scmp.lt.s32.totalorder %s22, 1
      %s258 = scalar_select %p257, %s22, 1
      %s259 = smul.addr %s258, 4
      %s260 = smul.addr %s259, 8
      %s261 = scalar_lea.vmem %s0, %s260
      %p262 = pneg %p51
      %p263 = pneg %p48
      %p264 = pneg %p72
      %p265 = pneg %p69
      %p266 = pneg %p93
      %p267 = pneg %p90
      %p268 = pneg %p114
      %p269 = pneg %p111
      %p270 = pneg %p135
      %p271 = pneg %p132
      %p272 = pneg %p156
      %p273 = pneg %p153
      %p274 = pneg %p177
      %p275 = pneg %p174
      %p276 = pneg %p205
      %p277 = pneg %p202
      %s278 = smul.u32 2, %s23
      %p279 = scmp.lt.s32.totalorder %s22, 1
      %s280 = scalar_select %p279, %s22, 1
      %p281 = scmp.lt.s32.totalorder %s278, 1
      %s282 = scalar_select %p281, %s278, 1
      %s283 = smul.addr %s280, 2
      %s284 = sadd.s32 %s282, %s283
      %s285 = smul.addr %s284, 8
      %s286 = scalar_lea.vmem %s7, %s285
      %p287 = scmp.lt.s32.totalorder %s22, 1
      %s288 = scalar_select %p287, %s22, 1
      %s289 = smul.addr %s288, 4
      %s290 = smul.addr %s289, 8
      %s291 = scalar_lea.vmem %s0, %s290
      %s292 = smul.u32 2, %s23
      %p293 = scmp.lt.s32.totalorder %s22, 1
      %s294 = scalar_select %p293, %s22, 1
      %p295 = scmp.lt.s32.totalorder %s292, 1
      %s296 = scalar_select %p295, %s292, 1
      %s297 = smul.addr %s294, 2
      %s298 = sadd.s32 %s296, %s297
      %s299 = smul.addr %s298, 8
      %s300 = scalar_lea.vmem %s7, %s299
      %s301 = smul.u32 2, %s23
      %s302 = smul.u32 %s23, 16
      %s303 = scalar_lea.vmem %s291, %s302
      %v304 = vld [vmem:[%s303] sm:$0xff]
      %v305 = vld [vmem:[%s303 + $0x8] sm:$0xff]
      %v306 = vld [vmem:[%s303 + $0x10] sm:$0xff]
      %v307 = vld [vmem:[%s303 + $0x18] sm:$0xff]
      %v308 = vld [vmem:[%s1] sm:$0xff]
      %v309 = vld [vmem:[%s1 + $0x8] sm:$0xff]
      %v310 = vld [vmem:[%s1 + $0x10] sm:$0xff]
      %v311 = vld [vmem:[%s1 + $0x18] sm:$0xff]
      %v312 = vld [vmem:[%s1 + $0x20] sm:$0xff]
      %v313 = vld [vmem:[%s1 + $0x28] sm:$0xff]
      %v314 = vld [vmem:[%s1 + $0x30] sm:$0xff]
      %v315 = vld [vmem:[%s1 + $0x38] sm:$0xff]
      %v316 = vld [vmem:[%s1 + $0x40] sm:$0xff]
      %v317 = vld [vmem:[%s1 + $0x48] sm:$0xff]
      %v318 = vld [vmem:[%s1 + $0x50] sm:$0xff]
      %v319 = vld [vmem:[%s1 + $0x58] sm:$0xff]
      %v320 = vld [vmem:[%s1 + $0x60] sm:$0xff]
      %v321 = vld [vmem:[%s1 + $0x68] sm:$0xff]
      %v322 = vld [vmem:[%s1 + $0x70] sm:$0xff]
      %v323 = vld [vmem:[%s1 + $0x78] sm:$0xff]
      %v324 = vld [vmem:[%s4] sm:$0x1]
      %v326 = vlaneseq
      %v327 = vshrl.u32 %v326, 7
      %v328 = vsub.s32 0, %v327
      %v329 = vrot.slane %v324, %v328
      %331 = vmatprep.subr.mxu0 0.0
      %332 = vmatpush1.msra.mxu0 %v308
      %333 = vmatprep.subr.mxu0 0.0
      %334 = vmatpush1.msra.mxu0 %v309
      %335 = vmatprep.subr.mxu0 0.0
      %336 = vmatpush1.msra.mxu0 %v310
      %337 = vmatprep.subr.mxu0 0.0
      %338 = vmatpush1.msra.mxu0 %v311
      %339 = vmatprep.subr.mxu0 0.0
      %340 = vmatpush1.msra.mxu0 %v312
      %341 = vmatprep.subr.mxu0 0.0
      %342 = vmatpush1.msra.mxu0 %v313
      %343 = vmatprep.subr.mxu0 0.0
      %344 = vmatpush1.msra.mxu0 %v314
      %345 = vmatprep.subr.mxu0 0.0
      %346 = vmatpush1.msra.mxu0 %v315
      %347 = vmatprep.subr.mxu0 0.0
      %348 = vmatpush1.msra.mxu0 %v316
      %349 = vmatprep.subr.mxu0 0.0
      %350 = vmatpush1.msra.mxu0 %v317
      %351 = vmatprep.subr.mxu0 0.0
      %352 = vmatpush1.msra.mxu0 %v318
      %353 = vmatprep.subr.mxu0 0.0
      %354 = vmatpush1.msra.mxu0 %v319
      %355 = vmatprep.subr.mxu0 0.0
      %356 = vmatpush1.msra.mxu0 %v320
      %357 = vmatprep.subr.mxu0 0.0
      %358 = vmatpush1.msra.mxu0 %v321
      %359 = vmatprep.subr.mxu0 0.0
      %360 = vmatpush1.msra.mxu0 %v322
      %361 = vmatprep.subr.mxu0 0.0
      %362 = vmatpush1.msra.mxu0 %v323
      %363 = vmatprep.subr.mxu0 0.0
      %364 = vmatpush1.msra.mxu0 0.0
      %365 = vmatprep.subr.mxu0 0.0
      %366 = vmatpush1.msra.mxu0 0.0
      %367 = vmatprep.subr.mxu0 0.0
      %368 = vmatpush1.msra.mxu0 0.0
      %369 = vmatprep.subr.mxu0 0.0
      %370 = vmatpush1.msra.mxu0 0.0
      %371 = vmatprep.subr.mxu0 0.0
      %372 = vmatpush1.msra.mxu0 0.0
      %373 = vmatprep.subr.mxu0 0.0
      %374 = vmatpush1.msra.mxu0 0.0
      %375 = vmatprep.subr.mxu0 0.0
      %376 = vmatpush1.msra.mxu0 0.0
      %377 = vmatprep.subr.mxu0 0.0
      %378 = vmatpush1.msra.mxu0 0.0
      %379 = vmatprep.subr.mxu0 0.0
      %380 = vmatpush1.msra.mxu0 0.0
      %381 = vmatprep.subr.mxu0 0.0
      %382 = vmatpush1.msra.mxu0 0.0
      %383 = vmatprep.subr.mxu0 0.0
      %384 = vmatpush1.msra.mxu0 0.0
      %385 = vmatprep.subr.mxu0 0.0
      %386 = vmatpush1.msra.mxu0 0.0
      %387 = vmatprep.subr.mxu0 0.0
      %388 = vmatpush1.msra.mxu0 0.0
      %389 = vmatprep.subr.mxu0 0.0
      %390 = vmatpush1.msra.mxu0 0.0
      %391 = vmatprep.subr.mxu0 0.0
      %392 = vmatpush1.msra.mxu0 0.0
      %393 = vmatprep.subr.mxu0 0.0
      %394 = vmatpush1.msra.mxu0 0.0
      %395 = vmatprep.mubr.f32.mxu0 0.0
      %396 = vmatmul.mubr.f32.gmra.mrb[0].mxu0 %v304
      %v397 = vpop.f32.mrb[0].mxu0
      %v398 = vadd.f32 %v329, %v397
      %v399 = vpop.f32.mrb[0].mxu0
      %400 = vmatprep.mubr.f32.mxu0 0.0
      %401 = vmatmul.mubr.f32.gmra.mrb[0].mxu0 %v305
      %v402 = vpop.f32.mrb[0].mxu0
      %v403 = vadd.f32 %v329, %v402
      %v404 = vpop.f32.mrb[0].mxu0
      %405 = vmatprep.mubr.f32.mxu0 0.0
      %406 = vmatmul.mubr.f32.gmra.mrb[0].mxu0 %v306
      %v407 = vpop.f32.mrb[0].mxu0
      %v408 = vadd.f32 %v329, %v407
      %v409 = vpop.f32.mrb[0].mxu0
      %410 = vmatprep.mubr.f32.mxu0 0.0
      %411 = vmatmul.mubr.f32.gmra.mrb[0].mxu0 %v307
      %v412 = vpop.f32.mrb[0].mxu0
      %v413 = vadd.f32 %v329, %v412
      %v414 = vpop.f32.mrb[0].mxu0
      %415 = vdwg.mxu0
      %v416 = vmax.f32 %v398, 0.0
      %v417 = vmax.f32 %v403, 0.0
      %v418 = vmax.f32 %v408, 0.0
      %v419 = vmax.f32 %v413, 0.0
      %v420 = vlaneseq
      %v421 = vshrl.u32 %v420, 7
      %v422 = vadd.s32 %v421, 8
      %v423 = vadd.s32 %v421, 16
      %v424 = vadd.s32 %v421, 24
      %v425 = vstv %s302
      %v426 = vadd.s32 %v425, %v421
      %v427 = vadd.s32 %v425, %v422
      %v428 = vadd.s32 %v425, %v423
      %v429 = vadd.s32 %v425, %v424
      %vm430 = vcmp.ge.s32.totalorder %v426, 8
      %vm431 = vcmp.ge.s32.totalorder %v427, 8
      %vm432 = vcmp.ge.s32.totalorder %v428, 8
      %vm433 = vcmp.ge.s32.totalorder %v429, 8
      %vm434 = vcmp.lt.s32.totalorder %v426, 24
      %vm435 = vcmp.lt.s32.totalorder %v427, 24
      %vm436 = vcmp.lt.s32.totalorder %v428, 24
      %vm437 = vcmp.lt.s32.totalorder %v429, 24
      %vm438 = vmand %vm430, %vm434
      %vm439 = vmand %vm431, %vm435
      %vm440 = vmand %vm432, %vm436
      %vm441 = vmand %vm433, %vm437
      %v442 = vsel %vm438, 1, 0
      %v443 = vsel %vm439, 1, 0
      %v444 = vsel %vm440, 1, 0
      %v445 = vsel %vm441, 1, 0
      %vm446 = vcmp.eq.s32.totalorder %v442, 1
      %vm447 = vcmp.eq.s32.totalorder %v443, 1
      %vm448 = vcmp.eq.s32.totalorder %v444, 1
      %vm449 = vcmp.eq.s32.totalorder %v445, 1
      %v450 = vsel %vm446, %v416, 0.0
      %v451 = vsel %vm447, %v417, 0.0
      %v452 = vsel %vm448, %v418, 0.0
      %v453 = vsel %vm449, %v419, 0.0
      %vm456 = vcmask 1046528
      %v457 = vrot.slane %v451, 1
      %v458 = vrot.slane %v452, 1
      %v459 = vsel %vm456, %v457, %v458
      %vm461 = vcmask 1045504
      %v462 = vrot.slane %v451, 2
      %v463 = vrot.slane %v452, 2
      %v464 = vsel %vm461, %v462, %v463
      %v465 = vrot.slane %v453, 2
      %v466 = vsel %vm461, %v463, %v465
      %v467 = vld [vmem:[%s2] sm:$0xff]
      %v468 = vld [vmem:[%s2 + $0x8] sm:$0xff]
      %v469 = vld [vmem:[%s2 + $0x10] sm:$0xff]
      %v470 = vld [vmem:[%s2 + $0x18] sm:$0xff]
      %v471 = vld [vmem:[%s2 + $0x20] sm:$0xff]
      %v472 = vld [vmem:[%s2 + $0x28] sm:$0xff]
      %v473 = vld [vmem:[%s2 + $0x30] sm:$0xff]
      %v474 = vld [vmem:[%s2 + $0x38] sm:$0xff]
      %v475 = vld [vmem:[%s2 + $0x40] sm:$0xff]
      %v476 = vld [vmem:[%s2 + $0x48] sm:$0xff]
      %v477 = vld [vmem:[%s2 + $0x50] sm:$0xff]
      %v478 = vld [vmem:[%s2 + $0x58] sm:$0xff]
      %v479 = vld [vmem:[%s2 + $0x60] sm:$0xff]
      %v480 = vld [vmem:[%s2 + $0x68] sm:$0xff]
      %v481 = vld [vmem:[%s2 + $0x70] sm:$0xff]
      %v482 = vld [vmem:[%s2 + $0x78] sm:$0xff]
      %v483 = vld [vmem:[%s2 + $0x80] sm:$0xff]
      %v484 = vld [vmem:[%s2 + $0x88] sm:$0xff]
      %v485 = vld [vmem:[%s2 + $0x90] sm:$0xff]
      %v486 = vld [vmem:[%s2 + $0x98] sm:$0xff]
      %v487 = vld [vmem:[%s2 + $0xa0] sm:$0xff]
      %v488 = vld [vmem:[%s2 + $0xa8] sm:$0xff]
      %v489 = vld [vmem:[%s2 + $0xb0] sm:$0xff]
      %v490 = vld [vmem:[%s2 + $0xb8] sm:$0xff]
      %v491 = vld [vmem:[%s2 + $0xc0] sm:$0xff]
      %v492 = vld [vmem:[%s2 + $0xc8] sm:$0xff]
      %v493 = vld [vmem:[%s2 + $0xd0] sm:$0xff]
      %v494 = vld [vmem:[%s2 + $0xd8] sm:$0xff]
      %v495 = vld [vmem:[%s2 + $0xe0] sm:$0xff]
      %v496 = vld [vmem:[%s2 + $0xe8] sm:$0xff]
      %v497 = vld [vmem:[%s2 + $0xf0] sm:$0xff]
      %v498 = vld [vmem:[%s2 + $0xf8] sm:$0xff]
      %v499 = vld [vmem:[%s2 + $0x100] sm:$0xff]
      %v500 = vld [vmem:[%s2 + $0x108] sm:$0xff]
      %v501 = vld [vmem:[%s2 + $0x110] sm:$0xff]
      %v502 = vld [vmem:[%s2 + $0x118] sm:$0xff]
      %v503 = vld [vmem:[%s2 + $0x120] sm:$0xff]
      %v504 = vld [vmem:[%s2 + $0x128] sm:$0xff]
      %v505 = vld [vmem:[%s2 + $0x130] sm:$0xff]
      %v506 = vld [vmem:[%s2 + $0x138] sm:$0xff]
      %v507 = vld [vmem:[%s2 + $0x140] sm:$0xff]
      %v508 = vld [vmem:[%s2 + $0x148] sm:$0xff]
      %v509 = vld [vmem:[%s2 + $0x150] sm:$0xff]
      %v510 = vld [vmem:[%s2 + $0x158] sm:$0xff]
      %v511 = vld [vmem:[%s2 + $0x160] sm:$0xff]
      %v512 = vld [vmem:[%s2 + $0x168] sm:$0xff]
      %v513 = vld [vmem:[%s2 + $0x170] sm:$0xff]
      %v514 = vld [vmem:[%s2 + $0x178] sm:$0xff]
      %v515 = vld [vmem:[%s5] sm:$0x1]
      %v517 = vlaneseq
      %v518 = vshrl.u32 %v517, 7
      %v519 = vsub.s32 0, %v518
      %v520 = vrot.slane %v515, %v519
      %vm523 = vcmask 1040384
      %v524 = vrot.slane %v450, 7
      %v525 = vrot.slane %v451, 7
      %v526 = vsel %vm523, %v524, %v525
      %v527 = vrot.slane %v457, 7
      %v528 = vrot.slane %v459, 7
      %v529 = vsel %vm523, %v527, %v528
      %v530 = vrot.slane %v462, 7
      %v531 = vrot.slane %v464, 7
      %v532 = vsel %vm523, %v530, %v531
      %v533 = vrot.slane %v452, 7
      %v534 = vsel %vm523, %v525, %v533
      %v535 = vrot.slane %v458, 7
      %v536 = vsel %vm523, %v528, %v535
      %v537 = vrot.slane %v466, 7
      %v538 = vsel %vm523, %v531, %v537
      %545 = vmatprep.subr.mxu0 0.0
      %546 = vmatpush1.msra.mxu0 %v467
      %547 = vmatprep.subr.mxu0 0.0
      %548 = vmatpush1.msra.mxu0 %v468
      %549 = vmatprep.subr.mxu0 0.0
      %550 = vmatpush1.msra.mxu0 %v469
      %551 = vmatprep.subr.mxu0 0.0
      %552 = vmatpush1.msra.mxu0 %v470
      %553 = vmatprep.subr.mxu0 0.0
      %554 = vmatpush1.msra.mxu0 %v471
      %555 = vmatprep.subr.mxu0 0.0
      %556 = vmatpush1.msra.mxu0 %v472
      %557 = vmatprep.subr.mxu0 0.0
      %558 = vmatpush1.msra.mxu0 %v473
      %559 = vmatprep.subr.mxu0 0.0
      %560 = vmatpush1.msra.mxu0 %v474
      %561 = vmatprep.subr.mxu0 0.0
      %562 = vmatpush1.msra.mxu0 %v475
      %563 = vmatprep.subr.mxu0 0.0
      %564 = vmatpush1.msra.mxu0 %v476
      %565 = vmatprep.subr.mxu0 0.0
      %566 = vmatpush1.msra.mxu0 %v477
      %567 = vmatprep.subr.mxu0 0.0
      %568 = vmatpush1.msra.mxu0 %v478
      %569 = vmatprep.subr.mxu0 0.0
      %570 = vmatpush1.msra.mxu0 %v479
      %571 = vmatprep.subr.mxu0 0.0
      %572 = vmatpush1.msra.mxu0 %v480
      %573 = vmatprep.subr.mxu0 0.0
      %574 = vmatpush1.msra.mxu0 %v481
      %575 = vmatprep.subr.mxu0 0.0
      %576 = vmatpush1.msra.mxu0 %v482
      %577 = vmatprep.subr.mxu0 0.0
      %578 = vmatpush1.msra.mxu0 %v483
      %579 = vmatprep.subr.mxu0 0.0
      %580 = vmatpush1.msra.mxu0 %v484
      %581 = vmatprep.subr.mxu0 0.0
      %582 = vmatpush1.msra.mxu0 %v485
      %583 = vmatprep.subr.mxu0 0.0
      %584 = vmatpush1.msra.mxu0 %v486
      %585 = vmatprep.subr.mxu0 0.0
      %586 = vmatpush1.msra.mxu0 %v487
      %587 = vmatprep.subr.mxu0 0.0
      %588 = vmatpush1.msra.mxu0 %v488
      %589 = vmatprep.subr.mxu0 0.0
      %590 = vmatpush1.msra.mxu0 %v489
      %591 = vmatprep.subr.mxu0 0.0
      %592 = vmatpush1.msra.mxu0 %v490
      %593 = vmatprep.subr.mxu0 0.0
      %594 = vmatpush1.msra.mxu0 %v491
      %595 = vmatprep.subr.mxu0 0.0
      %596 = vmatpush1.msra.mxu0 %v492
      %597 = vmatprep.subr.mxu0 0.0
      %598 = vmatpush1.msra.mxu0 %v493
      %599 = vmatprep.subr.mxu0 0.0
      %600 = vmatpush1.msra.mxu0 %v494
      %601 = vmatprep.subr.mxu0 0.0
      %602 = vmatpush1.msra.mxu0 %v495
      %603 = vmatprep.subr.mxu0 0.0
      %604 = vmatpush1.msra.mxu0 %v496
      %605 = vmatprep.subr.mxu0 0.0
      %606 = vmatpush1.msra.mxu0 %v497
      %607 = vmatprep.subr.mxu0 0.0
      %608 = vmatpush1.msra.mxu0 %v498
      %609 = vmatprep.mubr.f32.mxu0 %v529
      %610 = vmatmul.mubr.f32.gmra.mrb[0].mxu0 %v526
      %v611 = vpop.f32.mrb[0].mxu0
      %v612 = vadd.f32 %v520, %v611
      %v613 = vpop.f32.mrb[0].mxu0
      %614 = vmatprep.mubr.f32.mxu0 %v536
      %615 = vmatmul.mubr.f32.gmra.mrb[0].mxu0 %v534
      %v616 = vpop.f32.mrb[0].mxu0
      %v617 = vadd.f32 %v520, %v616
      %v618 = vpop.f32.mrb[0].mxu0
      %619 = vdwg.mxu0
      %620 = vmatprep.subr.mxu0 0.0
      %621 = vmatpush1.msra.mxu0 %v499
      %622 = vmatprep.subr.mxu0 0.0
      %623 = vmatpush1.msra.mxu0 %v500
      %624 = vmatprep.subr.mxu0 0.0
      %625 = vmatpush1.msra.mxu0 %v501
      %626 = vmatprep.subr.mxu0 0.0
      %627 = vmatpush1.msra.mxu0 %v502
      %628 = vmatprep.subr.mxu0 0.0
      %629 = vmatpush1.msra.mxu0 %v503
      %630 = vmatprep.subr.mxu0 0.0
      %631 = vmatpush1.msra.mxu0 %v504
      %632 = vmatprep.subr.mxu0 0.0
      %633 = vmatpush1.msra.mxu0 %v505
      %634 = vmatprep.subr.mxu0 0.0
      %635 = vmatpush1.msra.mxu0 %v506
      %636 = vmatprep.subr.mxu0 0.0
      %637 = vmatpush1.msra.mxu0 %v507
      %638 = vmatprep.subr.mxu0 0.0
      %639 = vmatpush1.msra.mxu0 %v508
      %640 = vmatprep.subr.mxu0 0.0
      %641 = vmatpush1.msra.mxu0 %v509
      %642 = vmatprep.subr.mxu0 0.0
      %643 = vmatpush1.msra.mxu0 %v510
      %644 = vmatprep.subr.mxu0 0.0
      %645 = vmatpush1.msra.mxu0 %v511
      %646 = vmatprep.subr.mxu0 0.0
      %647 = vmatpush1.msra.mxu0 %v512
      %648 = vmatprep.subr.mxu0 0.0
      %649 = vmatpush1.msra.mxu0 %v513
      %650 = vmatprep.subr.mxu0 0.0
      %651 = vmatpush1.msra.mxu0 %v514
      %652 = vmatprep.subr.mxu0 0.0
      %653 = vmatpush1.msra.mxu0 0.0
      %654 = vmatprep.subr.mxu0 0.0
      %655 = vmatpush1.msra.mxu0 0.0
      %656 = vmatprep.subr.mxu0 0.0
      %657 = vmatpush1.msra.mxu0 0.0
      %658 = vmatprep.subr.mxu0 0.0
      %659 = vmatpush1.msra.mxu0 0.0
      %660 = vmatprep.subr.mxu0 0.0
      %661 = vmatpush1.msra.mxu0 0.0
      %662 = vmatprep.subr.mxu0 0.0
      %663 = vmatpush1.msra.mxu0 0.0
      %664 = vmatprep.subr.mxu0 0.0
      %665 = vmatpush1.msra.mxu0 0.0
      %666 = vmatprep.subr.mxu0 0.0
      %667 = vmatpush1.msra.mxu0 0.0
      %668 = vmatprep.subr.mxu0 0.0
      %669 = vmatpush1.msra.mxu0 0.0
      %670 = vmatprep.subr.mxu0 0.0
      %671 = vmatpush1.msra.mxu0 0.0
      %672 = vmatprep.subr.mxu0 0.0
      %673 = vmatpush1.msra.mxu0 0.0
      %674 = vmatprep.subr.mxu0 0.0
      %675 = vmatpush1.msra.mxu0 0.0
      %676 = vmatprep.subr.mxu0 0.0
      %677 = vmatpush1.msra.mxu0 0.0
      %678 = vmatprep.subr.mxu0 0.0
      %679 = vmatpush1.msra.mxu0 0.0
      %680 = vmatprep.subr.mxu0 0.0
      %681 = vmatpush1.msra.mxu0 0.0
      %682 = vmatprep.subr.mxu0 0.0
      %683 = vmatpush1.msra.mxu0 0.0
      %684 = vmatprep.mubr.f32.mxu0 0.0
      %685 = vmatmul.mubr.f32.gmra.mrb[0].mxu0 %v532
      %v686 = vpop.f32.mrb[0].mxu0
      %v687 = vadd.f32 %v612, %v686
      %v688 = vpop.f32.mrb[0].mxu0
      %689 = vmatprep.mubr.f32.mxu0 0.0
      %690 = vmatmul.mubr.f32.gmra.mrb[0].mxu0 %v538
      %v691 = vpop.f32.mrb[0].mxu0
      %v692 = vadd.f32 %v617, %v691
      %v693 = vpop.f32.mrb[0].mxu0
      %694 = vdwg.mxu0
      %v695 = vmax.f32 %v687, 0.0
      %v696 = vmax.f32 %v692, 0.0
      %v697 = vld [vmem:[%s3] sm:$0xff]
      %v698 = vld [vmem:[%s3 + $0x8] sm:$0xff]
      %v699 = vld [vmem:[%s3 + $0x10] sm:$0xff]
      %v700 = vld [vmem:[%s3 + $0x18] sm:$0xff]
      %v701 = vld [vmem:[%s3 + $0x20] sm:$0xff]
      %v702 = vld [vmem:[%s3 + $0x28] sm:$0xff]
      %v703 = vld [vmem:[%s3 + $0x30] sm:$0xff]
      %v704 = vld [vmem:[%s3 + $0x38] sm:$0xff]
      %v705 = vld [vmem:[%s3 + $0x40] sm:$0xff]
      %v706 = vld [vmem:[%s3 + $0x48] sm:$0xff]
      %v707 = vld [vmem:[%s3 + $0x50] sm:$0xff]
      %v708 = vld [vmem:[%s3 + $0x58] sm:$0xff]
      %v709 = vld [vmem:[%s3 + $0x60] sm:$0xff]
      %v710 = vld [vmem:[%s3 + $0x68] sm:$0xff]
      %v711 = vld [vmem:[%s3 + $0x70] sm:$0xff]
      %v712 = vld [vmem:[%s3 + $0x78] sm:$0xff]
      %v713 = vld [vmem:[%s6] sm:$0x1]
      %v715 = vlaneseq
      %v716 = vshrl.u32 %v715, 7
      %v717 = vsub.s32 0, %v716
      %v718 = vrot.slane %v713, %v717
      %720 = vmatprep.subr.mxu0 0.0
      %721 = vmatpush1.msra.mxu0 %v697
      %722 = vmatprep.subr.mxu0 0.0
      %723 = vmatpush1.msra.mxu0 %v698
      %724 = vmatprep.subr.mxu0 0.0
      %725 = vmatpush1.msra.mxu0 %v699
      %726 = vmatprep.subr.mxu0 0.0
      %727 = vmatpush1.msra.mxu0 %v700
      %728 = vmatprep.subr.mxu0 0.0
      %729 = vmatpush1.msra.mxu0 %v701
      %730 = vmatprep.subr.mxu0 0.0
      %731 = vmatpush1.msra.mxu0 %v702
      %732 = vmatprep.subr.mxu0 0.0
      %733 = vmatpush1.msra.mxu0 %v703
      %734 = vmatprep.subr.mxu0 0.0
      %735 = vmatpush1.msra.mxu0 %v704
      %736 = vmatprep.subr.mxu0 0.0
      %737 = vmatpush1.msra.mxu0 %v705
      %738 = vmatprep.subr.mxu0 0.0
      %739 = vmatpush1.msra.mxu0 %v706
      %740 = vmatprep.subr.mxu0 0.0
      %741 = vmatpush1.msra.mxu0 %v707
      %742 = vmatprep.subr.mxu0 0.0
      %743 = vmatpush1.msra.mxu0 %v708
      %744 = vmatprep.subr.mxu0 0.0
      %745 = vmatpush1.msra.mxu0 %v709
      %746 = vmatprep.subr.mxu0 0.0
      %747 = vmatpush1.msra.mxu0 %v710
      %748 = vmatprep.subr.mxu0 0.0
      %749 = vmatpush1.msra.mxu0 %v711
      %750 = vmatprep.subr.mxu0 0.0
      %751 = vmatpush1.msra.mxu0 %v712
      %752 = vmatprep.subr.mxu0 0.0
      %753 = vmatpush1.msra.mxu0 0.0
      %754 = vmatprep.subr.mxu0 0.0
      %755 = vmatpush1.msra.mxu0 0.0
      %756 = vmatprep.subr.mxu0 0.0
      %757 = vmatpush1.msra.mxu0 0.0
      %758 = vmatprep.subr.mxu0 0.0
      %759 = vmatpush1.msra.mxu0 0.0
      %760 = vmatprep.subr.mxu0 0.0
      %761 = vmatpush1.msra.mxu0 0.0
      %762 = vmatprep.subr.mxu0 0.0
      %763 = vmatpush1.msra.mxu0 0.0
      %764 = vmatprep.subr.mxu0 0.0
      %765 = vmatpush1.msra.mxu0 0.0
      %766 = vmatprep.subr.mxu0 0.0
      %767 = vmatpush1.msra.mxu0 0.0
      %768 = vmatprep.subr.mxu0 0.0
      %769 = vmatpush1.msra.mxu0 0.0
      %770 = vmatprep.subr.mxu0 0.0
      %771 = vmatpush1.msra.mxu0 0.0
      %772 = vmatprep.subr.mxu0 0.0
      %773 = vmatpush1.msra.mxu0 0.0
      %774 = vmatprep.subr.mxu0 0.0
      %775 = vmatpush1.msra.mxu0 0.0
      %776 = vmatprep.subr.mxu0 0.0
      %777 = vmatpush1.msra.mxu0 0.0
      %778 = vmatprep.subr.mxu0 0.0
      %779 = vmatpush1.msra.mxu0 0.0
      %780 = vmatprep.subr.mxu0 0.0
      %781 = vmatpush1.msra.mxu0 0.0
      %782 = vmatprep.subr.mxu0 0.0
      %783 = vmatpush1.msra.mxu0 0.0
      %784 = vmatprep.mubr.f32.mxu0 0.0
      %785 = vmatmul.mubr.f32.gmra.mrb[0].mxu0 %v695
      %v786 = vpop.f32.mrb[0].mxu0
      %v787 = vadd.f32 %v718, %v786
      %v788 = vpop.f32.mrb[0].mxu0
      %789 = vmatprep.mubr.f32.mxu0 0.0
      %790 = vmatmul.mubr.f32.gmra.mrb[0].mxu0 %v696
      %v791 = vpop.f32.mrb[0].mxu0
      %v792 = vadd.f32 %v718, %v791
      %v793 = vpop.f32.mrb[0].mxu0
      %794 = vdwg.mxu0
      %s795 = sadd.s32 %s302, 8
      %s796 = scalar_lea.vmem %s291, %s795
      %v797 = vld [vmem:[%s796] sm:$0xff]
      %v798 = vld [vmem:[%s796 + $0x8] sm:$0xff]
      %v799 = vadd.f32 %v787, %v797
      %v800 = vadd.f32 %v792, %v798
      %v801 = vmax.f32 %v799, 0.0
      %v802 = vmax.f32 %v800, 0.0
      %803 = vst [vmem:[%s300] sm:$0xff] %v801
      %804 = vst [vmem:[%s300 + $0x8] sm:$0xff] %v802
      %s805 = smul.u32 2, %s23
      %p806 = scmp.lt.s32.totalorder %s22, 1
      %s807 = scalar_select %p806, %s22, 1
      %p808 = scmp.lt.s32.totalorder %s805, 1
      %s809 = scalar_select %p808, %s805, 1
      %s810 = smul.addr %s807, 2
      %s811 = sadd.s32 %s809, %s810
      %s812 = smul.addr %s811, 8
      %s813 = scalar_lea.vmem %s7, %s812
      // Predicated region
      $region49: #{_bottleneck_impl.1} parent=47 // pred_check
        %p814 = pneg %p202
      $region50: #{_bottleneck_impl.1} parent=47 // pred_check_branch
        %816 = sbr.rel (%p814) target = $region52
      $region51: #{_bottleneck_impl.1} parent=47 // pred_region
        %s817 = smul.u32 2, %s23
      $region52: #{_bottleneck_impl.1} parent=47 // pred_fallthru
        _
    $region48: #{_bottleneck_impl.1} parent=5 // pred_fallthru
      _
    %p818 = scmp.le.s32.totalorder 2, %s13
    // Predicated region
    $region53: #{_bottleneck_impl.1} parent=5 // pred_check
      %p819 = pneg %p818
    $region54: #{_bottleneck_impl.1} parent=5 // pred_check_branch
      %821 = sbr.rel (%p819) target = $region56
    $region55: #{_bottleneck_impl.1} parent=5 // pred_region
      %s822 = ssub.s32 %s13, 2
      // Predicated region
      $region57: #{_bottleneck_impl.1} parent=55 // pred_check
        %p823 = pneg %p208
      $region58: #{_bottleneck_impl.1} parent=55 // pred_check_branch
        %825 = sbr.rel (%p823) target = $region60
      $region59: #{_bottleneck_impl.1} parent=55 // pred_region
        %s826 = smul.u32 2, %s25
        %p827 = scmp.lt.s32.totalorder %s24, 1
        %s828 = scalar_select %p827, %s24, 1
        %p829 = scmp.lt.s32.totalorder %s826, 1
        %s830 = scalar_select %p829, %s826, 1
        %s831 = smul.addr %s828, 2
        %s832 = sadd.s32 %s830, %s831
        %s833 = smul.addr %s832, 8
        %s834 = scalar_lea.vmem %s7, %s833
      $region60: #{_bottleneck_impl.1} parent=55 // pred_fallthru
        _
    $region56: #{_bottleneck_impl.1} parent=5 // pred_fallthru
      _
  $region6: #{_bottleneck_impl.1} parent=0 // loop_footer
    %s17 = sadd.s32 1, %s13
  $region7: #{_bottleneck_impl.1} parent=0 // loop_footer_branch
    %12 = sbr.rel target = $region3
  $region8: #{_bottleneck_impl.1} parent=0 // loop_exit
    _

// kernel: _bottleneck_impl.1
$region0: #{_bottleneck_impl.1}
  #allocation0 [shape = 'u32[]', space=smem, size = 0x4, offset = 0x4, fixed_abs, tag = 'smem constant byte address 0x4 - core index']
  #allocation1 [shape = 'u32[144,128]{1,0:T(1,128)}', space=vmem, size = 0x12000, scoped, tag = 'internal scratch']
  %s0 = inlined_call_operand.vmem [shape: f32[2,32,128], index: 0, kind: input, shape index: {}]
  %s1 = inlined_call_operand.vmem [shape: f32[128,128], index: 1, kind: input, shape index: {}]
  %s2 = inlined_call_operand.vmem [shape: f32[384,128], index: 2, kind: input, shape index: {}]
  %s3 = inlined_call_operand.vmem [shape: f32[128,128], index: 3, kind: input, shape index: {}]
  %s4 = inlined_call_operand.vmem [shape: f32[1,128], index: 4, kind: input, shape index: {}]
  %s5 = inlined_call_operand.vmem [shape: f32[1,128], index: 5, kind: input, shape index: {}]
  %s6 = inlined_call_operand.vmem [shape: f32[1,128], index: 6, kind: input, shape index: {}]
  %s7 = inlined_call_operand.vmem [shape: f32[2,16,128], index: 7, kind: output, shape index: {}]
  %s8 = sld [smem:[#allocation0]]
  $region61: #{_bottleneck_impl.1} parent=0
    _
  %s10 = ssub.s32 1, %s8
  %s11 = scalar_select 0, %s10, %s8
  loop: start=0, step=1, limit=4
  $region2: #{_bottleneck_impl.1} parent=0 // loop_pre_header
    _
  $region3: #{_bottleneck_impl.1} parent=0 // loop_header
    %s13 = sphi 0, %s17
    %p14 = scmp.ge.s32.totalorder %s13, 4
    %s20 = sphi 0, %s32
    %s21 = sphi 0, %s28
    %s22 = sphi 0, %s20
    %s23 = sphi 0, %s21
    %s24 = sphi 0, %s22
    %s25 = sphi 0, %s23
    %s35 = sphi 0, %s37
    %s38 = sphi 0, %s35
    %s39 = sphi 0, %s38
    %s55 = sphi 0, %s39
    %s59 = sphi 0, %s59
    %s61 = sphi 0, %s59
    %s62 = sphi 0, %s61
    %s76 = sphi 0, %s62
    %s80 = sphi 0, %s80
    %s82 = sphi 0, %s80
    %s83 = sphi 0, %s82
    %s97 = sphi 0, %s83
    %s101 = sphi 0, %s101
    %s103 = sphi 0, %s101
    %s104 = sphi 0, %s103
    %s118 = sphi 0, %s104
    %s122 = sphi 0, %s122
    %s124 = sphi 0, %s122
    %s125 = sphi 0, %s124
    %s139 = sphi 0, %s125
    %s143 = sphi 0, %s143
    %s145 = sphi 0, %s143
    %s146 = sphi 0, %s145
    %s160 = sphi 0, %s146
    %s164 = sphi 0, %s164
    %s166 = sphi 0, %s164
    %s167 = sphi 0, %s166
    %s181 = sphi 0, %s167
    %s189 = sphi 0, %s191
    %s192 = sphi 0, %s189
    %s193 = sphi 0, %s192
    %s209 = sphi 0, %s193
  $region4: #{_bottleneck_impl.1} parent=0 // loop_header_branch
    %16 = sbr.rel (%p14) target = $region8
  $region5: #{_bottleneck_impl.1} parent=0 // loop_body
    %s18 = ssub.s32 %s13, 1
    %s19 = ssub.s32 %s13, 2
    %s26 = sadd.s32 1, %s21
    %p27 = scmp.ge.s32.totalorder %s26, 1
    %s28 = scalar_select %p27, 0, %s26
    %s29 = sadd.s32 1, %s20
    %s30 = scalar_select %p27, %s29, %s20
    %p31 = scmp.ge.s32.totalorder %s30, 2
    %s32 = scalar_select %p31, 0, %s30
    %s33 = ssub.s32 %s20, %s32
    %p34 = scmp.eq.s32.totalorder %s33, 0
    %s36 = sadd.s32 %s35, 1
    %s37 = scalar_select %p34, %s35, %s36
    %p40 = pneg %p34
    %p41 = scmp.eq.s32.totalorder %s13, 1
    %p42 = por %p40, %p41
    %p43 = scmp.ne.s32.totalorder %s35, %s38
    %p44 = scmp.eq.s32.totalorder %s13, 0
    %p45 = por %p43, %p44
    %p46 = scmp.ne.s32.totalorder %s35, %s38
    %p47 = scmp.eq.s32.totalorder %s18, 1
    %p48 = por %p46, %p47
    %p49 = scmp.ne.s32.totalorder %s38, %s39
    %p50 = scmp.eq.s32.totalorder %s18, 0
    %p51 = por %p49, %p50
    %p52 = scmp.ne.s32.totalorder %s38, %s39
    %p53 = scmp.eq.s32.totalorder %s19, 1
    %p54 = por %p52, %p53
    %p56 = scmp.ne.s32.totalorder %s39, %s55
    %p57 = scmp.eq.s32.totalorder %s19, 0
    %p58 = por %p56, %p57
    %s60 = sadd.s32 %s59, 1
    %p63 = scmp.eq.s32.totalorder %s13, 1
    %p64 = scmp.ne.s32.totalorder %s59, %s61
    %p65 = scmp.eq.s32.totalorder %s13, 0
    %p66 = por %p64, %p65
    %p67 = scmp.ne.s32.totalorder %s59, %s61
    %p68 = scmp.eq.s32.totalorder %s18, 1
    %p69 = por %p67, %p68
    %p70 = scmp.ne.s32.totalorder %s61, %s62
    %p71 = scmp.eq.s32.totalorder %s18, 0
    %p72 = por %p70, %p71
    %p73 = scmp.ne.s32.totalorder %s61, %s62
    %p74 = scmp.eq.s32.totalorder %s19, 1
    %p75 = por %p73, %p74
    %p77 = scmp.ne.s32.totalorder %s62, %s76
    %p78 = scmp.eq.s32.totalorder %s19, 0
    %p79 = por %p77, %p78
    %s81 = sadd.s32 %s80, 1
    %p84 = scmp.eq.s32.totalorder %s13, 1
    %p85 = scmp.ne.s32.totalorder %s80, %s82
    %p86 = scmp.eq.s32.totalorder %s13, 0
    %p87 = por %p85, %p86
    %p88 = scmp.ne.s32.totalorder %s80, %s82
    %p89 = scmp.eq.s32.totalorder %s18, 1
    %p90 = por %p88, %p89
    %p91 = scmp.ne.s32.totalorder %s82, %s83
    %p92 = scmp.eq.s32.totalorder %s18, 0
    %p93 = por %p91, %p92
    %p94 = scmp.ne.s32.totalorder %s82, %s83
    %p95 = scmp.eq.s32.totalorder %s19, 1
    %p96 = por %p94, %p95
    %p98 = scmp.ne.s32.totalorder %s83, %s97
    %p99 = scmp.eq.s32.totalorder %s19, 0
    %p100 = por %p98, %p99
    %s102 = sadd.s32 %s101, 1
    %p105 = scmp.eq.s32.totalorder %s13, 1
    %p106 = scmp.ne.s32.totalorder %s101, %s103
    %p107 = scmp.eq.s32.totalorder %s13, 0
    %p108 = por %p106, %p107
    %p109 = scmp.ne.s32.totalorder %s101, %s103
    %p110 = scmp.eq.s32.totalorder %s18, 1
    %p111 = por %p109, %p110
    %p112 = scmp.ne.s32.totalorder %s103, %s104
    %p113 = scmp.eq.s32.totalorder %s18, 0
    %p114 = por %p112, %p113
    %p115 = scmp.ne.s32.totalorder %s103, %s104
    %p116 = scmp.eq.s32.totalorder %s19, 1
    %p117 = por %p115, %p116
    %p119 = scmp.ne.s32.totalorder %s104, %s118
    %p120 = scmp.eq.s32.totalorder %s19, 0
    %p121 = por %p119, %p120
    %s123 = sadd.s32 %s122, 1
    %p126 = scmp.eq.s32.totalorder %s13, 1
    %p127 = scmp.ne.s32.totalorder %s122, %s124
    %p128 = scmp.eq.s32.totalorder %s13, 0
    %p129 = por %p127, %p128
    %p130 = scmp.ne.s32.totalorder %s122, %s124
    %p131 = scmp.eq.s32.totalorder %s18, 1
    %p132 = por %p130, %p131
    %p133 = scmp.ne.s32.totalorder %s124, %s125
    %p134 = scmp.eq.s32.totalorder %s18, 0
    %p135 = por %p133, %p134
    %p136 = scmp.ne.s32.totalorder %s124, %s125
    %p137 = scmp.eq.s32.totalorder %s19, 1
    %p138 = por %p136, %p137
    %p140 = scmp.ne.s32.totalorder %s125, %s139
    %p141 = scmp.eq.s32.totalorder %s19, 0
    %p142 = por %p140, %p141
    %s144 = sadd.s32 %s143, 1
    %p147 = scmp.eq.s32.totalorder %s13, 1
    %p148 = scmp.ne.s32.totalorder %s143, %s145
    %p149 = scmp.eq.s32.totalorder %s13, 0
    %p150 = por %p148, %p149
    %p151 = scmp.ne.s32.totalorder %s143, %s145
    %p152 = scmp.eq.s32.totalorder %s18, 1
    %p153 = por %p151, %p152
    %p154 = scmp.ne.s32.totalorder %s145, %s146
    %p155 = scmp.eq.s32.totalorder %s18, 0
    %p156 = por %p154, %p155
    %p157 = scmp.ne.s32.totalorder %s145, %s146
    %p158 = scmp.eq.s32.totalorder %s19, 1
    %p159 = por %p157, %p158
    %p161 = scmp.ne.s32.totalorder %s146, %s160
    %p162 = scmp.eq.s32.totalorder %s19, 0
    %p163 = por %p161, %p162
    %s165 = sadd.s32 %s164, 1
    %p168 = scmp.eq.s32.totalorder %s13, 1
    %p169 = scmp.ne.s32.totalorder %s164, %s166
    %p170 = scmp.eq.s32.totalorder %s13, 0
    %p171 = por %p169, %p170
    %p172 = scmp.ne.s32.totalorder %s164, %s166
    %p173 = scmp.eq.s32.totalorder %s18, 1
    %p174 = por %p172, %p173
    %p175 = scmp.ne.s32.totalorder %s166, %s167
    %p176 = scmp.eq.s32.totalorder %s18, 0
    %p177 = por %p175, %p176
    %p178 = scmp.ne.s32.totalorder %s166, %s167
    %p179 = scmp.eq.s32.totalorder %s19, 1
    %p180 = por %p178, %p179
    %p182 = scmp.ne.s32.totalorder %s167, %s181
    %p183 = scmp.eq.s32.totalorder %s19, 0
    %p184 = por %p182, %p183
    %s185 = ssub.s32 %s20, %s32
    %s186 = ssub.s32 %s21, %s28
    %s187 = sor.u32 %s185, %s186
    %p188 = scmp.eq.s32.totalorder %s187, 0
    %s190 = sadd.s32 %s189, 1
    %s191 = scalar_select %p188, %s189, %s190
    %p194 = pneg %p188
    %p195 = scmp.eq.s32.totalorder %s13, 1
    %p196 = por %p194, %p195
    %p197 = scmp.ne.s32.totalorder %s189, %s192
    %p198 = scmp.eq.s32.totalorder %s13, 0
    %p199 = por %p197, %p198
    %p200 = scmp.ne.s32.totalorder %s189, %s192
    %p201 = scmp.eq.s32.totalorder %s18, 1
    %p202 = por %p200, %p201
    %p203 = scmp.ne.s32.totalorder %s192, %s193
    %p204 = scmp.eq.s32.totalorder %s18, 0
    %p205 = por %p203, %p204
    %p206 = scmp.ne.s32.totalorder %s192, %s193
    %p207 = scmp.eq.s32.totalorder %s19, 1
    %p208 = por %p206, %p207
    %p210 = scmp.ne.s32.totalorder %s193, %s209
    %p211 = scmp.eq.s32.totalorder %s19, 0
    %p212 = por %p210, %p211
    %p213 = scmp.le.s32.totalorder 1, %s13
    %p214 = scmp.lt.s32.totalorder %s13, 3
    %p215 = pnand %p213, %p214
    %p216 = pneg %p215
    // Predicated region
    $region9: #{_bottleneck_impl.1} parent=5 // pred_check
      _
    $region10: #{_bottleneck_impl.1} parent=5 // pred_check_branch
      %218 = sbr.rel (%p215) target = $region12
    $region11: #{_bottleneck_impl.1} parent=5 // pred_region
      %s219 = ssub.s32 %s13, 1
      // Predicated region
      $region13: #{_bottleneck_impl.1} parent=11 // pred_check
        %p220 = pneg %p72
      $region14: #{_bottleneck_impl.1} parent=11 // pred_check_branch
        %222 = sbr.rel (%p220) target = $region16
      $region15: #{_bottleneck_impl.1} parent=11 // pred_region
        _
      $region16: #{_bottleneck_impl.1} parent=11 // pred_fallthru
        _
      // Predicated region
      $region17: #{_bottleneck_impl.1} parent=11 // pred_check
        %p223 = pneg %p93
      $region18: #{_bottleneck_impl.1} parent=11 // pred_check_branch
        %225 = sbr.rel (%p223) target = $region20
      $region19: #{_bottleneck_impl.1} parent=11 // pred_region
        _
      $region20: #{_bottleneck_impl.1} parent=11 // pred_fallthru
        _
      // Predicated region
      $region21: #{_bottleneck_impl.1} parent=11 // pred_check
        %p226 = pneg %p114
      $region22: #{_bottleneck_impl.1} parent=11 // pred_check_branch
        %228 = sbr.rel (%p226) target = $region24
      $region23: #{_bottleneck_impl.1} parent=11 // pred_region
        _
      $region24: #{_bottleneck_impl.1} parent=11 // pred_fallthru
        _
      // Predicated region
      $region25: #{_bottleneck_impl.1} parent=11 // pred_check
        %p229 = pneg %p135
      $region26: #{_bottleneck_impl.1} parent=11 // pred_check_branch
        %231 = sbr.rel (%p229) target = $region28
      $region27: #{_bottleneck_impl.1} parent=11 // pred_region
        _
      $region28: #{_bottleneck_impl.1} parent=11 // pred_fallthru
        _
      // Predicated region
      $region29: #{_bottleneck_impl.1} parent=11 // pred_check
        %p232 = pneg %p156
      $region30: #{_bottleneck_impl.1} parent=11 // pred_check_branch
        %234 = sbr.rel (%p232) target = $region32
      $region31: #{_bottleneck_impl.1} parent=11 // pred_region
        _
      $region32: #{_bottleneck_impl.1} parent=11 // pred_fallthru
        _
      // Predicated region
      $region33: #{_bottleneck_impl.1} parent=11 // pred_check
        %p235 = pneg %p177
      $region34: #{_bottleneck_impl.1} parent=11 // pred_check_branch
        %237 = sbr.rel (%p235) target = $region36
      $region35: #{_bottleneck_impl.1} parent=11 // pred_region
        _
      $region36: #{_bottleneck_impl.1} parent=11 // pred_fallthru
        _
    $region12: #{_bottleneck_impl.1} parent=5 // pred_fallthru
      _
    %p238 = scmp.lt.s32.totalorder %s13, 2
    // Predicated region
    $region37: #{_bottleneck_impl.1} parent=5 // pred_check
      %p239 = pneg %p238
    $region38: #{_bottleneck_impl.1} parent=5 // pred_check_branch
      %241 = sbr.rel (%p239) target = $region40
    $region39: #{_bottleneck_impl.1} parent=5 // pred_region
      // Predicated region
      $region41: #{_bottleneck_impl.1} parent=39 // pred_check
        %p242 = pneg %p45
      $region42: #{_bottleneck_impl.1} parent=39 // pred_check_branch
        %244 = sbr.rel (%p242) target = $region44
      $region43: #{_bottleneck_impl.1} parent=39 // pred_region
        %p245 = scmp.lt.s32.totalorder %s20, 1
        %s246 = scalar_select %p245, %s20, 1
        %s247 = smul.addr %s246, 4
        %s248 = smul.addr %s247, 8
        %s249 = scalar_lea.vmem %s0, %s248
      $region44: #{_bottleneck_impl.1} parent=39 // pred_fallthru
        _
    $region40: #{_bottleneck_impl.1} parent=5 // pred_fallthru
      _
    %p250 = scmp.le.s32.totalorder 1, %s13
    %p251 = scmp.lt.s32.totalorder %s13, 3
    %p252 = pnand %p250, %p251
    %p253 = pneg %p252
    // Predicated region
    $region45: #{_bottleneck_impl.1} parent=5 // pred_check
      _
    $region46: #{_bottleneck_impl.1} parent=5 // pred_check_branch
      %255 = sbr.rel (%p252) target = $region48
    $region47: #{_bottleneck_impl.1} parent=5 // pred_region
      %s256 = ssub.s32 %s13, 1
      %p257 = scmp.lt.s32.totalorder %s22, 1
      %s258 = scalar_select %p257, %s22, 1
      %s259 = smul.addr %s258, 4
      %s260 = smul.addr %s259, 8
      %s261 = scalar_lea.vmem %s0, %s260
      %p262 = pneg %p51
      %p263 = pneg %p48
      %p264 = pneg %p72
      %p265 = pneg %p69
      %p266 = pneg %p93
      %p267 = pneg %p90
      %p268 = pneg %p114
      %p269 = pneg %p111
      %p270 = pneg %p135
      %p271 = pneg %p132
      %p272 = pneg %p156
      %p273 = pneg %p153
      %p274 = pneg %p177
      %p275 = pneg %p174
      %p276 = pneg %p205
      %p277 = pneg %p202
      %s278 = smul.u32 2, %s23
      %p279 = scmp.lt.s32.totalorder %s22, 1
      %s280 = scalar_select %p279, %s22, 1
      %p281 = scmp.lt.s32.totalorder %s278, 1
      %s282 = scalar_select %p281, %s278, 1
      %s283 = smul.addr %s280, 2
      %s284 = sadd.s32 %s282, %s283
      %s285 = smul.addr %s284, 8
      %s286 = scalar_lea.vmem %s7, %s285
      %p287 = scmp.lt.s32.totalorder %s22, 1
      %s288 = scalar_select %p287, %s22, 1
      %s289 = smul.addr %s288, 4
      %s290 = smul.addr %s289, 8
      %s291 = scalar_lea.vmem %s0, %s290
      %s292 = smul.u32 2, %s23
      %p293 = scmp.lt.s32.totalorder %s22, 1
      %s294 = scalar_select %p293, %s22, 1
      %p295 = scmp.lt.s32.totalorder %s292, 1
      %s296 = scalar_select %p295, %s292, 1
      %s297 = smul.addr %s294, 2
      %s298 = sadd.s32 %s296, %s297
      %s299 = smul.addr %s298, 8
      %s300 = scalar_lea.vmem %s7, %s299
      %s301 = smul.u32 2, %s23
      %s302 = smul.u32 %s23, 16
      %s303 = scalar_lea.vmem %s291, %s302
      %v304 = vld [vmem:[%s303] sm:$0xff]
      %v305 = vld [vmem:[%s303 + $0x8] sm:$0xff]
      %v306 = vld [vmem:[%s303 + $0x10] sm:$0xff]
      %v307 = vld [vmem:[%s303 + $0x18] sm:$0xff]
      %v308 = vld [vmem:[%s1] sm:$0xff]
      %v309 = vld [vmem:[%s1 + $0x8] sm:$0xff]
      %v310 = vld [vmem:[%s1 + $0x10] sm:$0xff]
      %v311 = vld [vmem:[%s1 + $0x18] sm:$0xff]
      %v312 = vld [vmem:[%s1 + $0x20] sm:$0xff]
      %v313 = vld [vmem:[%s1 + $0x28] sm:$0xff]
      %v314 = vld [vmem:[%s1 + $0x30] sm:$0xff]
      %v315 = vld [vmem:[%s1 + $0x38] sm:$0xff]
      %v316 = vld [vmem:[%s1 + $0x40] sm:$0xff]
      %v317 = vld [vmem:[%s1 + $0x48] sm:$0xff]
      %v318 = vld [vmem:[%s1 + $0x50] sm:$0xff]
      %v319 = vld [vmem:[%s1 + $0x58] sm:$0xff]
      %v320 = vld [vmem:[%s1 + $0x60] sm:$0xff]
      %v321 = vld [vmem:[%s1 + $0x68] sm:$0xff]
      %v322 = vld [vmem:[%s1 + $0x70] sm:$0xff]
      %v323 = vld [vmem:[%s1 + $0x78] sm:$0xff]
      %v324 = vld [vmem:[%s4] sm:$0x1]
      %v326 = vlaneseq
      %v327 = vshrl.u32 %v326, 7
      %v328 = vsub.s32 0, %v327
      %v329 = vrot.slane %v324, %v328
      %331 = vmatprep.subr.mxu0 0.0
      %332 = vmatpush1.msra.mxu0 %v308
      %333 = vmatprep.subr.mxu0 0.0
      %334 = vmatpush1.msra.mxu0 %v309
      %335 = vmatprep.subr.mxu0 0.0
      %336 = vmatpush1.msra.mxu0 %v310
      %337 = vmatprep.subr.mxu0 0.0
      %338 = vmatpush1.msra.mxu0 %v311
      %339 = vmatprep.subr.mxu0 0.0
      %340 = vmatpush1.msra.mxu0 %v312
      %341 = vmatprep.subr.mxu0 0.0
      %342 = vmatpush1.msra.mxu0 %v313
      %343 = vmatprep.subr.mxu0 0.0
      %344 = vmatpush1.msra.mxu0 %v314
      %345 = vmatprep.subr.mxu0 0.0
      %346 = vmatpush1.msra.mxu0 %v315
      %347 = vmatprep.subr.mxu0 0.0
      %348 = vmatpush1.msra.mxu0 %v316
      %349 = vmatprep.subr.mxu0 0.0
      %350 = vmatpush1.msra.mxu0 %v317
      %351 = vmatprep.subr.mxu0 0.0
      %352 = vmatpush1.msra.mxu0 %v318
      %353 = vmatprep.subr.mxu0 0.0
      %354 = vmatpush1.msra.mxu0 %v319
      %355 = vmatprep.subr.mxu0 0.0
      %356 = vmatpush1.msra.mxu0 %v320
      %357 = vmatprep.subr.mxu0 0.0
      %358 = vmatpush1.msra.mxu0 %v321
      %359 = vmatprep.subr.mxu0 0.0
      %360 = vmatpush1.msra.mxu0 %v322
      %361 = vmatprep.subr.mxu0 0.0
      %362 = vmatpush1.msra.mxu0 %v323
      %363 = vmatprep.subr.mxu0 0.0
      %364 = vmatpush1.msra.mxu0 0.0
      %365 = vmatprep.subr.mxu0 0.0
      %366 = vmatpush1.msra.mxu0 0.0
      %367 = vmatprep.subr.mxu0 0.0
      %368 = vmatpush1.msra.mxu0 0.0
      %369 = vmatprep.subr.mxu0 0.0
      %370 = vmatpush1.msra.mxu0 0.0
      %371 = vmatprep.subr.mxu0 0.0
      %372 = vmatpush1.msra.mxu0 0.0
      %373 = vmatprep.subr.mxu0 0.0
      %374 = vmatpush1.msra.mxu0 0.0
      %375 = vmatprep.subr.mxu0 0.0
      %376 = vmatpush1.msra.mxu0 0.0
      %377 = vmatprep.subr.mxu0 0.0
      %378 = vmatpush1.msra.mxu0 0.0
      %379 = vmatprep.subr.mxu0 0.0
      %380 = vmatpush1.msra.mxu0 0.0
      %381 = vmatprep.subr.mxu0 0.0
      %382 = vmatpush1.msra.mxu0 0.0
      %383 = vmatprep.subr.mxu0 0.0
      %384 = vmatpush1.msra.mxu0 0.0
      %385 = vmatprep.subr.mxu0 0.0
      %386 = vmatpush1.msra.mxu0 0.0
      %387 = vmatprep.subr.mxu0 0.0
      %388 = vmatpush1.msra.mxu0 0.0
      %389 = vmatprep.subr.mxu0 0.0
      %390 = vmatpush1.msra.mxu0 0.0
      %391 = vmatprep.subr.mxu0 0.0
      %392 = vmatpush1.msra.mxu0 0.0
      %393 = vmatprep.subr.mxu0 0.0
      %394 = vmatpush1.msra.mxu0 0.0
      %395 = vmatprep.mubr.f32.mxu0 0.0
      %396 = vmatmul.mubr.f32.gmra.mrb[0].mxu0 %v304
      %v397 = vpop.f32.mrb[0].mxu0
      %v398 = vadd.f32 %v329, %v397
      %v399 = vpop.f32.mrb[0].mxu0
      %400 = vmatprep.mubr.f32.mxu0 0.0
      %401 = vmatmul.mubr.f32.gmra.mrb[0].mxu0 %v305
      %v402 = vpop.f32.mrb[0].mxu0
      %v403 = vadd.f32 %v329, %v402
      %v404 = vpop.f32.mrb[0].mxu0
      %405 = vmatprep.mubr.f32.mxu0 0.0
      %406 = vmatmul.mubr.f32.gmra.mrb[0].mxu0 %v306
      %v407 = vpop.f32.mrb[0].mxu0
      %v408 = vadd.f32 %v329, %v407
      %v409 = vpop.f32.mrb[0].mxu0
      %410 = vmatprep.mubr.f32.mxu0 0.0
      %411 = vmatmul.mubr.f32.gmra.mrb[0].mxu0 %v307
      %v412 = vpop.f32.mrb[0].mxu0
      %v413 = vadd.f32 %v329, %v412
      %v414 = vpop.f32.mrb[0].mxu0
      %415 = vdwg.mxu0
      %v416 = vmax.f32 %v398, 0.0
      %v417 = vmax.f32 %v403, 0.0
      %v418 = vmax.f32 %v408, 0.0
      %v419 = vmax.f32 %v413, 0.0
      %v420 = vlaneseq
      %v421 = vshrl.u32 %v420, 7
      %v422 = vadd.s32 %v421, 8
      %v423 = vadd.s32 %v421, 16
      %v424 = vadd.s32 %v421, 24
      %v425 = vstv %s302
      %v426 = vadd.s32 %v425, %v421
      %v427 = vadd.s32 %v425, %v422
      %v428 = vadd.s32 %v425, %v423
      %v429 = vadd.s32 %v425, %v424
      %vm430 = vcmp.ge.s32.totalorder %v426, 8
      %vm431 = vcmp.ge.s32.totalorder %v427, 8
      %vm432 = vcmp.ge.s32.totalorder %v428, 8
      %vm433 = vcmp.ge.s32.totalorder %v429, 8
      %vm434 = vcmp.lt.s32.totalorder %v426, 24
      %vm435 = vcmp.lt.s32.totalorder %v427, 24
      %vm436 = vcmp.lt.s32.totalorder %v428, 24
      %vm437 = vcmp.lt.s32.totalorder %v429, 24
      %vm438 = vmand %vm430, %vm434
      %vm439 = vmand %vm431, %vm435
      %vm440 = vmand %vm432, %vm436
      %vm441 = vmand %vm433, %vm437
      %v442 = vsel %vm438, 1, 0
      %v443 = vsel %vm439, 1, 0
      %v444 = vsel %vm440, 1, 0
      %v445 = vsel %vm441, 1, 0
      %vm446 = vcmp.eq.s32.totalorder %v442, 1
      %vm447 = vcmp.eq.s32.totalorder %v443, 1
      %vm448 = vcmp.eq.s32.totalorder %v444, 1
      %vm449 = vcmp.eq.s32.totalorder %v445, 1
      %v450 = vsel %vm446, %v416, 0.0
      %v451 = vsel %vm447, %v417, 0.0
      %v452 = vsel %vm448, %v418, 0.0
      %v453 = vsel %vm449, %v419, 0.0
      %vm456 = vcmask 1046528
      %v457 = vrot.slane %v451, 1
      %v458 = vrot.slane %v452, 1
      %v459 = vsel %vm456, %v457, %v458
      %vm461 = vcmask 1045504
      %v462 = vrot.slane %v451, 2
      %v463 = vrot.slane %v452, 2
      %v464 = vsel %vm461, %v462, %v463
      %v465 = vrot.slane %v453, 2
      %v466 = vsel %vm461, %v463, %v465
      %v467 = vld [vmem:[%s2] sm:$0xff]
      %v468 = vld [vmem:[%s2 + $0x8] sm:$0xff]
      %v469 = vld [vmem:[%s2 + $0x10] sm:$0xff]
      %v470 = vld [vmem:[%s2 + $0x18] sm:$0xff]
      %v471 = vld [vmem:[%s2 + $0x20] sm:$0xff]
      %v472 = vld [vmem:[%s2 + $0x28] sm:$0xff]
      %v473 = vld [vmem:[%s2 + $0x30] sm:$0xff]
      %v474 = vld [vmem:[%s2 + $0x38] sm:$0xff]
      %v475 = vld [vmem:[%s2 + $0x40] sm:$0xff]
      %v476 = vld [vmem:[%s2 + $0x48] sm:$0xff]
      %v477 = vld [vmem:[%s2 + $0x50] sm:$0xff]
      %v478 = vld [vmem:[%s2 + $0x58] sm:$0xff]
      %v479 = vld [vmem:[%s2 + $0x60] sm:$0xff]
      %v480 = vld [vmem:[%s2 + $0x68] sm:$0xff]
      %v481 = vld [vmem:[%s2 + $0x70] sm:$0xff]
      %v482 = vld [vmem:[%s2 + $0x78] sm:$0xff]
      %v483 = vld [vmem:[%s2 + $0x80] sm:$0xff]
      %v484 = vld [vmem:[%s2 + $0x88] sm:$0xff]
      %v485 = vld [vmem:[%s2 + $0x90] sm:$0xff]
      %v486 = vld [vmem:[%s2 + $0x98] sm:$0xff]
      %v487 = vld [vmem:[%s2 + $0xa0] sm:$0xff]
      %v488 = vld [vmem:[%s2 + $0xa8] sm:$0xff]
      %v489 = vld [vmem:[%s2 + $0xb0] sm:$0xff]
      %v490 = vld [vmem:[%s2 + $0xb8] sm:$0xff]
      %v491 = vld [vmem:[%s2 + $0xc0] sm:$0xff]
      %v492 = vld [vmem:[%s2 + $0xc8] sm:$0xff]
      %v493 = vld [vmem:[%s2 + $0xd0] sm:$0xff]
      %v494 = vld [vmem:[%s2 + $0xd8] sm:$0xff]
      %v495 = vld [vmem:[%s2 + $0xe0] sm:$0xff]
      %v496 = vld [vmem:[%s2 + $0xe8] sm:$0xff]
      %v497 = vld [vmem:[%s2 + $0xf0] sm:$0xff]
      %v498 = vld [vmem:[%s2 + $0xf8] sm:$0xff]
      %v499 = vld [vmem:[%s2 + $0x100] sm:$0xff]
      %v500 = vld [vmem:[%s2 + $0x108] sm:$0xff]
      %v501 = vld [vmem:[%s2 + $0x110] sm:$0xff]
      %v502 = vld [vmem:[%s2 + $0x118] sm:$0xff]
      %v503 = vld [vmem:[%s2 + $0x120] sm:$0xff]
      %v504 = vld [vmem:[%s2 + $0x128] sm:$0xff]
      %v505 = vld [vmem:[%s2 + $0x130] sm:$0xff]
      %v506 = vld [vmem:[%s2 + $0x138] sm:$0xff]
      %v507 = vld [vmem:[%s2 + $0x140] sm:$0xff]
      %v508 = vld [vmem:[%s2 + $0x148] sm:$0xff]
      %v509 = vld [vmem:[%s2 + $0x150] sm:$0xff]
      %v510 = vld [vmem:[%s2 + $0x158] sm:$0xff]
      %v511 = vld [vmem:[%s2 + $0x160] sm:$0xff]
      %v512 = vld [vmem:[%s2 + $0x168] sm:$0xff]
      %v513 = vld [vmem:[%s2 + $0x170] sm:$0xff]
      %v514 = vld [vmem:[%s2 + $0x178] sm:$0xff]
      %v515 = vld [vmem:[%s5] sm:$0x1]
      %v517 = vlaneseq
      %v518 = vshrl.u32 %v517, 7
      %v519 = vsub.s32 0, %v518
      %v520 = vrot.slane %v515, %v519
      %vm523 = vcmask 1040384
      %v524 = vrot.slane %v450, 7
      %v525 = vrot.slane %v451, 7
      %v526 = vsel %vm523, %v524, %v525
      %v527 = vrot.slane %v457, 7
      %v528 = vrot.slane %v459, 7
      %v529 = vsel %vm523, %v527, %v528
      %v530 = vrot.slane %v462, 7
      %v531 = vrot.slane %v464, 7
      %v532 = vsel %vm523, %v530, %v531
      %v533 = vrot.slane %v452, 7
      %v534 = vsel %vm523, %v525, %v533
      %v535 = vrot.slane %v458, 7
      %v536 = vsel %vm523, %v528, %v535
      %v537 = vrot.slane %v466, 7
      %v538 = vsel %vm523, %v531, %v537
      %545 = vmatprep.subr.mxu0 0.0
      %546 = vmatpush1.msra.mxu0 %v467
      %547 = vmatprep.subr.mxu0 0.0
      %548 = vmatpush1.msra.mxu0 %v468
      %549 = vmatprep.subr.mxu0 0.0
      %550 = vmatpush1.msra.mxu0 %v469
      %551 = vmatprep.subr.mxu0 0.0
      %552 = vmatpush1.msra.mxu0 %v470
      %553 = vmatprep.subr.mxu0 0.0
      %554 = vmatpush1.msra.mxu0 %v471
      %555 = vmatprep.subr.mxu0 0.0
      %556 = vmatpush1.msra.mxu0 %v472
      %557 = vmatprep.subr.mxu0 0.0
      %558 = vmatpush1.msra.mxu0 %v473
      %559 = vmatprep.subr.mxu0 0.0
      %560 = vmatpush1.msra.mxu0 %v474
      %561 = vmatprep.subr.mxu0 0.0
      %562 = vmatpush1.msra.mxu0 %v475
      %563 = vmatprep.subr.mxu0 0.0
      %564 = vmatpush1.msra.mxu0 %v476
      %565 = vmatprep.subr.mxu0 0.0
      %566 = vmatpush1.msra.mxu0 %v477
      %567 = vmatprep.subr.mxu0 0.0
      %568 = vmatpush1.msra.mxu0 %v478
      %569 = vmatprep.subr.mxu0 0.0
      %570 = vmatpush1.msra.mxu0 %v479
      %571 = vmatprep.subr.mxu0 0.0
      %572 = vmatpush1.msra.mxu0 %v480
      %573 = vmatprep.subr.mxu0 0.0
      %574 = vmatpush1.msra.mxu0 %v481
      %575 = vmatprep.subr.mxu0 0.0
      %576 = vmatpush1.msra.mxu0 %v482
      %577 = vmatprep.subr.mxu0 0.0
      %578 = vmatpush1.msra.mxu0 %v483
      %579 = vmatprep.subr.mxu0 0.0
      %580 = vmatpush1.msra.mxu0 %v484
      %581 = vmatprep.subr.mxu0 0.0
      %582 = vmatpush1.msra.mxu0 %v485
      %583 = vmatprep.subr.mxu0 0.0
      %584 = vmatpush1.msra.mxu0 %v486
      %585 = vmatprep.subr.mxu0 0.0
      %586 = vmatpush1.msra.mxu0 %v487
      %587 = vmatprep.subr.mxu0 0.0
      %588 = vmatpush1.msra.mxu0 %v488
      %589 = vmatprep.subr.mxu0 0.0
      %590 = vmatpush1.msra.mxu0 %v489
      %591 = vmatprep.subr.mxu0 0.0
      %592 = vmatpush1.msra.mxu0 %v490
      %593 = vmatprep.subr.mxu0 0.0
      %594 = vmatpush1.msra.mxu0 %v491
      %595 = vmatprep.subr.mxu0 0.0
      %596 = vmatpush1.msra.mxu0 %v492
      %597 = vmatprep.subr.mxu0 0.0
      %598 = vmatpush1.msra.mxu0 %v493
      %599 = vmatprep.subr.mxu0 0.0
      %600 = vmatpush1.msra.mxu0 %v494
      %601 = vmatprep.subr.mxu0 0.0
      %602 = vmatpush1.msra.mxu0 %v495
      %603 = vmatprep.subr.mxu0 0.0
      %604 = vmatpush1.msra.mxu0 %v496
      %605 = vmatprep.subr.mxu0 0.0
      %606 = vmatpush1.msra.mxu0 %v497
      %607 = vmatprep.subr.mxu0 0.0
      %608 = vmatpush1.msra.mxu0 %v498
      %609 = vmatprep.mubr.f32.mxu0 %v529
      %610 = vmatmul.mubr.f32.gmra.mrb[0].mxu0 %v526
      %v611 = vpop.f32.mrb[0].mxu0
      %v612 = vadd.f32 %v520, %v611
      %v613 = vpop.f32.mrb[0].mxu0
      %614 = vmatprep.mubr.f32.mxu0 %v536
      %615 = vmatmul.mubr.f32.gmra.mrb[0].mxu0 %v534
      %v616 = vpop.f32.mrb[0].mxu0
      %v617 = vadd.f32 %v520, %v616
      %v618 = vpop.f32.mrb[0].mxu0
      %619 = vdwg.mxu0
      %620 = vmatprep.subr.mxu0 0.0
      %621 = vmatpush1.msra.mxu0 %v499
      %622 = vmatprep.subr.mxu0 0.0
      %623 = vmatpush1.msra.mxu0 %v500
      %624 = vmatprep.subr.mxu0 0.0
      %625 = vmatpush1.msra.mxu0 %v501
      %626 = vmatprep.subr.mxu0 0.0
      %627 = vmatpush1.msra.mxu0 %v502
      %628 = vmatprep.subr.mxu0 0.0
      %629 = vmatpush1.msra.mxu0 %v503
      %630 = vmatprep.subr.mxu0 0.0
      %631 = vmatpush1.msra.mxu0 %v504
      %632 = vmatprep.subr.mxu0 0.0
      %633 = vmatpush1.msra.mxu0 %v505
      %634 = vmatprep.subr.mxu0 0.0
      %635 = vmatpush1.msra.mxu0 %v506
      %636 = vmatprep.subr.mxu0 0.0
      %637 = vmatpush1.msra.mxu0 %v507
      %638 = vmatprep.subr.mxu0 0.0
      %639 = vmatpush1.msra.mxu0 %v508
      %640 = vmatprep.subr.mxu0 0.0
      %641 = vmatpush1.msra.mxu0 %v509
      %642 = vmatprep.subr.mxu0 0.0
      %643 = vmatpush1.msra.mxu0 %v510
      %644 = vmatprep.subr.mxu0 0.0
      %645 = vmatpush1.msra.mxu0 %v511
      %646 = vmatprep.subr.mxu0 0.0
      %647 = vmatpush1.msra.mxu0 %v512
      %648 = vmatprep.subr.mxu0 0.0
      %649 = vmatpush1.msra.mxu0 %v513
      %650 = vmatprep.subr.mxu0 0.0
      %651 = vmatpush1.msra.mxu0 %v514
      %652 = vmatprep.subr.mxu0 0.0
      %653 = vmatpush1.msra.mxu0 0.0
      %654 = vmatprep.subr.mxu0 0.0
      %655 = vmatpush1.msra.mxu0 0.0
      %656 = vmatprep.subr.mxu0 0.0
      %657 = vmatpush1.msra.mxu0 0.0
      %658 = vmatprep.subr.mxu0 0.0
      %659 = vmatpush1.msra.mxu0 0.0
      %660 = vmatprep.subr.mxu0 0.0
      %661 = vmatpush1.msra.mxu0 0.0
      %662 = vmatprep.subr.mxu0 0.0
      %663 = vmatpush1.msra.mxu0 0.0
      %664 = vmatprep.subr.mxu0 0.0
      %665 = vmatpush1.msra.mxu0 0.0
      %666 = vmatprep.subr.mxu0 0.0
      %667 = vmatpush1.msra.mxu0 0.0
      %668 = vmatprep.subr.mxu0 0.0
      %669 = vmatpush1.msra.mxu0 0.0
      %670 = vmatprep.subr.mxu0 0.0
      %671 = vmatpush1.msra.mxu0 0.0
      %672 = vmatprep.subr.mxu0 0.0
      %673 = vmatpush1.msra.mxu0 0.0
      %674 = vmatprep.subr.mxu0 0.0
      %675 = vmatpush1.msra.mxu0 0.0
      %676 = vmatprep.subr.mxu0 0.0
      %677 = vmatpush1.msra.mxu0 0.0
      %678 = vmatprep.subr.mxu0 0.0
      %679 = vmatpush1.msra.mxu0 0.0
      %680 = vmatprep.subr.mxu0 0.0
      %681 = vmatpush1.msra.mxu0 0.0
      %682 = vmatprep.subr.mxu0 0.0
      %683 = vmatpush1.msra.mxu0 0.0
      %684 = vmatprep.mubr.f32.mxu0 0.0
      %685 = vmatmul.mubr.f32.gmra.mrb[0].mxu0 %v532
      %v686 = vpop.f32.mrb[0].mxu0
      %v687 = vadd.f32 %v612, %v686
      %v688 = vpop.f32.mrb[0].mxu0
      %689 = vmatprep.mubr.f32.mxu0 0.0
      %690 = vmatmul.mubr.f32.gmra.mrb[0].mxu0 %v538
      %v691 = vpop.f32.mrb[0].mxu0
      %v692 = vadd.f32 %v617, %v691
      %v693 = vpop.f32.mrb[0].mxu0
      %694 = vdwg.mxu0
      %v695 = vmax.f32 %v687, 0.0
      %v696 = vmax.f32 %v692, 0.0
      %v697 = vld [vmem:[%s3] sm:$0xff]
      %v698 = vld [vmem:[%s3 + $0x8] sm:$0xff]
      %v699 = vld [vmem:[%s3 + $0x10] sm:$0xff]
      %v700 = vld [vmem:[%s3 + $0x18] sm:$0xff]
      %v701 = vld [vmem:[%s3 + $0x20] sm:$0xff]
      %v702 = vld [vmem:[%s3 + $0x28] sm:$0xff]
      %v703 = vld [vmem:[%s3 + $0x30] sm:$0xff]
      %v704 = vld [vmem:[%s3 + $0x38] sm:$0xff]
      %v705 = vld [vmem:[%s3 + $0x40] sm:$0xff]
      %v706 = vld [vmem:[%s3 + $0x48] sm:$0xff]
      %v707 = vld [vmem:[%s3 + $0x50] sm:$0xff]
      %v708 = vld [vmem:[%s3 + $0x58] sm:$0xff]
      %v709 = vld [vmem:[%s3 + $0x60] sm:$0xff]
      %v710 = vld [vmem:[%s3 + $0x68] sm:$0xff]
      %v711 = vld [vmem:[%s3 + $0x70] sm:$0xff]
      %v712 = vld [vmem:[%s3 + $0x78] sm:$0xff]
      %v713 = vld [vmem:[%s6] sm:$0x1]
      %v715 = vlaneseq
      %v716 = vshrl.u32 %v715, 7
      %v717 = vsub.s32 0, %v716
      %v718 = vrot.slane %v713, %v717
      %720 = vmatprep.subr.mxu0 0.0
      %721 = vmatpush1.msra.mxu0 %v697
      %722 = vmatprep.subr.mxu0 0.0
      %723 = vmatpush1.msra.mxu0 %v698
      %724 = vmatprep.subr.mxu0 0.0
      %725 = vmatpush1.msra.mxu0 %v699
      %726 = vmatprep.subr.mxu0 0.0
      %727 = vmatpush1.msra.mxu0 %v700
      %728 = vmatprep.subr.mxu0 0.0
      %729 = vmatpush1.msra.mxu0 %v701
      %730 = vmatprep.subr.mxu0 0.0
      %731 = vmatpush1.msra.mxu0 %v702
      %732 = vmatprep.subr.mxu0 0.0
      %733 = vmatpush1.msra.mxu0 %v703
      %734 = vmatprep.subr.mxu0 0.0
      %735 = vmatpush1.msra.mxu0 %v704
      %736 = vmatprep.subr.mxu0 0.0
      %737 = vmatpush1.msra.mxu0 %v705
      %738 = vmatprep.subr.mxu0 0.0
      %739 = vmatpush1.msra.mxu0 %v706
      %740 = vmatprep.subr.mxu0 0.0
      %741 = vmatpush1.msra.mxu0 %v707
      %742 = vmatprep.subr.mxu0 0.0
      %743 = vmatpush1.msra.mxu0 %v708
      %744 = vmatprep.subr.mxu0 0.0
      %745 = vmatpush1.msra.mxu0 %v709
      %746 = vmatprep.subr.mxu0 0.0
      %747 = vmatpush1.msra.mxu0 %v710
      %748 = vmatprep.subr.mxu0 0.0
      %749 = vmatpush1.msra.mxu0 %v711
      %750 = vmatprep.subr.mxu0 0.0
      %751 = vmatpush1.msra.mxu0 %v712
      %752 = vmatprep.subr.mxu0 0.0
      %753 = vmatpush1.msra.mxu0 0.0
      %754 = vmatprep.subr.mxu0 0.0
      %755 = vmatpush1.msra.mxu0 0.0
      %756 = vmatprep.subr.mxu0 0.0
      %757 = vmatpush1.msra.mxu0 0.0
      %758 = vmatprep.subr.mxu0 0.0
      %759 = vmatpush1.msra.mxu0 0.0
      %760 = vmatprep.subr.mxu0 0.0
      %761 = vmatpush1.msra.mxu0 0.0
      %762 = vmatprep.subr.mxu0 0.0
      %763 = vmatpush1.msra.mxu0 0.0
      %764 = vmatprep.subr.mxu0 0.0
      %765 = vmatpush1.msra.mxu0 0.0
      %766 = vmatprep.subr.mxu0 0.0
      %767 = vmatpush1.msra.mxu0 0.0
      %768 = vmatprep.subr.mxu0 0.0
      %769 = vmatpush1.msra.mxu0 0.0
      %770 = vmatprep.subr.mxu0 0.0
      %771 = vmatpush1.msra.mxu0 0.0
      %772 = vmatprep.subr.mxu0 0.0
      %773 = vmatpush1.msra.mxu0 0.0
      %774 = vmatprep.subr.mxu0 0.0
      %775 = vmatpush1.msra.mxu0 0.0
      %776 = vmatprep.subr.mxu0 0.0
      %777 = vmatpush1.msra.mxu0 0.0
      %778 = vmatprep.subr.mxu0 0.0
      %779 = vmatpush1.msra.mxu0 0.0
      %780 = vmatprep.subr.mxu0 0.0
      %781 = vmatpush1.msra.mxu0 0.0
      %782 = vmatprep.subr.mxu0 0.0
      %783 = vmatpush1.msra.mxu0 0.0
      %784 = vmatprep.mubr.f32.mxu0 0.0
      %785 = vmatmul.mubr.f32.gmra.mrb[0].mxu0 %v695
      %v786 = vpop.f32.mrb[0].mxu0
      %v787 = vadd.f32 %v718, %v786
      %v788 = vpop.f32.mrb[0].mxu0
      %789 = vmatprep.mubr.f32.mxu0 0.0
      %790 = vmatmul.mubr.f32.gmra.mrb[0].mxu0 %v696
      %v791 = vpop.f32.mrb[0].mxu0
      %v792 = vadd.f32 %v718, %v791
      %v793 = vpop.f32.mrb[0].mxu0
      %794 = vdwg.mxu0
      %s795 = sadd.s32 %s302, 8
      %s796 = scalar_lea.vmem %s291, %s795
      %v797 = vld [vmem:[%s796] sm:$0xff]
      %v798 = vld [vmem:[%s796 + $0x8] sm:$0xff]
      %v799 = vadd.f32 %v787, %v797
      %v800 = vadd.f32 %v792, %v798
      %v801 = vmax.f32 %v799, 0.0
      %v802 = vmax.f32 %v800, 0.0
      %803 = vst [vmem:[%s300] sm:$0xff] %v801
      %804 = vst [vmem:[%s300 + $0x8] sm:$0xff] %v802
      %s805 = smul.u32 2, %s23
      %p806 = scmp.lt.s32.totalorder %s22, 1
      %s807 = scalar_select %p806, %s22, 1
      %p808 = scmp.lt.s32.totalorder %s805, 1
      %s809 = scalar_select %p808, %s805, 1
      %s810 = smul.addr %s807, 2
      %s811 = sadd.s32 %s809, %s810
      %s812 = smul.addr %s811, 8
      %s813 = scalar_lea.vmem %s7, %s812
      // Predicated region
      $region49: #{_bottleneck_impl.1} parent=47 // pred_check
        %p814 = pneg %p202
      $region50: #{_bottleneck_impl.1} parent=47 // pred_check_branch
        %816 = sbr.rel (%p814) target = $region52
      $region51: #{_bottleneck_impl.1} parent=47 // pred_region
        %s817 = smul.u32 2, %s23
      $region52: #{_bottleneck_impl.1} parent=47 // pred_fallthru
        _
    $region48: #{_bottleneck_impl.1} parent=5 // pred_fallthru
      _
    %p818 = scmp.le.s32.totalorder 2, %s13
    // Predicated region
    $region53: #{_bottleneck_impl.1} parent=5 // pred_check
      %p819 = pneg %p818
    $region54: #{_bottleneck_impl.1} parent=5 // pred_check_branch
      %821 = sbr.rel (%p819) target = $region56
    $region55: #{_bottleneck_impl.1} parent=5 // pred_region
      %s822 = ssub.s32 %s13, 2
      // Predicated region
      $region57: #{_bottleneck_impl.1} parent=55 // pred_check
        %p823 = pneg %p208
      $region58: #{_bottleneck_impl.1} parent=55 // pred_check_branch
        %825 = sbr.rel (%p823) target = $region60
      $region59: #{_bottleneck_impl.1} parent=55 // pred_region
        %s826 = smul.u32 2, %s25
        %p827 = scmp.lt.s32.totalorder %s24, 1
        %s828 = scalar_select %p827, %s24, 1
        %p829 = scmp.lt.s32.totalorder %s826, 1
        %s830 = scalar_select %p829, %s826, 1
        %s831 = smul.addr %s828, 2
        %s832 = sadd.s32 %s830, %s831
        %s833 = smul.addr %s832, 8
        %s834 = scalar_lea.vmem %s7, %s833
      $region60: #{_bottleneck_impl.1} parent=55 // pred_fallthru
        _
    $region56: #{_bottleneck_impl.1} parent=5 // pred_fallthru
      _
  $region6: #{_bottleneck_impl.1} parent=0 // loop_footer
    %s17 = sadd.s32 1, %s13
  $region7: #{_bottleneck_impl.1} parent=0 // loop_footer_branch
    %12 = sbr.rel target = $region3
  $region8: #{_bottleneck_impl.1} parent=0 // loop_exit
    _

</llo_original>
